<compile_context>
chip_gen: v5e
topology: v5e:2x2
jax: 0.10.0
libtpu: 0.0.40
codegen_flags: <defaults>
</compile_context>

<pallas_src>
import functools
import math

import jax
import jax.numpy as jnp
from jax.experimental import pallas as pl
from jax.experimental.pallas import tpu as pltpu


LN_EPS = 1e-6  # ViT uses norm_layer = partial(nn.LayerNorm, eps=1e-6)


# --------------------------------------------------------------------------- #
# In-kernel helpers
# --------------------------------------------------------------------------- #

def _gelu(x):
    # TODO(synk): PyTorch nn.GELU default is the exact erf form; the tanh approximation is
    # used here (maps to EUP tanh), difference < 1e-3.
    c = math.sqrt(2.0 / math.pi)
    return 0.5 * x * (1.0 + jnp.tanh(c * (x + 0.044715 * x * x * x)))


def _layernorm(x, g, b, eps=LN_EPS):
    mu = jnp.mean(x, axis=-1, keepdims=True)
    xc = x - mu
    var = jnp.mean(xc * xc, axis=-1, keepdims=True)
    return xc * jax.lax.rsqrt(var + eps) * g + b


# --------------------------------------------------------------------------- #
# Kernel bodies
# --------------------------------------------------------------------------- #

def _embed_consis_kernel(x_ref, ew_ref, eb_ref, kw_ref, kb_ref, qw_ref, qb_ref,
                         pt_ref, cm_ref, *, scale, cd):
    """Per batch element: 1x1-conv embedding (as dense) + consistency Gram matrix."""
    xb = x_ref[0].astype(cd)                                                  # (N, C)
    pt = jnp.dot(xb, ew_ref[...], preferred_element_type=jnp.float32) + eb_ref[...]   # (N, D)
    pt_ref[0] = pt.astype(pt_ref.dtype)

    ptb = pt.astype(cd)
    kx = jnp.dot(ptb, kw_ref[...], preferred_element_type=jnp.float32) + kb_ref[...]  # (N, D)
    qx = jnp.dot(ptb, qw_ref[...], preferred_element_type=jnp.float32) + qb_ref[...]  # (N, D)
    gram = jax.lax.dot_general(kx.astype(cd), qx.astype(cd), (((1,), (1,)), ((), ())),
                               preferred_element_type=jnp.float32)            # kx @ qx^T
    cm_ref[0] = (gram * scale).astype(cm_ref.dtype)


def _attn_block_kernel(x_ref, g1_ref, b1_ref, qkvw_ref, qkvb_ref, pw_ref, pb_ref,
                       o_ref, *, num_heads, cd):
    """x + Attention(LN1(x)) for one batch element, fully fused."""
    x = x_ref[0]                                                              # (S, D) f32
    d = x.shape[-1]
    hd = d // num_heads
    scale = hd ** -0.5

    h = _layernorm(x, g1_ref[...], b1_ref[...]).astype(cd)
    qkv = jnp.dot(h, qkvw_ref[...], preferred_element_type=jnp.float32) + qkvb_ref[...]  # (S, 3D)

    # Per-head attention via static lane slices of the (S, 3D) qkv buffer; outputs are
    # lane-concatenated into the (S, D) slab so the proj GEMM runs at full depth and the
    # HBM store is lane-dense.  Only one (S, S) score tensor is live at a time.
    head_outs = []
    for hh in range(num_heads):
        q = qkv[:, hh * hd:(hh + 1) * hd].astype(cd)
        k = qkv[:, d + hh * hd:d + (hh + 1) * hd].astype(cd)
        v = qkv[:, 2 * d + hh * hd:2 * d + (hh + 1) * hd].astype(cd)
        s = jax.lax.dot_general(q, k, (((1,), (1,)), ((), ())),
                                preferred_element_type=jnp.float32) * scale   # (S, S) f32
        s = s - jnp.max(s, axis=-1, keepdims=True)
        p = jnp.exp(s)
        p = p * pl.reciprocal(jnp.sum(p, axis=-1, keepdims=True), approx=True)
        head_outs.append(jnp.dot(p.astype(cd), v, preferred_element_type=jnp.float32))
    o = jnp.concatenate(head_outs, axis=-1).astype(cd)                        # (S, D)

    y = jnp.dot(o, pw_ref[...], preferred_element_type=jnp.float32) + pb_ref[...] + x
    o_ref[0] = y.astype(o_ref.dtype)


def _mlp_block_kernel(x_ref, g_ref, bb_ref, w1_ref, bias1_ref, w2_ref, bias2_ref,
                      o_ref, *, cd):
    """x + MLP(LN2(x)) for one batch element, fully fused (fc1 activation stays in VMEM)."""
    x = x_ref[0]                                                              # (S, D) f32
    h = _layernorm(x, g_ref[...], bb_ref[...]).astype(cd)
    a = _gelu(jnp.dot(h, w1_ref[...], preferred_element_type=jnp.float32) + bias1_ref[...])
    y = jnp.dot(a.astype(cd), w2_ref[...], preferred_element_type=jnp.float32) \
        + bias2_ref[...] + x
    o_ref[0] = y.astype(o_ref.dtype)


def _head_kernel(x_ref, g_ref, b_ref, w_ref, bias_ref, o_ref, *, cd):
    """Final LayerNorm + classification head on the cls rows (tiny, single step)."""
    h = _layernorm(x_ref[...], g_ref[...], b_ref[...]).astype(cd)
    y = jnp.dot(h, w_ref[...], preferred_element_type=jnp.float32) + bias_ref[...]
    o_ref[...] = y.astype(o_ref.dtype)


# --------------------------------------------------------------------------- #
# pallas_call wrappers
# --------------------------------------------------------------------------- #

def _const(shape):
    return pl.BlockSpec(shape, lambda i: tuple(0 for _ in shape))


def embed_consis(x_pix, embed_w, embed_b, k_w, k_b, q_w, q_b, *, scale, compute_dtype):
    b, n, c = x_pix.shape
    d = embed_w.shape[1]
    return pl.pallas_call(
        functools.partial(_embed_consis_kernel, scale=scale, cd=compute_dtype),
        out_shape=(jax.ShapeDtypeStruct((b, n, d), jnp.float32),
                   jax.ShapeDtypeStruct((b, n, n), jnp.float32)),
        grid_spec=pltpu.PrefetchScalarGridSpec(
            num_scalar_prefetch=0,
            grid=(b,),
            in_specs=[
                pl.BlockSpec((1, n, c), lambda i: (i, 0, 0)),
                _const((c, d)), _const((1, d)),
                _const((d, d)), _const((1, d)),
                _const((d, d)), _const((1, d)),
            ],
            out_specs=[
                pl.BlockSpec((1, n, d), lambda i: (i, 0, 0)),
                pl.BlockSpec((1, n, n), lambda i: (i, 0, 0)),
            ],
        ),
        compiler_params=pltpu.CompilerParams(dimension_semantics=("parallel",)),
    )(x_pix, embed_w, embed_b, k_w, k_b, q_w, q_b)


def attn_block(x, g1, b1, qkv_w, qkv_b, proj_w, proj_b, *, num_heads, compute_dtype):
    bsz, s, d = x.shape
    return pl.pallas_call(
        functools.partial(_attn_block_kernel, num_heads=num_heads, cd=compute_dtype),
        out_shape=jax.ShapeDtypeStruct((bsz, s, d), jnp.float32),
        grid_spec=pltpu.PrefetchScalarGridSpec(
            num_scalar_prefetch=0,
            grid=(bsz,),
            in_specs=[
                pl.BlockSpec((1, s, d), lambda i: (i, 0, 0)),
                _const((1, d)), _const((1, d)),
                _const((d, 3 * d)), _const((1, 3 * d)),
                _const((d, d)), _const((1, d)),
            ],
            out_specs=pl.BlockSpec((1, s, d), lambda i: (i, 0, 0)),
        ),
        compiler_params=pltpu.CompilerParams(dimension_semantics=("parallel",)),
    )(x, g1, b1, qkv_w, qkv_b, proj_w, proj_b)


def mlp_block(x, g2, b2, fc1_w, fc1_b, fc2_w, fc2_b, *, compute_dtype):
    bsz, s, d = x.shape
    m = fc1_w.shape[1]
    return pl.pallas_call(
        functools.partial(_mlp_block_kernel, cd=compute_dtype),
        out_shape=jax.ShapeDtypeStruct((bsz, s, d), jnp.float32),
        grid_spec=pltpu.PrefetchScalarGridSpec(
            num_scalar_prefetch=0,
            grid=(bsz,),
            in_specs=[
                pl.BlockSpec((1, s, d), lambda i: (i, 0, 0)),
                _const((1, d)), _const((1, d)),
                _const((d, m)), _const((1, m)),
                _const((m, d)), _const((1, d)),
            ],
            out_specs=pl.BlockSpec((1, s, d), lambda i: (i, 0, 0)),
        ),
        compiler_params=pltpu.CompilerParams(dimension_semantics=("parallel",)),
    )(x, g2, b2, fc1_w, fc1_b, fc2_w, fc2_b)


def head(cls_rows, g, b, w, bias, *, compute_dtype):
    bsz, d = cls_rows.shape
    ncls = w.shape[1]
    return pl.pallas_call(
        functools.partial(_head_kernel, cd=compute_dtype),
        out_shape=jax.ShapeDtypeStruct((bsz, ncls), jnp.float32),
    )(cls_rows, g, b, w, bias)


# --------------------------------------------------------------------------- #
# Model forward (Pallas kernels + thin reshape glue)
# --------------------------------------------------------------------------- #

def xvit_forward(x_fea, params, *, num_heads, compute_dtype=jnp.bfloat16):
    """Forward of XVit_Net_RGB_consis_v2 from embed_conv onward.

    TODO(synk): the Xception backbone (TransferModel fea_part1/fea_part2) is external to this
    module spec and not implemented; `x_fea` is the feature map it would produce.
    Dropout / DropPath ratios are all 0.0 (eval mode) -> identity, so they are omitted.
    """
    b, c_in, hf, wf = x_fea.shape
    n = hf * wf
    d = params["embed_w"].shape[1]
    cd = compute_dtype

    def w_cast(w):          # weights go to HBM/VMEM as bf16 (halved DMA bytes, MXU-native)
        return w.astype(cd)

    # embed_conv 1x1 + flatten(2).permute(0,2,1): NCHW -> (B, N, C) pixel rows (single cheap
    # XLA transpose of the backbone output), per-pixel dense is done inside the kernel.
    x_pix = x_fea.transpose(0, 2, 3, 1).reshape(b, n, c_in)

    # Fused: patch embedding + consis_map = K(pt) @ Q(pt)^T * dim**-0.5 (pt stays in VMEM).
    pt3, consis = embed_consis(
        x_pix, w_cast(params["embed_w"]), params["embed_b"].reshape(1, d),
        w_cast(params["K_w"]), params["K_b"].reshape(1, d),
        w_cast(params["Q_w"]), params["Q_b"].reshape(1, d),
        scale=float(d) ** -0.5, compute_dtype=cd)

    # ViT (w/o patch embed): cls token + pos embed -> blocks -> final LN + head on cls token.
    cls = jnp.broadcast_to(params["cls_token"], (b, 1, d))
    x = jnp.concatenate([cls, pt3], axis=1) + params["pos_embed"]             # (B, S, D) f32

    for p in params["blocks"]:
        x = attn_block(x, p["ln1_g"].reshape(1, d), p["ln1_b"].reshape(1, d),
                       w_cast(p["qkv_w"]), p["qkv_b"].reshape(1, 3 * d),
                       w_cast(p["proj_w"]), p["proj_b"].reshape(1, d),
                       num_heads=num_heads, compute_dtype=cd)
        x = mlp_block(x, p["ln2_g"].reshape(1, d), p["ln2_b"].reshape(1, d),
                      w_cast(p["fc1_w"]), p["fc1_b"].reshape(1, -1),
                      w_cast(p["fc2_w"]), p["fc2_b"].reshape(1, d),
                      compute_dtype=cd)

    cls_rows = x[:, 0, :]                                                     # (B, D)
    logits = head(cls_rows, params["norm_g"].reshape(1, d), params["norm_b"].reshape(1, d),
                  w_cast(params["head_w"]), params["head_b"].reshape(1, -1),
                  compute_dtype=cd)
    return logits, consis


# --------------------------------------------------------------------------- #
# Pure-JAX reference (same math & same bf16-operand / f32-accumulate discipline)
# --------------------------------------------------------------------------- #

def reference_forward(x_fea, params, *, num_heads, compute_dtype=jnp.bfloat16):
    cd = compute_dtype

    def mm(a, w):
        return jnp.dot(a.astype(cd), w.astype(cd), preferred_element_type=jnp.float32)

    b, c_in, hf, wf = x_fea.shape
    n = hf * wf
    d = params["embed_w"].shape[1]
    hd = d // num_heads

    x_pix = x_fea.transpose(0, 2, 3, 1).reshape(b, n, c_in)
    pt = mm(x_pix, params["embed_w"]) + params["embed_b"]

    kx = mm(pt, params["K_w"]) + params["K_b"]
    qx = mm(pt, params["Q_w"]) + params["Q_b"]
    consis = jnp.einsum("bnd,bmd->bnm", kx.astype(cd), qx.astype(cd),
                        preferred_element_type=jnp.float32) * (float(d) ** -0.5)

    cls = jnp.broadcast_to(params["cls_token"], (b, 1, d))
    x = jnp.concatenate([cls, pt], axis=1) + params["pos_embed"]
    s = n + 1
    for p in params["blocks"]:
        h = _layernorm(x, p["ln1_g"], p["ln1_b"])
        qkv = (mm(h, p["qkv_w"]) + p["qkv_b"]).reshape(b, s, 3, num_heads, hd)
        qkv = qkv.transpose(2, 0, 3, 1, 4)
        q, k, v = qkv[0], qkv[1], qkv[2]
        attn = jnp.einsum("bhqd,bhkd->bhqk", q.astype(cd), k.astype(cd),
                          preferred_element_type=jnp.float32) * (hd ** -0.5)
        attn = jax.nn.softmax(attn, axis=-1)
        o = jnp.einsum("bhqk,bhkd->bhqd", attn.astype(cd), v.astype(cd),
                       preferred_element_type=jnp.float32)
        o = o.transpose(0, 2, 1, 3).reshape(b, s, d)
        x = x + mm(o, p["proj_w"]) + p["proj_b"]
        h = _layernorm(x, p["ln2_g"], p["ln2_b"])
        a = _gelu(mm(h, p["fc1_w"]) + p["fc1_b"])
        x = x + mm(a, p["fc2_w"]) + p["fc2_b"]
    xn = _layernorm(x, params["norm_g"], params["norm_b"])
    logits = mm(xn[:, 0], params["head_w"]) + params["head_b"]
    return logits, consis


# --------------------------------------------------------------------------- #
# Demo / self-test
# --------------------------------------------------------------------------- #

if __name__ == "__main__":
    # Small stand-ins for the real model (728-ch Xception features, embed_dim=768, depth=12).
    B, C_IN, HF, WF = 2, 16, 8, 8
    D, DEPTH, NUM_HEADS, NUM_CLASSES = 128, 2, 4, 2     # D multiple of 128 -> lane-dense GEMMs
    MLP_HIDDEN = 4 * D
    N = HF * WF
    S = N + 1
    assert D % NUM_HEADS == 0

    key = jax.random.PRNGKey(0)
    keys = iter(jax.random.split(key, 64))

    def rnd(shape, scale):
        return scale * jax.random.normal(next(keys), shape, dtype=jnp.float32)

    params = {
        "embed_w": rnd((C_IN, D), 0.1), "embed_b": rnd((D,), 0.02),
        "cls_token": rnd((1, 1, D), 0.02), "pos_embed": rnd((1, S, D), 0.02),
        "K_w": rnd((D, D), 0.1), "K_b": rnd((D,), 0.02),
        "Q_w": rnd((D, D), 0.1), "Q_b": rnd((D,), 0.02),
        "norm_g": 1.0 + rnd((D,), 0.1), "norm_b": rnd((D,), 0.02),
        "head_w": rnd((D, NUM_CLASSES), 0.1), "head_b": rnd((NUM_CLASSES,), 0.02),
        "blocks": [
            {
                "ln1_g": 1.0 + rnd((D,), 0.1), "ln1_b": rnd((D,), 0.02),
                "qkv_w": rnd((D, 3 * D), 0.05), "qkv_b": rnd((3 * D,), 0.02),
                "proj_w": rnd((D, D), 0.05), "proj_b": rnd((D,), 0.02),
                "ln2_g": 1.0 + rnd((D,), 0.1), "ln2_b": rnd((D,), 0.02),
                "fc1_w": rnd((D, MLP_HIDDEN), 0.05), "fc1_b": rnd((MLP_HIDDEN,), 0.02),
                "fc2_w": rnd((MLP_HIDDEN, D), 0.05), "fc2_b": rnd((D,), 0.02),
            }
            for _ in range(DEPTH)
        ],
    }
    x_fea = jax.random.normal(next(keys), (B, C_IN, HF, WF), dtype=jnp.float32)

    fwd = jax.jit(functools.partial(xvit_forward, num_heads=NUM_HEADS))
    cls_logits, consis = fwd(x_fea, params)
    cls_logits, consis = jax.block_until_ready((cls_logits, consis))

    ref_logits, ref_consis = reference_forward(x_fea, params, num_heads=NUM_HEADS)
    assert cls_logits.shape == (B, NUM_CLASSES)
    assert consis.shape == (B, N, N)
    err_l = float(jnp.max(jnp.abs(cls_logits - ref_logits)))
    err_c = float(jnp.max(jnp.abs(consis - ref_consis)))
    assert jnp.allclose(cls_logits, ref_logits, atol=3e-2, rtol=3e-2), err_l
    assert jnp.allclose(consis, ref_consis, atol=3e-2, rtol=3e-2), err_c
    print("KERNEL_OK")
</pallas_src>

<mosaic_0001>
module attributes {stable_mosaic.version = 11 : i64} {
  func.func @_embed_consis_kernel(%arg0: i32, %arg1: memref<1x64x16xf32, #tpu.memory_space<vmem>>, %arg2: memref<16x128xbf16, #tpu.memory_space<vmem>>, %arg3: memref<1x128xf32, #tpu.memory_space<vmem>>, %arg4: memref<128x128xbf16, #tpu.memory_space<vmem>>, %arg5: memref<1x128xf32, #tpu.memory_space<vmem>>, %arg6: memref<128x128xbf16, #tpu.memory_space<vmem>>, %arg7: memref<1x128xf32, #tpu.memory_space<vmem>>, %arg8: memref<1x64x128xf32, #tpu.memory_space<vmem>>, %arg9: memref<1x64x64xf32, #tpu.memory_space<vmem>>) attributes {dimension_semantics = [#tpu.dimension_semantics<parallel>], iteration_bounds = array<i64: 2>, scalar_prefetch = 0 : i64, scratch_operands = 0 : i64, tpu.core_type = #tpu.core_type<tc>, window_params = [{transform_indices = @transform_0, window_bounds = array<i64: 1, 64, 16>}, {pipeline_mode = #tpu.pipeline_mode<synchronous>, transform_indices = @transform_1, window_bounds = array<i64: 16, 128>}, {pipeline_mode = #tpu.pipeline_mode<synchronous>, transform_indices = @transform_2, window_bounds = array<i64: 1, 128>}, {pipeline_mode = #tpu.pipeline_mode<synchronous>, transform_indices = @transform_3, window_bounds = array<i64: 128, 128>}, {pipeline_mode = #tpu.pipeline_mode<synchronous>, transform_indices = @transform_4, window_bounds = array<i64: 1, 128>}, {pipeline_mode = #tpu.pipeline_mode<synchronous>, transform_indices = @transform_5, window_bounds = array<i64: 128, 128>}, {pipeline_mode = #tpu.pipeline_mode<synchronous>, transform_indices = @transform_6, window_bounds = array<i64: 1, 128>}, {transform_indices = @transform_7, window_bounds = array<i64: 1, 64, 128>}, {transform_indices = @transform_8, window_bounds = array<i64: 1, 64, 64>}]} {
    %c0 = arith.constant 0 : index
    %c0_0 = arith.constant 0 : index
    %c0_1 = arith.constant 0 : index
    %0 = vector.load %arg1[%c0, %c0_0, %c0_1] : memref<1x64x16xf32, #tpu.memory_space<vmem>>, vector<1x64x16xf32>
    %1 = vector.shape_cast %0 : vector<1x64x16xf32> to vector<64x16xf32>
    %2 = arith.truncf %1 : vector<64x16xf32> to vector<64x16xbf16>
    %c0_2 = arith.constant 0 : index
    %c0_3 = arith.constant 0 : index
    %3 = vector.load %arg2[%c0_2, %c0_3] : memref<16x128xbf16, #tpu.memory_space<vmem>>, vector<16x128xbf16>
    %cst = arith.constant dense<0.000000e+00> : vector<64x128xf32>
    %4 = tpu.matmul %2, %3, %cst {dimension_numbers = #tpu.dot_dimension_numbers<[1], [0], [0], [1], [0, 0, 1, 1], [], []>} : vector<64x16xbf16>, vector<16x128xbf16>, vector<64x128xf32> -> vector<64x128xf32>
    %c0_4 = arith.constant 0 : index
    %c0_5 = arith.constant 0 : index
    %5 = vector.load %arg3[%c0_4, %c0_5] : memref<1x128xf32, #tpu.memory_space<vmem>>, vector<1x128xf32>
    %6 = vector.broadcast %5 : vector<1x128xf32> to vector<64x128xf32>
    %7 = arith.addf %4, %6 : vector<64x128xf32>
    %c0_6 = arith.constant 0 : index
    %c0_7 = arith.constant 0 : index
    %c0_8 = arith.constant 0 : index
    %8 = vector.load %arg8[%c0_6, %c0_7, %c0_8] : memref<1x64x128xf32, #tpu.memory_space<vmem>>, vector<1x64x128xf32>
    %9 = vector.shape_cast %8 : vector<1x64x128xf32> to vector<64x128xf32>
    %10 = vector.shape_cast %7 : vector<64x128xf32> to vector<1x64x128xf32>
    tpu.vector_store %arg8[%c0_6, %c0_7, %c0_8], %10 {strides = array<i32>} : memref<1x64x128xf32, #tpu.memory_space<vmem>>, vector<1x64x128xf32>,
    %11 = arith.truncf %7 : vector<64x128xf32> to vector<64x128xbf16>
    %c0_9 = arith.constant 0 : index
    %c0_10 = arith.constant 0 : index
    %12 = vector.load %arg4[%c0_9, %c0_10] : memref<128x128xbf16, #tpu.memory_space<vmem>>, vector<128x128xbf16>
    %cst_11 = arith.constant dense<0.000000e+00> : vector<64x128xf32>
    %13 = tpu.matmul %11, %12, %cst_11 {dimension_numbers = #tpu.dot_dimension_numbers<[1], [0], [0], [1], [0, 0, 1, 1], [], []>} : vector<64x128xbf16>, vector<128x128xbf16>, vector<64x128xf32> -> vector<64x128xf32>
    %c0_12 = arith.constant 0 : index
    %c0_13 = arith.constant 0 : index
    %14 = vector.load %arg5[%c0_12, %c0_13] : memref<1x128xf32, #tpu.memory_space<vmem>>, vector<1x128xf32>
    %15 = vector.broadcast %14 : vector<1x128xf32> to vector<64x128xf32>
    %16 = arith.addf %13, %15 : vector<64x128xf32>
    %c0_14 = arith.constant 0 : index
    %c0_15 = arith.constant 0 : index
    %17 = vector.load %arg6[%c0_14, %c0_15] : memref<128x128xbf16, #tpu.memory_space<vmem>>, vector<128x128xbf16>
    %cst_16 = arith.constant dense<0.000000e+00> : vector<64x128xf32>
    %18 = tpu.matmul %11, %17, %cst_16 {dimension_numbers = #tpu.dot_dimension_numbers<[1], [0], [0], [1], [0, 0, 1, 1], [], []>} : vector<64x128xbf16>, vector<128x128xbf16>, vector<64x128xf32> -> vector<64x128xf32>
    %c0_17 = arith.constant 0 : index
    %c0_18 = arith.constant 0 : index
    %19 = vector.load %arg7[%c0_17, %c0_18] : memref<1x128xf32, #tpu.memory_space<vmem>>, vector<1x128xf32>
    %20 = vector.broadcast %19 : vector<1x128xf32> to vector<64x128xf32>
    %21 = arith.addf %18, %20 : vector<64x128xf32>
    %22 = arith.truncf %16 : vector<64x128xf32> to vector<64x128xbf16>
    %23 = arith.truncf %21 : vector<64x128xf32> to vector<64x128xbf16>
    %cst_19 = arith.constant dense<0.000000e+00> : vector<64x64xf32>
    %24 = tpu.matmul %22, %23, %cst_19 {dimension_numbers = #tpu.dot_dimension_numbers<[1], [1], [0], [0], [0, 0, 1, 0], [], []>} : vector<64x128xbf16>, vector<64x128xbf16>, vector<64x64xf32> -> vector<64x64xf32>
    %cst_20 = arith.constant 0.0883883461 : f32
    %25 = vector.broadcast %cst_20 : f32 to vector<64x64xf32>
    %26 = arith.mulf %24, %25 : vector<64x64xf32>
    %c0_21 = arith.constant 0 : index
    %c0_22 = arith.constant 0 : index
    %c0_23 = arith.constant 0 : index
    %27 = vector.load %arg9[%c0_21, %c0_22, %c0_23] : memref<1x64x64xf32, #tpu.memory_space<vmem>>, vector<1x64x64xf32>
    %28 = vector.shape_cast %27 : vector<1x64x64xf32> to vector<64x64xf32>
    %29 = vector.shape_cast %26 : vector<64x64xf32> to vector<1x64x64xf32>
    tpu.vector_store %arg9[%c0_21, %c0_22, %c0_23], %29 {strides = array<i32>} : memref<1x64x64xf32, #tpu.memory_space<vmem>>, vector<1x64x64xf32>,
    return
  }
  func.func @transform_0(%arg0: i32) -> (i32, i32, i32) {
    %c0_i32 = arith.constant 0 : i32
    %c0_i32_0 = arith.constant 0 : i32
    %c0_i32_1 = arith.constant 0 : i32
    return %arg0, %c0_i32, %c0_i32_0 : i32, i32, i32
  }
  func.func @transform_1(%arg0: i32) -> (i32, i32) {
    %c0_i32 = arith.constant 0 : i32
    %c0_i32_0 = arith.constant 0 : i32
    %c0_i32_1 = arith.constant 0 : i32
    return %c0_i32, %c0_i32_0 : i32, i32
  }
  func.func @transform_2(%arg0: i32) -> (i32, i32) {
    %c0_i32 = arith.constant 0 : i32
    %c0_i32_0 = arith.constant 0 : i32
    %c0_i32_1 = arith.constant 0 : i32
    return %c0_i32, %c0_i32_0 : i32, i32
  }
  func.func @transform_3(%arg0: i32) -> (i32, i32) {
    %c0_i32 = arith.constant 0 : i32
    %c0_i32_0 = arith.constant 0 : i32
    %c0_i32_1 = arith.constant 0 : i32
    return %c0_i32, %c0_i32_0 : i32, i32
  }
  func.func @transform_4(%arg0: i32) -> (i32, i32) {
    %c0_i32 = arith.constant 0 : i32
    %c0_i32_0 = arith.constant 0 : i32
    %c0_i32_1 = arith.constant 0 : i32
    return %c0_i32, %c0_i32_0 : i32, i32
  }
  func.func @transform_5(%arg0: i32) -> (i32, i32) {
    %c0_i32 = arith.constant 0 : i32
    %c0_i32_0 = arith.constant 0 : i32
    %c0_i32_1 = arith.constant 0 : i32
    return %c0_i32, %c0_i32_0 : i32, i32
  }
  func.func @transform_6(%arg0: i32) -> (i32, i32) {
    %c0_i32 = arith.constant 0 : i32
    %c0_i32_0 = arith.constant 0 : i32
    %c0_i32_1 = arith.constant 0 : i32
    return %c0_i32, %c0_i32_0 : i32, i32
  }
  func.func @transform_7(%arg0: i32) -> (i32, i32, i32) {
    %c0_i32 = arith.constant 0 : i32
    %c0_i32_0 = arith.constant 0 : i32
    %c0_i32_1 = arith.constant 0 : i32
    return %arg0, %c0_i32, %c0_i32_0 : i32, i32, i32
  }
  func.func @transform_8(%arg0: i32) -> (i32, i32, i32) {
    %c0_i32 = arith.constant 0 : i32
    %c0_i32_0 = arith.constant 0 : i32
    %c0_i32_1 = arith.constant 0 : i32
    return %arg0, %c0_i32, %c0_i32_0 : i32, i32, i32
  }
}

module attributes {stable_mosaic.version = 11 : i64} {
  func.func @_attn_block_kernel(%arg0: i32, %arg1: memref<1x65x128xf32, #tpu.memory_space<vmem>>, %arg2: memref<1x128xf32, #tpu.memory_space<vmem>>, %arg3: memref<1x128xf32, #tpu.memory_space<vmem>>, %arg4: memref<128x384xbf16, #tpu.memory_space<vmem>>, %arg5: memref<1x384xf32, #tpu.memory_space<vmem>>, %arg6: memref<128x128xbf16, #tpu.memory_space<vmem>>, %arg7: memref<1x128xf32, #tpu.memory_space<vmem>>, %arg8: memref<1x65x128xf32, #tpu.memory_space<vmem>>) attributes {dimension_semantics = [#tpu.dimension_semantics<parallel>], iteration_bounds = array<i64: 2>, scalar_prefetch = 0 : i64, scratch_operands = 0 : i64, tpu.core_type = #tpu.core_type<tc>, window_params = [{transform_indices = @transform_0, window_bounds = array<i64: 1, 65, 128>}, {pipeline_mode = #tpu.pipeline_mode<synchronous>, transform_indices = @transform_1, window_bounds = array<i64: 1, 128>}, {pipeline_mode = #tpu.pipeline_mode<synchronous>, transform_indices = @transform_2, window_bounds = array<i64: 1, 128>}, {pipeline_mode = #tpu.pipeline_mode<synchronous>, transform_indices = @transform_3, window_bounds = array<i64: 128, 384>}, {pipeline_mode = #tpu.pipeline_mode<synchronous>, transform_indices = @transform_4, window_bounds = array<i64: 1, 384>}, {pipeline_mode = #tpu.pipeline_mode<synchronous>, transform_indices = @transform_5, window_bounds = array<i64: 128, 128>}, {pipeline_mode = #tpu.pipeline_mode<synchronous>, transform_indices = @transform_6, window_bounds = array<i64: 1, 128>}, {transform_indices = @transform_7, window_bounds = array<i64: 1, 65, 128>}]} {
    %c0 = arith.constant 0 : index
    %c0_0 = arith.constant 0 : index
    %c0_1 = arith.constant 0 : index
    %0 = vector.load %arg1[%c0, %c0_0, %c0_1] : memref<1x65x128xf32, #tpu.memory_space<vmem>>, vector<1x65x128xf32>
    %1 = vector.shape_cast %0 : vector<1x65x128xf32> to vector<65x128xf32>
    %c0_2 = arith.constant 0 : index
    %c0_3 = arith.constant 0 : index
    %2 = vector.load %arg2[%c0_2, %c0_3] : memref<1x128xf32, #tpu.memory_space<vmem>>, vector<1x128xf32>
    %c0_4 = arith.constant 0 : index
    %c0_5 = arith.constant 0 : index
    %3 = vector.load %arg3[%c0_4, %c0_5] : memref<1x128xf32, #tpu.memory_space<vmem>>, vector<1x128xf32>
    %cst = arith.constant dense<0.000000e+00> : vector<65xf32>
    %4 = vector.multi_reduction <add>, %1, %cst [1] : vector<65x128xf32> to vector<65xf32>
    %5 = vector.shape_cast %4 : vector<65xf32> to vector<65x1xf32>
    %cst_6 = arith.constant 1.280000e+02 : f32
    %6 = vector.broadcast %cst_6 : f32 to vector<65x1xf32>
    %7 = arith.divf %5, %6 : vector<65x1xf32>
    %8 = vector.broadcast %7 : vector<65x1xf32> to vector<65x128xf32>
    %9 = arith.subf %1, %8 : vector<65x128xf32>
    %10 = arith.mulf %9, %9 : vector<65x128xf32>
    %cst_7 = arith.constant dense<0.000000e+00> : vector<65xf32>
    %11 = vector.multi_reduction <add>, %10, %cst_7 [1] : vector<65x128xf32> to vector<65xf32>
    %12 = vector.shape_cast %11 : vector<65xf32> to vector<65x1xf32>
    %cst_8 = arith.constant 1.280000e+02 : f32
    %13 = vector.broadcast %cst_8 : f32 to vector<65x1xf32>
    %14 = arith.divf %12, %13 : vector<65x1xf32>
    %cst_9 = arith.constant 9.99999997E-7 : f32
    %15 = vector.broadcast %cst_9 : f32 to vector<65x1xf32>
    %16 = arith.addf %14, %15 : vector<65x1xf32>
    %17 = math.rsqrt %16 : vector<65x1xf32>
    %18 = vector.broadcast %17 : vector<65x1xf32> to vector<65x128xf32>
    %19 = arith.mulf %9, %18 : vector<65x128xf32>
    %20 = vector.broadcast %2 : vector<1x128xf32> to vector<65x128xf32>
    %21 = arith.mulf %19, %20 : vector<65x128xf32>
    %22 = vector.broadcast %3 : vector<1x128xf32> to vector<65x128xf32>
    %23 = arith.addf %21, %22 : vector<65x128xf32>
    %24 = arith.truncf %23 : vector<65x128xf32> to vector<65x128xbf16>
    %c0_10 = arith.constant 0 : index
    %c0_11 = arith.constant 0 : index
    %25 = vector.load %arg4[%c0_10, %c0_11] : memref<128x384xbf16, #tpu.memory_space<vmem>>, vector<128x384xbf16>
    %cst_12 = arith.constant dense<0.000000e+00> : vector<65x384xf32>
    %26 = tpu.matmul %24, %25, %cst_12 {dimension_numbers = #tpu.dot_dimension_numbers<[1], [0], [0], [1], [0, 0, 1, 1], [], []>} : vector<65x128xbf16>, vector<128x384xbf16>, vector<65x384xf32> -> vector<65x384xf32>
    %c0_13 = arith.constant 0 : index
    %c0_14 = arith.constant 0 : index
    %27 = vector.load %arg5[%c0_13, %c0_14] : memref<1x384xf32, #tpu.memory_space<vmem>>, vector<1x384xf32>
    %28 = vector.broadcast %27 : vector<1x384xf32> to vector<65x384xf32>
    %29 = arith.addf %26, %28 : vector<65x384xf32>
    %30 = vector.extract_strided_slice %29 {offsets = [0, 0], sizes = [65, 32], strides = [1, 1]} : vector<65x384xf32> to vector<65x32xf32>
    %31 = arith.truncf %30 : vector<65x32xf32> to vector<65x32xbf16>
    %32 = vector.extract_strided_slice %29 {offsets = [0, 128], sizes = [65, 32], strides = [1, 1]} : vector<65x384xf32> to vector<65x32xf32>
    %33 = arith.truncf %32 : vector<65x32xf32> to vector<65x32xbf16>
    %34 = vector.extract_strided_slice %29 {offsets = [0, 256], sizes = [65, 32], strides = [1, 1]} : vector<65x384xf32> to vector<65x32xf32>
    %35 = arith.truncf %34 : vector<65x32xf32> to vector<65x32xbf16>
    %cst_15 = arith.constant dense<0.000000e+00> : vector<65x65xf32>
    %36 = tpu.matmul %31, %33, %cst_15 {dimension_numbers = #tpu.dot_dimension_numbers<[1], [1], [0], [0], [0, 0, 1, 0], [], []>} : vector<65x32xbf16>, vector<65x32xbf16>, vector<65x65xf32> -> vector<65x65xf32>
    %cst_16 = arith.constant 0.176776692 : f32
    %37 = vector.broadcast %cst_16 : f32 to vector<65x65xf32>
    %38 = arith.mulf %36, %37 : vector<65x65xf32>
    %cst_17 = arith.constant dense<0xFF800000> : vector<65xf32>
    %39 = vector.multi_reduction <maximumf>, %38, %cst_17 [1] : vector<65x65xf32> to vector<65xf32>
    %40 = vector.shape_cast %39 : vector<65xf32> to vector<65x1xf32>
    %41 = vector.broadcast %40 : vector<65x1xf32> to vector<65x65xf32>
    %42 = arith.subf %38, %41 : vector<65x65xf32>
    %43 = math.exp %42 : vector<65x65xf32>
    %cst_18 = arith.constant dense<0.000000e+00> : vector<65xf32>
    %44 = vector.multi_reduction <add>, %43, %cst_18 [1] : vector<65x65xf32> to vector<65xf32>
    %45 = vector.shape_cast %44 : vector<65xf32> to vector<65x1xf32>
    %46 = tpu.reciprocal %45 {approx = true} : vector<65x1xf32> -> vector<65x1xf32>
    %47 = vector.broadcast %46 : vector<65x1xf32> to vector<65x65xf32>
    %48 = arith.mulf %43, %47 : vector<65x65xf32>
    %49 = arith.truncf %48 : vector<65x65xf32> to vector<65x65xbf16>
    %cst_19 = arith.constant dense<0.000000e+00> : vector<65x32xf32>
    %50 = tpu.matmul %49, %35, %cst_19 {dimension_numbers = #tpu.dot_dimension_numbers<[1], [0], [0], [1], [0, 0, 1, 1], [], []>} : vector<65x65xbf16>, vector<65x32xbf16>, vector<65x32xf32> -> vector<65x32xf32>
    %51 = vector.extract_strided_slice %29 {offsets = [0, 32], sizes = [65, 32], strides = [1, 1]} : vector<65x384xf32> to vector<65x32xf32>
    %52 = arith.truncf %51 : vector<65x32xf32> to vector<65x32xbf16>
    %53 = vector.extract_strided_slice %29 {offsets = [0, 160], sizes = [65, 32], strides = [1, 1]} : vector<65x384xf32> to vector<65x32xf32>
    %54 = arith.truncf %53 : vector<65x32xf32> to vector<65x32xbf16>
    %55 = vector.extract_strided_slice %29 {offsets = [0, 288], sizes = [65, 32], strides = [1, 1]} : vector<65x384xf32> to vector<65x32xf32>
    %56 = arith.truncf %55 : vector<65x32xf32> to vector<65x32xbf16>
    %cst_20 = arith.constant dense<0.000000e+00> : vector<65x65xf32>
    %57 = tpu.matmul %52, %54, %cst_20 {dimension_numbers = #tpu.dot_dimension_numbers<[1], [1], [0], [0], [0, 0, 1, 0], [], []>} : vector<65x32xbf16>, vector<65x32xbf16>, vector<65x65xf32> -> vector<65x65xf32>
    %cst_21 = arith.constant 0.176776692 : f32
    %58 = vector.broadcast %cst_21 : f32 to vector<65x65xf32>
    %59 = arith.mulf %57, %58 : vector<65x65xf32>
    %cst_22 = arith.constant dense<0xFF800000> : vector<65xf32>
    %60 = vector.multi_reduction <maximumf>, %59, %cst_22 [1] : vector<65x65xf32> to vector<65xf32>
    %61 = vector.shape_cast %60 : vector<65xf32> to vector<65x1xf32>
    %62 = vector.broadcast %61 : vector<65x1xf32> to vector<65x65xf32>
    %63 = arith.subf %59, %62 : vector<65x65xf32>
    %64 = math.exp %63 : vector<65x65xf32>
    %cst_23 = arith.constant dense<0.000000e+00> : vector<65xf32>
    %65 = vector.multi_reduction <add>, %64, %cst_23 [1] : vector<65x65xf32> to vector<65xf32>
    %66 = vector.shape_cast %65 : vector<65xf32> to vector<65x1xf32>
    %67 = tpu.reciprocal %66 {approx = true} : vector<65x1xf32> -> vector<65x1xf32>
    %68 = vector.broadcast %67 : vector<65x1xf32> to vector<65x65xf32>
    %69 = arith.mulf %64, %68 : vector<65x65xf32>
    %70 = arith.truncf %69 : vector<65x65xf32> to vector<65x65xbf16>
    %cst_24 = arith.constant dense<0.000000e+00> : vector<65x32xf32>
    %71 = tpu.matmul %70, %56, %cst_24 {dimension_numbers = #tpu.dot_dimension_numbers<[1], [0], [0], [1], [0, 0, 1, 1], [], []>} : vector<65x65xbf16>, vector<65x32xbf16>, vector<65x32xf32> -> vector<65x32xf32>
    %72 = vector.extract_strided_slice %29 {offsets = [0, 64], sizes = [65, 32], strides = [1, 1]} : vector<65x384xf32> to vector<65x32xf32>
    %73 = arith.truncf %72 : vector<65x32xf32> to vector<65x32xbf16>
    %74 = vector.extract_strided_slice %29 {offsets = [0, 192], sizes = [65, 32], strides = [1, 1]} : vector<65x384xf32> to vector<65x32xf32>
    %75 = arith.truncf %74 : vector<65x32xf32> to vector<65x32xbf16>
    %76 = vector.extract_strided_slice %29 {offsets = [0, 320], sizes = [65, 32], strides = [1, 1]} : vector<65x384xf32> to vector<65x32xf32>
    %77 = arith.truncf %76 : vector<65x32xf32> to vector<65x32xbf16>
    %cst_25 = arith.constant dense<0.000000e+00> : vector<65x65xf32>
    %78 = tpu.matmul %73, %75, %cst_25 {dimension_numbers = #tpu.dot_dimension_numbers<[1], [1], [0], [0], [0, 0, 1, 0], [], []>} : vector<65x32xbf16>, vector<65x32xbf16>, vector<65x65xf32> -> vector<65x65xf32>
    %cst_26 = arith.constant 0.176776692 : f32
    %79 = vector.broadcast %cst_26 : f32 to vector<65x65xf32>
    %80 = arith.mulf %78, %79 : vector<65x65xf32>
    %cst_27 = arith.constant dense<0xFF800000> : vector<65xf32>
    %81 = vector.multi_reduction <maximumf>, %80, %cst_27 [1] : vector<65x65xf32> to vector<65xf32>
    %82 = vector.shape_cast %81 : vector<65xf32> to vector<65x1xf32>
    %83 = vector.broadcast %82 : vector<65x1xf32> to vector<65x65xf32>
    %84 = arith.subf %80, %83 : vector<65x65xf32>
    %85 = math.exp %84 : vector<65x65xf32>
    %cst_28 = arith.constant dense<0.000000e+00> : vector<65xf32>
    %86 = vector.multi_reduction <add>, %85, %cst_28 [1] : vector<65x65xf32> to vector<65xf32>
    %87 = vector.shape_cast %86 : vector<65xf32> to vector<65x1xf32>
    %88 = tpu.reciprocal %87 {approx = true} : vector<65x1xf32> -> vector<65x1xf32>
    %89 = vector.broadcast %88 : vector<65x1xf32> to vector<65x65xf32>
    %90 = arith.mulf %85, %89 : vector<65x65xf32>
    %91 = arith.truncf %90 : vector<65x65xf32> to vector<65x65xbf16>
    %cst_29 = arith.constant dense<0.000000e+00> : vector<65x32xf32>
    %92 = tpu.matmul %91, %77, %cst_29 {dimension_numbers = #tpu.dot_dimension_numbers<[1], [0], [0], [1], [0, 0, 1, 1], [], []>} : vector<65x65xbf16>, vector<65x32xbf16>, vector<65x32xf32> -> vector<65x32xf32>
    %93 = vector.extract_strided_slice %29 {offsets = [0, 96], sizes = [65, 32], strides = [1, 1]} : vector<65x384xf32> to vector<65x32xf32>
    %94 = arith.truncf %93 : vector<65x32xf32> to vector<65x32xbf16>
    %95 = vector.extract_strided_slice %29 {offsets = [0, 224], sizes = [65, 32], strides = [1, 1]} : vector<65x384xf32> to vector<65x32xf32>
    %96 = arith.truncf %95 : vector<65x32xf32> to vector<65x32xbf16>
    %97 = vector.extract_strided_slice %29 {offsets = [0, 352], sizes = [65, 32], strides = [1, 1]} : vector<65x384xf32> to vector<65x32xf32>
    %98 = arith.truncf %97 : vector<65x32xf32> to vector<65x32xbf16>
    %cst_30 = arith.constant dense<0.000000e+00> : vector<65x65xf32>
    %99 = tpu.matmul %94, %96, %cst_30 {dimension_numbers = #tpu.dot_dimension_numbers<[1], [1], [0], [0], [0, 0, 1, 0], [], []>} : vector<65x32xbf16>, vector<65x32xbf16>, vector<65x65xf32> -> vector<65x65xf32>
    %cst_31 = arith.constant 0.176776692 : f32
    %100 = vector.broadcast %cst_31 : f32 to vector<65x65xf32>
    %101 = arith.mulf %99, %100 : vector<65x65xf32>
    %cst_32 = arith.constant dense<0xFF800000> : vector<65xf32>
    %102 = vector.multi_reduction <maximumf>, %101, %cst_32 [1] : vector<65x65xf32> to vector<65xf32>
    %103 = vector.shape_cast %102 : vector<65xf32> to vector<65x1xf32>
    %104 = vector.broadcast %103 : vector<65x1xf32> to vector<65x65xf32>
    %105 = arith.subf %101, %104 : vector<65x65xf32>
    %106 = math.exp %105 : vector<65x65xf32>
    %cst_33 = arith.constant dense<0.000000e+00> : vector<65xf32>
    %107 = vector.multi_reduction <add>, %106, %cst_33 [1] : vector<65x65xf32> to vector<65xf32>
    %108 = vector.shape_cast %107 : vector<65xf32> to vector<65x1xf32>
    %109 = tpu.reciprocal %108 {approx = true} : vector<65x1xf32> -> vector<65x1xf32>
    %110 = vector.broadcast %109 : vector<65x1xf32> to vector<65x65xf32>
    %111 = arith.mulf %106, %110 : vector<65x65xf32>
    %112 = arith.truncf %111 : vector<65x65xf32> to vector<65x65xbf16>
    %cst_34 = arith.constant dense<0.000000e+00> : vector<65x32xf32>
    %113 = tpu.matmul %112, %98, %cst_34 {dimension_numbers = #tpu.dot_dimension_numbers<[1], [0], [0], [1], [0, 0, 1, 1], [], []>} : vector<65x65xbf16>, vector<65x32xbf16>, vector<65x32xf32> -> vector<65x32xf32>
    %114 = tpu.concatenate %50, %71, %92, %113 in 1 : vector<65x32xf32>, vector<65x32xf32>, vector<65x32xf32>, vector<65x32xf32> -> vector<65x128xf32>
    %115 = arith.truncf %114 : vector<65x128xf32> to vector<65x128xbf16>
    %c0_35 = arith.constant 0 : index
    %c0_36 = arith.constant 0 : index
    %116 = vector.load %arg6[%c0_35, %c0_36] : memref<128x128xbf16, #tpu.memory_space<vmem>>, vector<128x128xbf16>
    %cst_37 = arith.constant dense<0.000000e+00> : vector<65x128xf32>
    %117 = tpu.matmul %115, %116, %cst_37 {dimension_numbers = #tpu.dot_dimension_numbers<[1], [0], [0], [1], [0, 0, 1, 1], [], []>} : vector<65x128xbf16>, vector<128x128xbf16>, vector<65x128xf32> -> vector<65x128xf32>
    %c0_38 = arith.constant 0 : index
    %c0_39 = arith.constant 0 : index
    %118 = vector.load %arg7[%c0_38, %c0_39] : memref<1x128xf32, #tpu.memory_space<vmem>>, vector<1x128xf32>
    %119 = vector.broadcast %118 : vector<1x128xf32> to vector<65x128xf32>
    %120 = arith.addf %117, %119 : vector<65x128xf32>
    %121 = arith.addf %120, %1 : vector<65x128xf32>
    %c0_40 = arith.constant 0 : index
    %c0_41 = arith.constant 0 : index
    %c0_42 = arith.constant 0 : index
    %122 = vector.load %arg8[%c0_40, %c0_41, %c0_42] : memref<1x65x128xf32, #tpu.memory_space<vmem>>, vector<1x65x128xf32>
    %123 = vector.shape_cast %122 : vector<1x65x128xf32> to vector<65x128xf32>
    %124 = vector.shape_cast %121 : vector<65x128xf32> to vector<1x65x128xf32>
    tpu.vector_store %arg8[%c0_40, %c0_41, %c0_42], %124 {strides = array<i32>} : memref<1x65x128xf32, #tpu.memory_space<vmem>>, vector<1x65x128xf32>,
    return
  }
  func.func @transform_0(%arg0: i32) -> (i32, i32, i32) {
    %c0_i32 = arith.constant 0 : i32
    %c0_i32_0 = arith.constant 0 : i32
    %c0_i32_1 = arith.constant 0 : i32
    return %arg0, %c0_i32, %c0_i32_0 : i32, i32, i32
  }
  func.func @transform_1(%arg0: i32) -> (i32, i32) {
    %c0_i32 = arith.constant 0 : i32
    %c0_i32_0 = arith.constant 0 : i32
    %c0_i32_1 = arith.constant 0 : i32
    return %c0_i32, %c0_i32_0 : i32, i32
  }
  func.func @transform_2(%arg0: i32) -> (i32, i32) {
    %c0_i32 = arith.constant 0 : i32
    %c0_i32_0 = arith.constant 0 : i32
    %c0_i32_1 = arith.constant 0 : i32
    return %c0_i32, %c0_i32_0 : i32, i32
  }
  func.func @transform_3(%arg0: i32) -> (i32, i32) {
    %c0_i32 = arith.constant 0 : i32
    %c0_i32_0 = arith.constant 0 : i32
    %c0_i32_1 = arith.constant 0 : i32
    return %c0_i32, %c0_i32_0 : i32, i32
  }
  func.func @transform_4(%arg0: i32) -> (i32, i32) {
    %c0_i32 = arith.constant 0 : i32
    %c0_i32_0 = arith.constant 0 : i32
    %c0_i32_1 = arith.constant 0 : i32
    return %c0_i32, %c0_i32_0 : i32, i32
  }
  func.func @transform_5(%arg0: i32) -> (i32, i32) {
    %c0_i32 = arith.constant 0 : i32
    %c0_i32_0 = arith.constant 0 : i32
    %c0_i32_1 = arith.constant 0 : i32
    return %c0_i32, %c0_i32_0 : i32, i32
  }
  func.func @transform_6(%arg0: i32) -> (i32, i32) {
    %c0_i32 = arith.constant 0 : i32
    %c0_i32_0 = arith.constant 0 : i32
    %c0_i32_1 = arith.constant 0 : i32
    return %c0_i32, %c0_i32_0 : i32, i32
  }
  func.func @transform_7(%arg0: i32) -> (i32, i32, i32) {
    %c0_i32 = arith.constant 0 : i32
    %c0_i32_0 = arith.constant 0 : i32
    %c0_i32_1 = arith.constant 0 : i32
    return %arg0, %c0_i32, %c0_i32_0 : i32, i32, i32
  }
}

module attributes {stable_mosaic.version = 11 : i64} {
  func.func @_mlp_block_kernel(%arg0: i32, %arg1: memref<1x65x128xf32, #tpu.memory_space<vmem>>, %arg2: memref<1x128xf32, #tpu.memory_space<vmem>>, %arg3: memref<1x128xf32, #tpu.memory_space<vmem>>, %arg4: memref<128x512xbf16, #tpu.memory_space<vmem>>, %arg5: memref<1x512xf32, #tpu.memory_space<vmem>>, %arg6: memref<512x128xbf16, #tpu.memory_space<vmem>>, %arg7: memref<1x128xf32, #tpu.memory_space<vmem>>, %arg8: memref<1x65x128xf32, #tpu.memory_space<vmem>>) attributes {dimension_semantics = [#tpu.dimension_semantics<parallel>], iteration_bounds = array<i64: 2>, scalar_prefetch = 0 : i64, scratch_operands = 0 : i64, tpu.core_type = #tpu.core_type<tc>, window_params = [{transform_indices = @transform_0, window_bounds = array<i64: 1, 65, 128>}, {pipeline_mode = #tpu.pipeline_mode<synchronous>, transform_indices = @transform_1, window_bounds = array<i64: 1, 128>}, {pipeline_mode = #tpu.pipeline_mode<synchronous>, transform_indices = @transform_2, window_bounds = array<i64: 1, 128>}, {pipeline_mode = #tpu.pipeline_mode<synchronous>, transform_indices = @transform_3, window_bounds = array<i64: 128, 512>}, {pipeline_mode = #tpu.pipeline_mode<synchronous>, transform_indices = @transform_4, window_bounds = array<i64: 1, 512>}, {pipeline_mode = #tpu.pipeline_mode<synchronous>, transform_indices = @transform_5, window_bounds = array<i64: 512, 128>}, {pipeline_mode = #tpu.pipeline_mode<synchronous>, transform_indices = @transform_6, window_bounds = array<i64: 1, 128>}, {transform_indices = @transform_7, window_bounds = array<i64: 1, 65, 128>}]} {
    %c0 = arith.constant 0 : index
    %c0_0 = arith.constant 0 : index
    %c0_1 = arith.constant 0 : index
    %0 = vector.load %arg1[%c0, %c0_0, %c0_1] : memref<1x65x128xf32, #tpu.memory_space<vmem>>, vector<1x65x128xf32>
    %1 = vector.shape_cast %0 : vector<1x65x128xf32> to vector<65x128xf32>
    %c0_2 = arith.constant 0 : index
    %c0_3 = arith.constant 0 : index
    %2 = vector.load %arg2[%c0_2, %c0_3] : memref<1x128xf32, #tpu.memory_space<vmem>>, vector<1x128xf32>
    %c0_4 = arith.constant 0 : index
    %c0_5 = arith.constant 0 : index
    %3 = vector.load %arg3[%c0_4, %c0_5] : memref<1x128xf32, #tpu.memory_space<vmem>>, vector<1x128xf32>
    %cst = arith.constant dense<0.000000e+00> : vector<65xf32>
    %4 = vector.multi_reduction <add>, %1, %cst [1] : vector<65x128xf32> to vector<65xf32>
    %5 = vector.shape_cast %4 : vector<65xf32> to vector<65x1xf32>
    %cst_6 = arith.constant 1.280000e+02 : f32
    %6 = vector.broadcast %cst_6 : f32 to vector<65x1xf32>
    %7 = arith.divf %5, %6 : vector<65x1xf32>
    %8 = vector.broadcast %7 : vector<65x1xf32> to vector<65x128xf32>
    %9 = arith.subf %1, %8 : vector<65x128xf32>
    %10 = arith.mulf %9, %9 : vector<65x128xf32>
    %cst_7 = arith.constant dense<0.000000e+00> : vector<65xf32>
    %11 = vector.multi_reduction <add>, %10, %cst_7 [1] : vector<65x128xf32> to vector<65xf32>
    %12 = vector.shape_cast %11 : vector<65xf32> to vector<65x1xf32>
    %cst_8 = arith.constant 1.280000e+02 : f32
    %13 = vector.broadcast %cst_8 : f32 to vector<65x1xf32>
    %14 = arith.divf %12, %13 : vector<65x1xf32>
    %cst_9 = arith.constant 9.99999997E-7 : f32
    %15 = vector.broadcast %cst_9 : f32 to vector<65x1xf32>
    %16 = arith.addf %14, %15 : vector<65x1xf32>
    %17 = math.rsqrt %16 : vector<65x1xf32>
    %18 = vector.broadcast %17 : vector<65x1xf32> to vector<65x128xf32>
    %19 = arith.mulf %9, %18 : vector<65x128xf32>
    %20 = vector.broadcast %2 : vector<1x128xf32> to vector<65x128xf32>
    %21 = arith.mulf %19, %20 : vector<65x128xf32>
    %22 = vector.broadcast %3 : vector<1x128xf32> to vector<65x128xf32>
    %23 = arith.addf %21, %22 : vector<65x128xf32>
    %24 = arith.truncf %23 : vector<65x128xf32> to vector<65x128xbf16>
    %c0_10 = arith.constant 0 : index
    %c0_11 = arith.constant 0 : index
    %25 = vector.load %arg4[%c0_10, %c0_11] : memref<128x512xbf16, #tpu.memory_space<vmem>>, vector<128x512xbf16>
    %cst_12 = arith.constant dense<0.000000e+00> : vector<65x512xf32>
    %26 = tpu.matmul %24, %25, %cst_12 {dimension_numbers = #tpu.dot_dimension_numbers<[1], [0], [0], [1], [0, 0, 1, 1], [], []>} : vector<65x128xbf16>, vector<128x512xbf16>, vector<65x512xf32> -> vector<65x512xf32>
    %c0_13 = arith.constant 0 : index
    %c0_14 = arith.constant 0 : index
    %27 = vector.load %arg5[%c0_13, %c0_14] : memref<1x512xf32, #tpu.memory_space<vmem>>, vector<1x512xf32>
    %28 = vector.broadcast %27 : vector<1x512xf32> to vector<65x512xf32>
    %29 = arith.addf %26, %28 : vector<65x512xf32>
    %cst_15 = arith.constant 5.000000e-01 : f32
    %30 = vector.broadcast %cst_15 : f32 to vector<65x512xf32>
    %31 = arith.mulf %30, %29 : vector<65x512xf32>
    %cst_16 = arith.constant 4.471500e-02 : f32
    %32 = vector.broadcast %cst_16 : f32 to vector<65x512xf32>
    %33 = arith.mulf %32, %29 : vector<65x512xf32>
    %34 = arith.mulf %33, %29 : vector<65x512xf32>
    %35 = arith.mulf %34, %29 : vector<65x512xf32>
    %36 = arith.addf %29, %35 : vector<65x512xf32>
    %cst_17 = arith.constant 0.797884583 : f32
    %37 = vector.broadcast %cst_17 : f32 to vector<65x512xf32>
    %38 = arith.mulf %37, %36 : vector<65x512xf32>
    %39 = math.tanh %38 : vector<65x512xf32>
    %cst_18 = arith.constant 1.000000e+00 : f32
    %40 = vector.broadcast %cst_18 : f32 to vector<65x512xf32>
    %41 = arith.addf %40, %39 : vector<65x512xf32>
    %42 = arith.mulf %31, %41 : vector<65x512xf32>
    %43 = arith.truncf %42 : vector<65x512xf32> to vector<65x512xbf16>
    %c0_19 = arith.constant 0 : index
    %c0_20 = arith.constant 0 : index
    %44 = vector.load %arg6[%c0_19, %c0_20] : memref<512x128xbf16, #tpu.memory_space<vmem>>, vector<512x128xbf16>
    %cst_21 = arith.constant dense<0.000000e+00> : vector<65x128xf32>
    %45 = tpu.matmul %43, %44, %cst_21 {dimension_numbers = #tpu.dot_dimension_numbers<[1], [0], [0], [1], [0, 0, 1, 1], [], []>} : vector<65x512xbf16>, vector<512x128xbf16>, vector<65x128xf32> -> vector<65x128xf32>
    %c0_22 = arith.constant 0 : index
    %c0_23 = arith.constant 0 : index
    %46 = vector.load %arg7[%c0_22, %c0_23] : memref<1x128xf32, #tpu.memory_space<vmem>>, vector<1x128xf32>
    %47 = vector.broadcast %46 : vector<1x128xf32> to vector<65x128xf32>
    %48 = arith.addf %45, %47 : vector<65x128xf32>
    %49 = arith.addf %48, %1 : vector<65x128xf32>
    %c0_24 = arith.constant 0 : index
    %c0_25 = arith.constant 0 : index
    %c0_26 = arith.constant 0 : index
    %50 = vector.load %arg8[%c0_24, %c0_25, %c0_26] : memref<1x65x128xf32, #tpu.memory_space<vmem>>, vector<1x65x128xf32>
    %51 = vector.shape_cast %50 : vector<1x65x128xf32> to vector<65x128xf32>
    %52 = vector.shape_cast %49 : vector<65x128xf32> to vector<1x65x128xf32>
    tpu.vector_store %arg8[%c0_24, %c0_25, %c0_26], %52 {strides = array<i32>} : memref<1x65x128xf32, #tpu.memory_space<vmem>>, vector<1x65x128xf32>,
    return
  }
  func.func @transform_0(%arg0: i32) -> (i32, i32, i32) {
    %c0_i32 = arith.constant 0 : i32
    %c0_i32_0 = arith.constant 0 : i32
    %c0_i32_1 = arith.constant 0 : i32
    return %arg0, %c0_i32, %c0_i32_0 : i32, i32, i32
  }
  func.func @transform_1(%arg0: i32) -> (i32, i32) {
    %c0_i32 = arith.constant 0 : i32
    %c0_i32_0 = arith.constant 0 : i32
    %c0_i32_1 = arith.constant 0 : i32
    return %c0_i32, %c0_i32_0 : i32, i32
  }
  func.func @transform_2(%arg0: i32) -> (i32, i32) {
    %c0_i32 = arith.constant 0 : i32
    %c0_i32_0 = arith.constant 0 : i32
    %c0_i32_1 = arith.constant 0 : i32
    return %c0_i32, %c0_i32_0 : i32, i32
  }
  func.func @transform_3(%arg0: i32) -> (i32, i32) {
    %c0_i32 = arith.constant 0 : i32
    %c0_i32_0 = arith.constant 0 : i32
    %c0_i32_1 = arith.constant 0 : i32
    return %c0_i32, %c0_i32_0 : i32, i32
  }
  func.func @transform_4(%arg0: i32) -> (i32, i32) {
    %c0_i32 = arith.constant 0 : i32
    %c0_i32_0 = arith.constant 0 : i32
    %c0_i32_1 = arith.constant 0 : i32
    return %c0_i32, %c0_i32_0 : i32, i32
  }
  func.func @transform_5(%arg0: i32) -> (i32, i32) {
    %c0_i32 = arith.constant 0 : i32
    %c0_i32_0 = arith.constant 0 : i32
    %c0_i32_1 = arith.constant 0 : i32
    return %c0_i32, %c0_i32_0 : i32, i32
  }
  func.func @transform_6(%arg0: i32) -> (i32, i32) {
    %c0_i32 = arith.constant 0 : i32
    %c0_i32_0 = arith.constant 0 : i32
    %c0_i32_1 = arith.constant 0 : i32
    return %c0_i32, %c0_i32_0 : i32, i32
  }
  func.func @transform_7(%arg0: i32) -> (i32, i32, i32) {
    %c0_i32 = arith.constant 0 : i32
    %c0_i32_0 = arith.constant 0 : i32
    %c0_i32_1 = arith.constant 0 : i32
    return %arg0, %c0_i32, %c0_i32_0 : i32, i32, i32
  }
}

module attributes {stable_mosaic.version = 11 : i64} {
  func.func @_head_kernel(%arg0: memref<2x128xf32, #tpu.memory_space<vmem>>, %arg1: memref<1x128xf32, #tpu.memory_space<vmem>>, %arg2: memref<1x128xf32, #tpu.memory_space<vmem>>, %arg3: memref<128x2xbf16, #tpu.memory_space<vmem>>, %arg4: memref<1x2xf32, #tpu.memory_space<vmem>>, %arg5: memref<2x2xf32, #tpu.memory_space<vmem>>) attributes {dimension_semantics = [], scalar_prefetch = 0 : i64, scratch_operands = 0 : i64, tpu.core_type = #tpu.core_type<tc>} {
    %c0 = arith.constant 0 : index
    %c0_0 = arith.constant 0 : index
    %0 = vector.load %arg0[%c0, %c0_0] : memref<2x128xf32, #tpu.memory_space<vmem>>, vector<2x128xf32>
    %c0_1 = arith.constant 0 : index
    %c0_2 = arith.constant 0 : index
    %1 = vector.load %arg1[%c0_1, %c0_2] : memref<1x128xf32, #tpu.memory_space<vmem>>, vector<1x128xf32>
    %c0_3 = arith.constant 0 : index
    %c0_4 = arith.constant 0 : index
    %2 = vector.load %arg2[%c0_3, %c0_4] : memref<1x128xf32, #tpu.memory_space<vmem>>, vector<1x128xf32>
    %cst = arith.constant dense<0.000000e+00> : vector<2xf32>
    %3 = vector.multi_reduction <add>, %0, %cst [1] : vector<2x128xf32> to vector<2xf32>
    %4 = vector.shape_cast %3 : vector<2xf32> to vector<2x1xf32>
    %cst_5 = arith.constant 1.280000e+02 : f32
    %5 = vector.broadcast %cst_5 : f32 to vector<2x1xf32>
    %6 = arith.divf %4, %5 : vector<2x1xf32>
    %7 = vector.broadcast %6 : vector<2x1xf32> to vector<2x128xf32>
    %8 = arith.subf %0, %7 : vector<2x128xf32>
    %9 = arith.mulf %8, %8 : vector<2x128xf32>
    %cst_6 = arith.constant dense<0.000000e+00> : vector<2xf32>
    %10 = vector.multi_reduction <add>, %9, %cst_6 [1] : vector<2x128xf32> to vector<2xf32>
    %11 = vector.shape_cast %10 : vector<2xf32> to vector<2x1xf32>
    %cst_7 = arith.constant 1.280000e+02 : f32
    %12 = vector.broadcast %cst_7 : f32 to vector<2x1xf32>
    %13 = arith.divf %11, %12 : vector<2x1xf32>
    %cst_8 = arith.constant 9.99999997E-7 : f32
    %14 = vector.broadcast %cst_8 : f32 to vector<2x1xf32>
    %15 = arith.addf %13, %14 : vector<2x1xf32>
    %16 = math.rsqrt %15 : vector<2x1xf32>
    %17 = vector.broadcast %16 : vector<2x1xf32> to vector<2x128xf32>
    %18 = arith.mulf %8, %17 : vector<2x128xf32>
    %19 = vector.broadcast %1 : vector<1x128xf32> to vector<2x128xf32>
    %20 = arith.mulf %18, %19 : vector<2x128xf32>
    %21 = vector.broadcast %2 : vector<1x128xf32> to vector<2x128xf32>
    %22 = arith.addf %20, %21 : vector<2x128xf32>
    %23 = arith.truncf %22 : vector<2x128xf32> to vector<2x128xbf16>
    %c0_9 = arith.constant 0 : index
    %c0_10 = arith.constant 0 : index
    %24 = vector.load %arg3[%c0_9, %c0_10] : memref<128x2xbf16, #tpu.memory_space<vmem>>, vector<128x2xbf16>
    %cst_11 = arith.constant dense<0.000000e+00> : vector<2x2xf32>
    %25 = tpu.matmul %23, %24, %cst_11 {dimension_numbers = #tpu.dot_dimension_numbers<[1], [0], [0], [1], [0, 0, 1, 1], [], []>} : vector<2x128xbf16>, vector<128x2xbf16>, vector<2x2xf32> -> vector<2x2xf32>
    %c0_12 = arith.constant 0 : index
    %c0_13 = arith.constant 0 : index
    %26 = vector.load %arg4[%c0_12, %c0_13] : memref<1x2xf32, #tpu.memory_space<vmem>>, vector<1x2xf32>
    %27 = vector.broadcast %26 : vector<1x2xf32> to vector<2x2xf32>
    %28 = arith.addf %25, %27 : vector<2x2xf32>
    %c0_14 = arith.constant 0 : index
    %c0_15 = arith.constant 0 : index
    %29 = vector.load %arg5[%c0_14, %c0_15] : memref<2x2xf32, #tpu.memory_space<vmem>>, vector<2x2xf32>
    tpu.vector_store %arg5[%c0_14, %c0_15], %28 {strides = array<i32>} : memref<2x2xf32, #tpu.memory_space<vmem>>, vector<2x2xf32>,
    return
  }
}

</mosaic_0001>

<llo_original>
// kernel: xvit_forward.6
$region0: #{xvit_forward.6}
  #allocation0 [shape = 'u32[]', space=smem, size = 0x4, offset = 0x4, fixed_abs, tag = 'smem constant byte address 0x4 - core index']
  #allocation1 [shape = 'u32[72,128]{1,0:T(1,128)}', space=vmem, size = 0x9000, scoped, tag = 'internal scratch']
  %s0 = inlined_call_operand.vmem [shape: f32[2,64,16], index: 0, kind: input, shape index: {}]
  %s1 = inlined_call_operand.vmem [shape: bf16[16,128], index: 1, kind: input, shape index: {}]
  %s2 = inlined_call_operand.vmem [shape: f32[1,128], index: 2, kind: input, shape index: {}]
  %s3 = inlined_call_operand.vmem [shape: bf16[128,128], index: 3, kind: input, shape index: {}]
  %s4 = inlined_call_operand.vmem [shape: f32[1,128], index: 4, kind: input, shape index: {}]
  %s5 = inlined_call_operand.vmem [shape: bf16[128,128], index: 5, kind: input, shape index: {}]
  %s6 = inlined_call_operand.vmem [shape: f32[1,128], index: 6, kind: input, shape index: {}]
  %s7 = inlined_call_operand.vmem [shape: f32[2,64,128], index: 7, kind: output, shape index: {0}]
  %s8 = inlined_call_operand.hbm [shape: f32[2,64,64], index: 8, kind: output, shape index: {1}]
  %9 = xla_tuple %s7, %s8
  %s10 = sld [smem:[#allocation0]]
  $region69: #{xvit_forward.6} parent=0
    _
  %s12 = ssub.s32 1, %s10
  %s13 = scalar_select 0, %s12, %s10
  $region1: #{xvit_forward.6} parent=0
    #allocation2 [shape = 'u8[65536]{0}', space=vmem, size = 0x10000, scoped, tag = 'output window, operand 1']
    #allocation3 [shape = 's32[2]{0}', space=sflag, size = 0x8, scoped, tag = 'scoped memory for xvit_forward.6']
    %14 = vsyncpa [#allocation3], 0
    %s15 = scalar_lea.sflag [#allocation3], 1
    %16 = vsyncpa %s15, 0
    loop: start=0, step=1, limit=4
    $region2: #{xvit_forward.6} parent=1 // loop_pre_header
      _
    $region3: #{xvit_forward.6} parent=1 // loop_header
      %s18 = sphi 0, %s22
      %p19 = scmp.ge.s32.totalorder %s18, 4
      %s28 = sphi 0, %s30
      %s31 = sphi 0, %s28
      %s32 = sphi 0, %s31
      %s48 = sphi 0, %s32
      %s52 = sphi 0, %s52
      %s54 = sphi 0, %s52
      %s55 = sphi 0, %s54
      %s69 = sphi 0, %s55
      %s73 = sphi 0, %s73
      %s75 = sphi 0, %s73
      %s76 = sphi 0, %s75
      %s90 = sphi 0, %s76
      %s94 = sphi 0, %s94
      %s96 = sphi 0, %s94
      %s97 = sphi 0, %s96
      %s111 = sphi 0, %s97
      %s115 = sphi 0, %s115
      %s117 = sphi 0, %s115
      %s118 = sphi 0, %s117
      %s132 = sphi 0, %s118
      %s136 = sphi 0, %s136
      %s138 = sphi 0, %s136
      %s139 = sphi 0, %s138
      %s153 = sphi 0, %s139
      %s157 = sphi 0, %s157
      %s159 = sphi 0, %s157
      %s160 = sphi 0, %s159
      %s174 = sphi 0, %s160
      %s180 = sphi 0, %s182
      %s183 = sphi 0, %s180
      %s184 = sphi 0, %s183
      %s200 = sphi 0, %s184
      %s206 = sphi 0, %s208
      %s209 = sphi 0, %s206
      %s210 = sphi 0, %s209
      %s226 = sphi 0, %s210
    $region4: #{xvit_forward.6} parent=1 // loop_header_branch
      %21 = sbr.rel (%p19) target = $region8
    $region5: #{xvit_forward.6} parent=1 // loop_body
      %s23 = ssub.s32 %s18, 1
      %s24 = ssub.s32 %s18, 2
      %s25 = sadd.s32 %s18, 1
      %s26 = ssub.s32 %s18, %s25
      %p27 = scmp.eq.s32.totalorder %s26, 0
      %s29 = sadd.s32 %s28, 1
      %s30 = scalar_select %p27, %s28, %s29
      %p33 = pneg %p27
      %p34 = scmp.eq.s32.totalorder %s18, 1
      %p35 = por %p33, %p34
      %p36 = scmp.ne.s32.totalorder %s28, %s31
      %p37 = scmp.eq.s32.totalorder %s18, 0
      %p38 = por %p36, %p37
      %p39 = scmp.ne.s32.totalorder %s28, %s31
      %p40 = scmp.eq.s32.totalorder %s23, 1
      %p41 = por %p39, %p40
      %p42 = scmp.ne.s32.totalorder %s31, %s32
      %p43 = scmp.eq.s32.totalorder %s23, 0
      %p44 = por %p42, %p43
      %p45 = scmp.ne.s32.totalorder %s31, %s32
      %p46 = scmp.eq.s32.totalorder %s24, 1
      %p47 = por %p45, %p46
      %p49 = scmp.ne.s32.totalorder %s32, %s48
      %p50 = scmp.eq.s32.totalorder %s24, 0
      %p51 = por %p49, %p50
      %s53 = sadd.s32 %s52, 1
      %p56 = scmp.eq.s32.totalorder %s18, 1
      %p57 = scmp.ne.s32.totalorder %s52, %s54
      %p58 = scmp.eq.s32.totalorder %s18, 0
      %p59 = por %p57, %p58
      %p60 = scmp.ne.s32.totalorder %s52, %s54
      %p61 = scmp.eq.s32.totalorder %s23, 1
      %p62 = por %p60, %p61
      %p63 = scmp.ne.s32.totalorder %s54, %s55
      %p64 = scmp.eq.s32.totalorder %s23, 0
      %p65 = por %p63, %p64
      %p66 = scmp.ne.s32.totalorder %s54, %s55
      %p67 = scmp.eq.s32.totalorder %s24, 1
      %p68 = por %p66, %p67
      %p70 = scmp.ne.s32.totalorder %s55, %s69
      %p71 = scmp.eq.s32.totalorder %s24, 0
      %p72 = por %p70, %p71
      %s74 = sadd.s32 %s73, 1
      %p77 = scmp.eq.s32.totalorder %s18, 1
      %p78 = scmp.ne.s32.totalorder %s73, %s75
      %p79 = scmp.eq.s32.totalorder %s18, 0
      %p80 = por %p78, %p79
      %p81 = scmp.ne.s32.totalorder %s73, %s75
      %p82 = scmp.eq.s32.totalorder %s23, 1
      %p83 = por %p81, %p82
      %p84 = scmp.ne.s32.totalorder %s75, %s76
      %p85 = scmp.eq.s32.totalorder %s23, 0
      %p86 = por %p84, %p85
      %p87 = scmp.ne.s32.totalorder %s75, %s76
      %p88 = scmp.eq.s32.totalorder %s24, 1
      %p89 = por %p87, %p88
      %p91 = scmp.ne.s32.totalorder %s76, %s90
      %p92 = scmp.eq.s32.totalorder %s24, 0
      %p93 = por %p91, %p92
      %s95 = sadd.s32 %s94, 1
      %p98 = scmp.eq.s32.totalorder %s18, 1
      %p99 = scmp.ne.s32.totalorder %s94, %s96
      %p100 = scmp.eq.s32.totalorder %s18, 0
      %p101 = por %p99, %p100
      %p102 = scmp.ne.s32.totalorder %s94, %s96
      %p103 = scmp.eq.s32.totalorder %s23, 1
      %p104 = por %p102, %p103
      %p105 = scmp.ne.s32.totalorder %s96, %s97
      %p106 = scmp.eq.s32.totalorder %s23, 0
      %p107 = por %p105, %p106
      %p108 = scmp.ne.s32.totalorder %s96, %s97
      %p109 = scmp.eq.s32.totalorder %s24, 1
      %p110 = por %p108, %p109
      %p112 = scmp.ne.s32.totalorder %s97, %s111
      %p113 = scmp.eq.s32.totalorder %s24, 0
      %p114 = por %p112, %p113
      %s116 = sadd.s32 %s115, 1
      %p119 = scmp.eq.s32.totalorder %s18, 1
      %p120 = scmp.ne.s32.totalorder %s115, %s117
      %p121 = scmp.eq.s32.totalorder %s18, 0
      %p122 = por %p120, %p121
      %p123 = scmp.ne.s32.totalorder %s115, %s117
      %p124 = scmp.eq.s32.totalorder %s23, 1
      %p125 = por %p123, %p124
      %p126 = scmp.ne.s32.totalorder %s117, %s118
      %p127 = scmp.eq.s32.totalorder %s23, 0
      %p128 = por %p126, %p127
      %p129 = scmp.ne.s32.totalorder %s117, %s118
      %p130 = scmp.eq.s32.totalorder %s24, 1
      %p131 = por %p129, %p130
      %p133 = scmp.ne.s32.totalorder %s118, %s132
      %p134 = scmp.eq.s32.totalorder %s24, 0
      %p135 = por %p133, %p134
      %s137 = sadd.s32 %s136, 1
      %p140 = scmp.eq.s32.totalorder %s18, 1
      %p141 = scmp.ne.s32.totalorder %s136, %s138
      %p142 = scmp.eq.s32.totalorder %s18, 0
      %p143 = por %p141, %p142
      %p144 = scmp.ne.s32.totalorder %s136, %s138
      %p145 = scmp.eq.s32.totalorder %s23, 1
      %p146 = por %p144, %p145
      %p147 = scmp.ne.s32.totalorder %s138, %s139
      %p148 = scmp.eq.s32.totalorder %s23, 0
      %p149 = por %p147, %p148
      %p150 = scmp.ne.s32.totalorder %s138, %s139
      %p151 = scmp.eq.s32.totalorder %s24, 1
      %p152 = por %p150, %p151
      %p154 = scmp.ne.s32.totalorder %s139, %s153
      %p155 = scmp.eq.s32.totalorder %s24, 0
      %p156 = por %p154, %p155
      %s158 = sadd.s32 %s157, 1
      %p161 = scmp.eq.s32.totalorder %s18, 1
      %p162 = scmp.ne.s32.totalorder %s157, %s159
      %p163 = scmp.eq.s32.totalorder %s18, 0
      %p164 = por %p162, %p163
      %p165 = scmp.ne.s32.totalorder %s157, %s159
      %p166 = scmp.eq.s32.totalorder %s23, 1
      %p167 = por %p165, %p166
      %p168 = scmp.ne.s32.totalorder %s159, %s160
      %p169 = scmp.eq.s32.totalorder %s23, 0
      %p170 = por %p168, %p169
      %p171 = scmp.ne.s32.totalorder %s159, %s160
      %p172 = scmp.eq.s32.totalorder %s24, 1
      %p173 = por %p171, %p172
      %p175 = scmp.ne.s32.totalorder %s160, %s174
      %p176 = scmp.eq.s32.totalorder %s24, 0
      %p177 = por %p175, %p176
      %s178 = ssub.s32 %s18, %s25
      %p179 = scmp.eq.s32.totalorder %s178, 0
      %s181 = sadd.s32 %s180, 1
      %s182 = scalar_select %p179, %s180, %s181
      %p185 = pneg %p179
      %p186 = scmp.eq.s32.totalorder %s18, 1
      %p187 = por %p185, %p186
      %p188 = scmp.ne.s32.totalorder %s180, %s183
      %p189 = scmp.eq.s32.totalorder %s18, 0
      %p190 = por %p188, %p189
      %p191 = scmp.ne.s32.totalorder %s180, %s183
      %p192 = scmp.eq.s32.totalorder %s23, 1
      %p193 = por %p191, %p192
      %p194 = scmp.ne.s32.totalorder %s183, %s184
      %p195 = scmp.eq.s32.totalorder %s23, 0
      %p196 = por %p194, %p195
      %p197 = scmp.ne.s32.totalorder %s183, %s184
      %p198 = scmp.eq.s32.totalorder %s24, 1
      %p199 = por %p197, %p198
      %p201 = scmp.ne.s32.totalorder %s184, %s200
      %p202 = scmp.eq.s32.totalorder %s24, 0
      %p203 = por %p201, %p202
      %s204 = ssub.s32 %s18, %s25
      %p205 = scmp.eq.s32.totalorder %s204, 0
      %s207 = sadd.s32 %s206, 1
      %s208 = scalar_select %p205, %s206, %s207
      %p211 = pneg %p205
      %p212 = scmp.eq.s32.totalorder %s18, 1
      %p213 = por %p211, %p212
      %p214 = scmp.ne.s32.totalorder %s206, %s209
      %p215 = scmp.eq.s32.totalorder %s18, 0
      %p216 = por %p214, %p215
      %p217 = scmp.ne.s32.totalorder %s206, %s209
      %p218 = scmp.eq.s32.totalorder %s23, 1
      %p219 = por %p217, %p218
      %p220 = scmp.ne.s32.totalorder %s209, %s210
      %p221 = scmp.eq.s32.totalorder %s23, 0
      %p222 = por %p220, %p221
      %p223 = scmp.ne.s32.totalorder %s209, %s210
      %p224 = scmp.eq.s32.totalorder %s24, 1
      %p225 = por %p223, %p224
      %p227 = scmp.ne.s32.totalorder %s210, %s226
      %p228 = scmp.eq.s32.totalorder %s24, 0
      %p229 = por %p227, %p228
      %p230 = scmp.le.s32.totalorder 1, %s18
      %p231 = scmp.lt.s32.totalorder %s18, 3
      %p232 = pnand %p230, %p231
      %p233 = pneg %p232
      // Predicated region
      $region9: #{xvit_forward.6} parent=5 // pred_check
        _
      $region10: #{xvit_forward.6} parent=5 // pred_check_branch
        %235 = sbr.rel (%p232) target = $region12
      $region11: #{xvit_forward.6} parent=5 // pred_region
        %s236 = ssub.s32 %s18, 1
        // Predicated region
        $region13: #{xvit_forward.6} parent=11 // pred_check
          %p237 = pneg %p65
        $region14: #{xvit_forward.6} parent=11 // pred_check_branch
          %239 = sbr.rel (%p237) target = $region16
        $region15: #{xvit_forward.6} parent=11 // pred_region
          _
        $region16: #{xvit_forward.6} parent=11 // pred_fallthru
          _
        // Predicated region
        $region17: #{xvit_forward.6} parent=11 // pred_check
          %p240 = pneg %p86
        $region18: #{xvit_forward.6} parent=11 // pred_check_branch
          %242 = sbr.rel (%p240) target = $region20
        $region19: #{xvit_forward.6} parent=11 // pred_region
          _
        $region20: #{xvit_forward.6} parent=11 // pred_fallthru
          _
        // Predicated region
        $region21: #{xvit_forward.6} parent=11 // pred_check
          %p243 = pneg %p107
        $region22: #{xvit_forward.6} parent=11 // pred_check_branch
          %245 = sbr.rel (%p243) target = $region24
        $region23: #{xvit_forward.6} parent=11 // pred_region
          _
        $region24: #{xvit_forward.6} parent=11 // pred_fallthru
          _
        // Predicated region
        $region25: #{xvit_forward.6} parent=11 // pred_check
          %p246 = pneg %p128
        $region26: #{xvit_forward.6} parent=11 // pred_check_branch
          %248 = sbr.rel (%p246) target = $region28
        $region27: #{xvit_forward.6} parent=11 // pred_region
          _
        $region28: #{xvit_forward.6} parent=11 // pred_fallthru
          _
        // Predicated region
        $region29: #{xvit_forward.6} parent=11 // pred_check
          %p249 = pneg %p149
        $region30: #{xvit_forward.6} parent=11 // pred_check_branch
          %251 = sbr.rel (%p249) target = $region32
        $region31: #{xvit_forward.6} parent=11 // pred_region
          _
        $region32: #{xvit_forward.6} parent=11 // pred_fallthru
          _
        // Predicated region
        $region33: #{xvit_forward.6} parent=11 // pred_check
          %p252 = pneg %p170
        $region34: #{xvit_forward.6} parent=11 // pred_check_branch
          %254 = sbr.rel (%p252) target = $region36
        $region35: #{xvit_forward.6} parent=11 // pred_region
          _
        $region36: #{xvit_forward.6} parent=11 // pred_fallthru
          _
      $region12: #{xvit_forward.6} parent=5 // pred_fallthru
        _
      %p255 = scmp.lt.s32.totalorder %s18, 2
      // Predicated region
      $region37: #{xvit_forward.6} parent=5 // pred_check
        %p256 = pneg %p255
      $region38: #{xvit_forward.6} parent=5 // pred_check_branch
        %258 = sbr.rel (%p256) target = $region40
      $region39: #{xvit_forward.6} parent=5 // pred_region
        // Predicated region
        $region41: #{xvit_forward.6} parent=39 // pred_check
          %p259 = pneg %p38
        $region42: #{xvit_forward.6} parent=39 // pred_check_branch
          %261 = sbr.rel (%p259) target = $region44
        $region43: #{xvit_forward.6} parent=39 // pred_region
          %p262 = scmp.lt.s32.totalorder %s18, 1
          %s263 = scalar_select %p262, %s18, 1
          %s264 = smul.addr %s263, 8
          %s265 = smul.addr %s264, 8
          %s266 = scalar_lea.vmem %s0, %s265
        $region44: #{xvit_forward.6} parent=39 // pred_fallthru
          _
      $region40: #{xvit_forward.6} parent=5 // pred_fallthru
        _
      %p267 = scmp.le.s32.totalorder 1, %s18
      %p268 = scmp.lt.s32.totalorder %s18, 3
      %p269 = pnand %p267, %p268
      %p270 = pneg %p269
      // Predicated region
      $region45: #{xvit_forward.6} parent=5 // pred_check
        _
      $region46: #{xvit_forward.6} parent=5 // pred_check_branch
        %272 = sbr.rel (%p269) target = $region48
      $region47: #{xvit_forward.6} parent=5 // pred_region
        %s273 = ssub.s32 %s18, 1
        %p274 = scmp.lt.s32.totalorder %s23, 1
        %s275 = scalar_select %p274, %s23, 1
        %s276 = smul.addr %s275, 8
        %s277 = smul.addr %s276, 8
        %s278 = scalar_lea.vmem %s0, %s277
        %p279 = pneg %p44
        %p280 = pneg %p41
        %p281 = pneg %p65
        %p282 = pneg %p62
        %p283 = pneg %p86
        %p284 = pneg %p83
        %p285 = pneg %p107
        %p286 = pneg %p104
        %p287 = pneg %p128
        %p288 = pneg %p125
        %p289 = pneg %p149
        %p290 = pneg %p146
        %p291 = pneg %p170
        %p292 = pneg %p167
        %p293 = pneg %p196
        %p294 = pneg %p193
        %p295 = scmp.lt.s32.totalorder %s23, 1
        %s296 = scalar_select %p295, %s23, 1
        %s297 = smul.addr %s296, 8
        %s298 = smul.addr %s297, 8
        %s299 = scalar_lea.vmem %s7, %s298
        %p300 = pneg %p222
        %p301 = pneg %p219
        %s302 = sand.u32 %s209, 1
        %s303 = scalar_lea.sflag [#allocation3], %s302
        %s304 = sand.u32 %s209, 1
        %s305 = smul.addr %s304, 64
        %s306 = scalar_lea.vmem [#allocation2], %s305
        %p307 = scmp.lt.s32.totalorder %s23, 1
        %s308 = scalar_select %p307, %s23, 1
        %s309 = smul.addr %s308, 8
        %s310 = smul.addr %s309, 8
        %s311 = scalar_lea.vmem %s0, %s310
        %p312 = scmp.lt.s32.totalorder %s23, 1
        %s313 = scalar_select %p312, %s23, 1
        %s314 = smul.addr %s313, 8
        %s315 = smul.addr %s314, 8
        %s316 = scalar_lea.vmem %s7, %s315
        %v318 = vld [vmem:[%s311] sm:$0xff]
        %v319 = vld [vmem:[%s311 + $0x8] sm:$0xff]
        %v320 = vld [vmem:[%s311 + $0x10] sm:$0xff]
        %v321 = vld [vmem:[%s311 + $0x18] sm:$0xff]
        %v322 = vld [vmem:[%s311 + $0x20] sm:$0xff]
        %v323 = vld [vmem:[%s311 + $0x28] sm:$0xff]
        %v324 = vld [vmem:[%s311 + $0x30] sm:$0xff]
        %v325 = vld [vmem:[%s311 + $0x38] sm:$0xff]
        %v326 = vpack.c.bf16 %v319, %v318
        %v327 = vpack.c.bf16 %v321, %v320
        %v328 = vpack.c.bf16 %v323, %v322
        %v329 = vpack.c.bf16 %v325, %v324
        %v330 = vld [vmem:[%s1] sm:$0xf]
        %v331 = vld [vmem:[%s1 + $0x4] sm:$0xf]
        %v332 = vld [vmem:[%s2] sm:$0x1]
        %v334 = vperm.slane %v332, 0
        %v338 = vunpack.c.l.b16 %v330
        %v339 = vunpack.c.l.b16 %v331
        %v340 = vpack.c.b16 %v339, %v338
        %vm342 = vcmask 130048
        %v344 = vsel %vm342, %v326, 0
        %v347 = vsel %vm342, %v327, 0
        %v350 = vsel %vm342, %v328, 0
        %v353 = vsel %vm342, %v329, 0
        %355 = vmatpush.bf16.msra.mxu0 0
        %356 = vmatpush.bf16.msra.mxu0 0
        %357 = vmatpush.bf16.msra.mxu0 0
        %358 = vmatpush.bf16.msra.mxu0 0
        %359 = vmatpush.bf16.msra.mxu0 0
        %360 = vmatpush.bf16.msra.mxu0 0
        %361 = vmatpush.bf16.msra.mxu0 0
        %362 = vmatpush.bf16.msra.mxu0 %v340
        %363 = vmatmul.bf16.gmra.mxu0 %v344
        %v364 = vpop.f32.mrf.mxu0
        %v365 = vadd.f32 %v334, %v364
        %v366 = vpop.f32.mrf.mxu0
        %v367 = vadd.f32 %v334, %v366
        %368 = vmatmul.bf16.gmra.mxu0 %v347
        %v369 = vpop.f32.mrf.mxu0
        %v370 = vadd.f32 %v334, %v369
        %v371 = vpop.f32.mrf.mxu0
        %v372 = vadd.f32 %v334, %v371
        %373 = vmatmul.bf16.gmra.mxu0 %v350
        %v374 = vpop.f32.mrf.mxu0
        %v375 = vadd.f32 %v334, %v374
        %v376 = vpop.f32.mrf.mxu0
        %v377 = vadd.f32 %v334, %v376
        %378 = vmatmul.bf16.gmra.mxu0 %v353
        %v379 = vpop.f32.mrf.mxu0
        %v380 = vadd.f32 %v334, %v379
        %v381 = vpop.f32.mrf.mxu0
        %v382 = vadd.f32 %v334, %v381
        %383 = vdwg.mxu0
        %384 = vst [vmem:[%s316] sm:$0xff] %v365
        %385 = vst [vmem:[%s316 + $0x8] sm:$0xff] %v367
        %386 = vst [vmem:[%s316 + $0x10] sm:$0xff] %v370
        %387 = vst [vmem:[%s316 + $0x18] sm:$0xff] %v372
        %388 = vst [vmem:[%s316 + $0x20] sm:$0xff] %v375
        %389 = vst [vmem:[%s316 + $0x28] sm:$0xff] %v377
        %390 = vst [vmem:[%s316 + $0x30] sm:$0xff] %v380
        %391 = vst [vmem:[%s316 + $0x38] sm:$0xff] %v382
        %v392 = vpack.c.bf16 %v367, %v365
        %v393 = vpack.c.bf16 %v372, %v370
        %v394 = vpack.c.bf16 %v377, %v375
        %v395 = vpack.c.bf16 %v382, %v380
        %v396 = vld [vmem:[%s3] sm:$0xf]
        %v397 = vld [vmem:[%s3 + $0x4] sm:$0xf]
        %v398 = vld [vmem:[%s3 + $0x8] sm:$0xf]
        %v399 = vld [vmem:[%s3 + $0xc] sm:$0xf]
        %v400 = vld [vmem:[%s3 + $0x10] sm:$0xf]
        %v401 = vld [vmem:[%s3 + $0x14] sm:$0xf]
        %v402 = vld [vmem:[%s3 + $0x18] sm:$0xf]
        %v403 = vld [vmem:[%s3 + $0x1c] sm:$0xf]
        %v404 = vld [vmem:[%s3 + $0x20] sm:$0xf]
        %v405 = vld [vmem:[%s3 + $0x24] sm:$0xf]
        %v406 = vld [vmem:[%s3 + $0x28] sm:$0xf]
        %v407 = vld [vmem:[%s3 + $0x2c] sm:$0xf]
        %v408 = vld [vmem:[%s3 + $0x30] sm:$0xf]
        %v409 = vld [vmem:[%s3 + $0x34] sm:$0xf]
        %v410 = vld [vmem:[%s3 + $0x38] sm:$0xf]
        %v411 = vld [vmem:[%s3 + $0x3c] sm:$0xf]
        %v412 = vld [vmem:[%s4] sm:$0x1]
        %v414 = vperm.slane %v412, 0
        %v432 = vunpack.c.l.b16 %v396
        %v433 = vunpack.c.l.b16 %v397
        %v434 = vunpack.c.l.b16 %v398
        %v435 = vunpack.c.l.b16 %v399
        %v436 = vunpack.c.l.b16 %v400
        %v437 = vunpack.c.l.b16 %v401
        %v438 = vunpack.c.l.b16 %v402
        %v439 = vunpack.c.l.b16 %v403
        %v440 = vunpack.c.l.b16 %v404
        %v441 = vunpack.c.l.b16 %v405
        %v442 = vunpack.c.l.b16 %v406
        %v443 = vunpack.c.l.b16 %v407
        %v444 = vunpack.c.l.b16 %v408
        %v445 = vunpack.c.l.b16 %v409
        %v446 = vunpack.c.l.b16 %v410
        %v447 = vunpack.c.l.b16 %v411
        %v448 = vpack.c.b16 %v433, %v432
        %v449 = vpack.c.b16 %v435, %v434
        %v450 = vpack.c.b16 %v437, %v436
        %v451 = vpack.c.b16 %v439, %v438
        %v452 = vpack.c.b16 %v441, %v440
        %v453 = vpack.c.b16 %v443, %v442
        %v454 = vpack.c.b16 %v445, %v444
        %v455 = vpack.c.b16 %v447, %v446
        %464 = vmatpush.bf16.msra.mxu0 %v455
        %465 = vmatpush.bf16.msra.mxu0 %v454
        %466 = vmatpush.bf16.msra.mxu0 %v453
        %467 = vmatpush.bf16.msra.mxu0 %v452
        %468 = vmatpush.bf16.msra.mxu0 %v451
        %469 = vmatpush.bf16.msra.mxu0 %v450
        %470 = vmatpush.bf16.msra.mxu0 %v449
        %471 = vmatpush.bf16.msra.mxu0 %v448
        %472 = vmatmul.bf16.gmra.mxu0 %v392
        %v473 = vpop.f32.mrf.mxu0
        %v474 = vadd.f32 %v414, %v473
        %v475 = vpop.f32.mrf.mxu0
        %v476 = vadd.f32 %v414, %v475
        %477 = vmatmul.bf16.gmra.mxu0 %v393
        %v478 = vpop.f32.mrf.mxu0
        %v479 = vadd.f32 %v414, %v478
        %v480 = vpop.f32.mrf.mxu0
        %v481 = vadd.f32 %v414, %v480
        %482 = vmatmul.bf16.gmra.mxu0 %v394
        %v483 = vpop.f32.mrf.mxu0
        %v484 = vadd.f32 %v414, %v483
        %v485 = vpop.f32.mrf.mxu0
        %v486 = vadd.f32 %v414, %v485
        %487 = vmatmul.bf16.gmra.mxu0 %v395
        %v488 = vpop.f32.mrf.mxu0
        %v489 = vadd.f32 %v414, %v488
        %v490 = vpop.f32.mrf.mxu0
        %v491 = vadd.f32 %v414, %v490
        %492 = vdwg.mxu0
        %v493 = vld [vmem:[%s5] sm:$0xf]
        %v494 = vld [vmem:[%s5 + $0x4] sm:$0xf]
        %v495 = vld [vmem:[%s5 + $0x8] sm:$0xf]
        %v496 = vld [vmem:[%s5 + $0xc] sm:$0xf]
        %v497 = vld [vmem:[%s5 + $0x10] sm:$0xf]
        %v498 = vld [vmem:[%s5 + $0x14] sm:$0xf]
        %v499 = vld [vmem:[%s5 + $0x18] sm:$0xf]
        %v500 = vld [vmem:[%s5 + $0x1c] sm:$0xf]
        %v501 = vld [vmem:[%s5 + $0x20] sm:$0xf]
        %v502 = vld [vmem:[%s5 + $0x24] sm:$0xf]
        %v503 = vld [vmem:[%s5 + $0x28] sm:$0xf]
        %v504 = vld [vmem:[%s5 + $0x2c] sm:$0xf]
        %v505 = vld [vmem:[%s5 + $0x30] sm:$0xf]
        %v506 = vld [vmem:[%s5 + $0x34] sm:$0xf]
        %v507 = vld [vmem:[%s5 + $0x38] sm:$0xf]
        %v508 = vld [vmem:[%s5 + $0x3c] sm:$0xf]
        %v509 = vld [vmem:[%s6] sm:$0x1]
        %v511 = vperm.slane %v509, 0
        %v529 = vunpack.c.l.b16 %v493
        %v530 = vunpack.c.l.b16 %v494
        %v531 = vunpack.c.l.b16 %v495
        %v532 = vunpack.c.l.b16 %v496
        %v533 = vunpack.c.l.b16 %v497
        %v534 = vunpack.c.l.b16 %v498
        %v535 = vunpack.c.l.b16 %v499
        %v536 = vunpack.c.l.b16 %v500
        %v537 = vunpack.c.l.b16 %v501
        %v538 = vunpack.c.l.b16 %v502
        %v539 = vunpack.c.l.b16 %v503
        %v540 = vunpack.c.l.b16 %v504
        %v541 = vunpack.c.l.b16 %v505
        %v542 = vunpack.c.l.b16 %v506
        %v543 = vunpack.c.l.b16 %v507
        %v544 = vunpack.c.l.b16 %v508
        %v545 = vpack.c.b16 %v530, %v529
        %v546 = vpack.c.b16 %v532, %v531
        %v547 = vpack.c.b16 %v534, %v533
        %v548 = vpack.c.b16 %v536, %v535
        %v549 = vpack.c.b16 %v538, %v537
        %v550 = vpack.c.b16 %v540, %v539
        %v551 = vpack.c.b16 %v542, %v541
        %v552 = vpack.c.b16 %v544, %v543
        %561 = vmatpush.bf16.msra.mxu0 %v552
        %562 = vmatpush.bf16.msra.mxu0 %v551
        %563 = vmatpush.bf16.msra.mxu0 %v550
        %564 = vmatpush.bf16.msra.mxu0 %v549
        %565 = vmatpush.bf16.msra.mxu0 %v548
        %566 = vmatpush.bf16.msra.mxu0 %v547
        %567 = vmatpush.bf16.msra.mxu0 %v546
        %568 = vmatpush.bf16.msra.mxu0 %v545
        %569 = vmatmul.bf16.gmra.mxu0 %v392
        %v570 = vpop.f32.mrf.mxu0
        %v571 = vadd.f32 %v511, %v570
        %v572 = vpop.f32.mrf.mxu0
        %v573 = vadd.f32 %v511, %v572
        %574 = vmatmul.bf16.gmra.mxu0 %v393
        %v575 = vpop.f32.mrf.mxu0
        %v576 = vadd.f32 %v511, %v575
        %v577 = vpop.f32.mrf.mxu0
        %v578 = vadd.f32 %v511, %v577
        %579 = vmatmul.bf16.gmra.mxu0 %v394
        %v580 = vpop.f32.mrf.mxu0
        %v581 = vadd.f32 %v511, %v580
        %v582 = vpop.f32.mrf.mxu0
        %v583 = vadd.f32 %v511, %v582
        %584 = vmatmul.bf16.gmra.mxu0 %v395
        %v585 = vpop.f32.mrf.mxu0
        %v586 = vadd.f32 %v511, %v585
        %v587 = vpop.f32.mrf.mxu0
        %v588 = vadd.f32 %v511, %v587
        %589 = vdwg.mxu0
        %v590 = vpack.c.bf16 %v476, %v474
        %v591 = vpack.c.bf16 %v481, %v479
        %v592 = vpack.c.bf16 %v486, %v484
        %v593 = vpack.c.bf16 %v491, %v489
        %v594 = vpack.c.bf16 %v573, %v571
        %v595 = vpack.c.bf16 %v578, %v576
        %v596 = vpack.c.bf16 %v583, %v581
        %v597 = vpack.c.bf16 %v588, %v586
        %598 = vmatpush.bf16.xpose.msra.mxu0 0
        %599 = vmatpush.bf16.xpose.msra.mxu0 0
        %600 = vmatpush.bf16.xpose.msra.mxu0 0
        %601 = vmatpush.bf16.xpose.msra.mxu0 0
        %602 = vmatpush.bf16.xpose.msra.mxu0 %v597
        %603 = vmatpush.bf16.xpose.msra.mxu0 %v596
        %604 = vmatpush.bf16.xpose.msra.mxu0 %v595
        %605 = vmatpush.bf16.xpose.msra.mxu0 %v594
        %606 = vmatmul.bf16.gmra.mxu0 %v590
        %v607 = vpop.f32.mrf.mxu0
        %v608 = vadd.f32 0.0, %v607
        %v609 = vpop.f32.mrf.mxu0
        %v610 = vadd.f32 0.0, %v609
        %611 = vmatmul.bf16.gmra.mxu0 %v591
        %v612 = vpop.f32.mrf.mxu0
        %v613 = vadd.f32 0.0, %v612
        %v614 = vpop.f32.mrf.mxu0
        %v615 = vadd.f32 0.0, %v614
        %616 = vmatmul.bf16.gmra.mxu0 %v592
        %v617 = vpop.f32.mrf.mxu0
        %v618 = vadd.f32 0.0, %v617
        %v619 = vpop.f32.mrf.mxu0
        %v620 = vadd.f32 0.0, %v619
        %621 = vmatmul.bf16.gmra.mxu0 %v593
        %v622 = vpop.f32.mrf.mxu0
        %v623 = vadd.f32 0.0, %v622
        %v624 = vpop.f32.mrf.mxu0
        %v625 = vadd.f32 0.0, %v624
        %626 = vdwg.mxu0
        %v627 = vmul.f32 %v608, 0.088388346
        %v628 = vmul.f32 %v610, 0.088388346
        %v629 = vmul.f32 %v613, 0.088388346
        %v630 = vmul.f32 %v615, 0.088388346
        %v631 = vmul.f32 %v618, 0.088388346
        %v632 = vmul.f32 %v620, 0.088388346
        %v633 = vmul.f32 %v623, 0.088388346
        %v634 = vmul.f32 %v625, 0.088388346
        %vm635 = vcmask 523264
        %636 = vst.msk [vmem:[%s306] sm:$0xff] %vm635, %v627
        %637 = vst.msk [vmem:[%s306 + $0x8] sm:$0xff] %vm635, %v628
        %638 = vst.msk [vmem:[%s306 + $0x10] sm:$0xff] %vm635, %v629
        %639 = vst.msk [vmem:[%s306 + $0x18] sm:$0xff] %vm635, %v630
        %640 = vst.msk [vmem:[%s306 + $0x20] sm:$0xff] %vm635, %v631
        %641 = vst.msk [vmem:[%s306 + $0x28] sm:$0xff] %vm635, %v632
        %642 = vst.msk [vmem:[%s306 + $0x30] sm:$0xff] %vm635, %v633
        %643 = vst.msk [vmem:[%s306 + $0x38] sm:$0xff] %vm635, %v634
        %p644 = scmp.lt.s32.totalorder %s23, 1
        %s645 = scalar_select %p644, %s23, 1
        %s646 = smul.addr %s645, 8
        %s647 = smul.addr %s646, 8
        %s648 = scalar_lea.vmem %s7, %s647
        %s649 = sand.u32 %s209, 1
        %s650 = scalar_lea.sflag [#allocation3], %s649
        %s651 = sand.u32 %s209, 1
        %s652 = smul.addr %s651, 64
        %s653 = scalar_lea.vmem [#allocation2], %s652
        // Predicated region
        $region49: #{xvit_forward.6} parent=47 // pred_check
          %p654 = pneg %p193
        $region50: #{xvit_forward.6} parent=47 // pred_check_branch
          %656 = sbr.rel (%p654) target = $region52
        $region51: #{xvit_forward.6} parent=47 // pred_region
          _
        $region52: #{xvit_forward.6} parent=47 // pred_fallthru
          _
        // Predicated region
        $region53: #{xvit_forward.6} parent=47 // pred_check
          %p657 = pneg %p219
        $region54: #{xvit_forward.6} parent=47 // pred_check_branch
          %659 = sbr.rel (%p657) target = $region56
        $region55: #{xvit_forward.6} parent=47 // pred_region
          %661 = vsyncadd %s650, 0
          %s662 = smul.addr %s23, 8
          %s663 = smul.addr %s662, 8
          %s664 = scalar_lea.hbm %s8, %s663
          %s665 = sshll.u32 %s653, 4
          %s666 = int_to_ptr.vmem [resolvable:$true] %s665
          %s667 = sshll.u32 %s664, 4
          %s668 = int_to_ptr.hbm [resolvable:$true] %s667
          %673 = dma.vmem_to_hbm [thread:$0]  %s666, 1024, %s668, %s650, 128, 128, 8
        $region56: #{xvit_forward.6} parent=47 // pred_fallthru
          _
      $region48: #{xvit_forward.6} parent=5 // pred_fallthru
        _
      %p674 = scmp.le.s32.totalorder 2, %s18
      // Predicated region
      $region57: #{xvit_forward.6} parent=5 // pred_check
        %p675 = pneg %p674
      $region58: #{xvit_forward.6} parent=5 // pred_check_branch
        %677 = sbr.rel (%p675) target = $region60
      $region59: #{xvit_forward.6} parent=5 // pred_region
        %s678 = ssub.s32 %s18, 2
        // Predicated region
        $region61: #{xvit_forward.6} parent=59 // pred_check
          %p679 = pneg %p199
        $region62: #{xvit_forward.6} parent=59 // pred_check_branch
          %681 = sbr.rel (%p679) target = $region64
        $region63: #{xvit_forward.6} parent=59 // pred_region
          %p682 = scmp.lt.s32.totalorder %s24, 1
          %s683 = scalar_select %p682, %s24, 1
          %s684 = smul.addr %s683, 8
          %s685 = smul.addr %s684, 8
          %s686 = scalar_lea.vmem %s7, %s685
        $region64: #{xvit_forward.6} parent=59 // pred_fallthru
          _
        // Predicated region
        $region65: #{xvit_forward.6} parent=59 // pred_check
          %p687 = pneg %p225
        $region66: #{xvit_forward.6} parent=59 // pred_check_branch
          %689 = sbr.rel (%p687) target = $region68
        $region67: #{xvit_forward.6} parent=59 // pred_region
          %s690 = sand.u32 %s210, 1
          %s691 = scalar_lea.sflag [#allocation3], %s690
          %s692 = sand.u32 %s210, 1
          %s693 = smul.addr %s692, 64
          %s694 = scalar_lea.vmem [#allocation2], %s693
          %696 = dma.done %s691, 1024
        $region68: #{xvit_forward.6} parent=59 // pred_fallthru
          _
      $region60: #{xvit_forward.6} parent=5 // pred_fallthru
        _
    $region6: #{xvit_forward.6} parent=1 // loop_footer
      %s22 = sadd.s32 1, %s18
    $region7: #{xvit_forward.6} parent=1 // loop_footer_branch
      %17 = sbr.rel target = $region3
    $region8: #{xvit_forward.6} parent=1 // loop_exit
      _
    %697 = vsyncpa [#allocation3], 1
    %s698 = scalar_lea.sflag [#allocation3], 1
    %699 = vsyncpa %s698, 1

// kernel: xvit_forward.11
$region0: #{xvit_forward.11}
  #allocation0 [shape = 'u32[]', space=smem, size = 0x4, offset = 0x4, fixed_abs, tag = 'smem constant byte address 0x4 - core index']
  #allocation1 [shape = 'u32[72,128]{1,0:T(1,128)}', space=vmem, size = 0x9000, scoped, tag = 'internal scratch']
  %s0 = inlined_call_operand.vmem [shape: f32[2,128], index: 0, kind: input, shape index: {}]
  %s1 = inlined_call_operand.vmem [shape: f32[1,128], index: 1, kind: input, shape index: {}]
  %s2 = inlined_call_operand.vmem [shape: f32[1,128], index: 2, kind: input, shape index: {}]
  %s3 = inlined_call_operand.vmem [shape: bf16[128,2], index: 3, kind: input, shape index: {}]
  %s4 = inlined_call_operand.vmem [shape: f32[1,2], index: 4, kind: input, shape index: {}]
  %s5 = inlined_call_operand.hbm [shape: f32[2,2], index: 5, kind: output, shape index: {}]
  %s6 = sld [smem:[#allocation0]]
  $region30: #{xvit_forward.11} parent=0
    _
  %s8 = ssub.s32 1, %s6
  %s9 = scalar_select 0, %s8, %s6
  $region1: #{xvit_forward.11} parent=0
    #allocation2 [shape = 'u8[1024]{0}', space=vmem, size = 0x400, scoped, tag = 'output window, operand 0, single buffered']
    #allocation3 [shape = 's32[1]{0}', space=sflag, size = 0x4, scoped, tag = 'scoped memory for xvit_forward.11']
    %10 = vsyncpa [#allocation3], 0
    // Predicated region
    $region2: #{xvit_forward.11} parent=1 // pred_check
      _
    $region3: #{xvit_forward.11} parent=1 // pred_check_branch
      %12 = sbr.rel (0) target = $region5
    $region4: #{xvit_forward.11} parent=1 // pred_region
      _
    $region5: #{xvit_forward.11} parent=1 // pred_fallthru
      _
    // Predicated region
    $region6: #{xvit_forward.11} parent=1 // pred_check
      _
    $region7: #{xvit_forward.11} parent=1 // pred_check_branch
      %14 = sbr.rel (0) target = $region9
    $region8: #{xvit_forward.11} parent=1 // pred_region
      _
    $region9: #{xvit_forward.11} parent=1 // pred_fallthru
      _
    // Predicated region
    $region10: #{xvit_forward.11} parent=1 // pred_check
      _
    $region11: #{xvit_forward.11} parent=1 // pred_check_branch
      %16 = sbr.rel (0) target = $region13
    $region12: #{xvit_forward.11} parent=1 // pred_region
      _
    $region13: #{xvit_forward.11} parent=1 // pred_fallthru
      _
    // Predicated region
    $region14: #{xvit_forward.11} parent=1 // pred_check
      _
    $region15: #{xvit_forward.11} parent=1 // pred_check_branch
      %18 = sbr.rel (0) target = $region17
    $region16: #{xvit_forward.11} parent=1 // pred_region
      _
    $region17: #{xvit_forward.11} parent=1 // pred_fallthru
      _
    // Predicated region
    $region18: #{xvit_forward.11} parent=1 // pred_check
      _
    $region19: #{xvit_forward.11} parent=1 // pred_check_branch
      %20 = sbr.rel (0) target = $region21
    $region20: #{xvit_forward.11} parent=1 // pred_region
      _
    $region21: #{xvit_forward.11} parent=1 // pred_fallthru
      _
    %v21 = vld [vmem:[%s0] sm:$0x3]
    %v22 = vld [vmem:[%s1] sm:$0x1]
    %v23 = vld [vmem:[%s2] sm:$0x1]
    %vm24 = vcmask 1041408
    %v25 = vsel %vm24, %v21, 0.0
    %26 = vadd.xlane.f32.xlu0 %v25
    %v27 = vpop.xlane.xlu0 %26
    %v28 = vrcp.pop 128.0
    %v29 = vmul.f32 128.0, %v28
    %v30 = vsub.f32 1.0, %v29
    %v31 = vmul.f32 %v28, %v30
    %v32 = vadd.f32 %v28, %v31
    %vm33 = vweird.f32 %v28
    %v34 = vsel %vm33, %v28, %v32
    %v35 = vmul.f32 %v27, %v34
    %v36 = vsub.f32 %v21, %v35
    %v37 = vmul.f32 %v36, %v36
    %v38 = vsel %vm24, %v37, 0.0
    %39 = vadd.xlane.f32.xlu0 %v38
    %v40 = vpop.xlane.xlu0 %39
    %v41 = vmul.f32 %v40, %v34
    %v42 = vadd.f32 %v41, 1e-06
    %v43 = vrsqrt.pop %v42
    %v44 = vmul.f32 %v43, %v42
    %v45 = vmul.f32 %v44, %v43
    %v46 = vmul.f32 0.5, %v45
    %v47 = vsub.f32 1.5, %v46
    %v48 = vmul.f32 %v43, %v47
    %vm49 = vweird.f32 %v42
    %vm50 = vweird.f32 %v43
    %vm51 = vmor %vm49, %vm50
    %v52 = vsel %vm51, %v43, %v48
    %v53 = vmul.f32 %v36, %v52
    %v55 = vperm.slane %v22, 0
    %v57 = vmul.f32 %v53, %v55
    %v59 = vperm.slane %v23, 0
    %v61 = vadd.f32 %v57, %v59
    %v62 = vpack.c.bf16 %v61, %v61
    %v63 = vld [vmem:[%s3] sm:$0xf]
    %v64 = vld [vmem:[%s3 + $0x4] sm:$0xf]
    %v65 = vld [vmem:[%s3 + $0x8] sm:$0xf]
    %v66 = vld [vmem:[%s3 + $0xc] sm:$0xf]
    %v67 = vld [vmem:[%s3 + $0x10] sm:$0xf]
    %v68 = vld [vmem:[%s3 + $0x14] sm:$0xf]
    %v69 = vld [vmem:[%s3 + $0x18] sm:$0xf]
    %v70 = vld [vmem:[%s3 + $0x1c] sm:$0xf]
    %v71 = vld [vmem:[%s3 + $0x20] sm:$0xf]
    %v72 = vld [vmem:[%s3 + $0x24] sm:$0xf]
    %v73 = vld [vmem:[%s3 + $0x28] sm:$0xf]
    %v74 = vld [vmem:[%s3 + $0x2c] sm:$0xf]
    %v75 = vld [vmem:[%s3 + $0x30] sm:$0xf]
    %v76 = vld [vmem:[%s3 + $0x34] sm:$0xf]
    %v77 = vld [vmem:[%s3 + $0x38] sm:$0xf]
    %v78 = vld [vmem:[%s3 + $0x3c] sm:$0xf]
    %v79 = vld [vmem:[%s4] sm:$0x1]
    %v81 = vperm.slane %v79, 0
    %v99 = vunpack.c.l.b16 %v63
    %v100 = vunpack.c.l.b16 %v64
    %v101 = vunpack.c.l.b16 %v65
    %v102 = vunpack.c.l.b16 %v66
    %v103 = vunpack.c.l.b16 %v67
    %v104 = vunpack.c.l.b16 %v68
    %v105 = vunpack.c.l.b16 %v69
    %v106 = vunpack.c.l.b16 %v70
    %v107 = vunpack.c.l.b16 %v71
    %v108 = vunpack.c.l.b16 %v72
    %v109 = vunpack.c.l.b16 %v73
    %v110 = vunpack.c.l.b16 %v74
    %v111 = vunpack.c.l.b16 %v75
    %v112 = vunpack.c.l.b16 %v76
    %v113 = vunpack.c.l.b16 %v77
    %v114 = vunpack.c.l.b16 %v78
    %v115 = vpack.c.b16 %v100, %v99
    %v116 = vpack.c.b16 %v102, %v101
    %v117 = vpack.c.b16 %v104, %v103
    %v118 = vpack.c.b16 %v106, %v105
    %v119 = vpack.c.b16 %v108, %v107
    %v120 = vpack.c.b16 %v110, %v109
    %v121 = vpack.c.b16 %v112, %v111
    %v122 = vpack.c.b16 %v114, %v113
    %131 = vmatpush.bf16.msra.mxu0 %v122
    %132 = vmatpush.bf16.msra.mxu0 %v121
    %133 = vmatpush.bf16.msra.mxu0 %v120
    %134 = vmatpush.bf16.msra.mxu0 %v119
    %135 = vmatpush.bf16.msra.mxu0 %v118
    %136 = vmatpush.bf16.msra.mxu0 %v117
    %137 = vmatpush.bf16.msra.mxu0 %v116
    %138 = vmatpush.bf16.msra.mxu0 %v115
    %139 = vmatmul.bf16.gmra.mxu0 %v62
    %v140 = vpop.f32.mrf.mxu0
    %v141 = vadd.f32 %v81, %v140
    %v142 = vpop.f32.mrf.mxu0
    %143 = vdwg.mxu0
    %vm144 = vcmask 9216
    %145 = vst.msk [vmem:[#allocation2] sm:$0x3] %vm144, %v141
    // Predicated region
    $region22: #{xvit_forward.11} parent=1 // pred_check
      _
    $region23: #{xvit_forward.11} parent=1 // pred_check_branch
      %147 = sbr.rel (0) target = $region25
    $region24: #{xvit_forward.11} parent=1 // pred_region
      %149 = vsyncadd [#allocation3], 0
      %s151 = sshll.u32 [#allocation2], 4
      %s152 = int_to_ptr.vmem [resolvable:$true] %s151
      %s153 = sshll.u32 %s5, 4
      %s154 = int_to_ptr.hbm [resolvable:$true] %s153
      %156 = dma.vmem_to_hbm [thread:$0]  %s152, 32, %s154, [#allocation3]
    $region25: #{xvit_forward.11} parent=1 // pred_fallthru
      _
    // Predicated region
    $region26: #{xvit_forward.11} parent=1 // pred_check
      _
    $region27: #{xvit_forward.11} parent=1 // pred_check_branch
      %158 = sbr.rel (0) target = $region29
    $region28: #{xvit_forward.11} parent=1 // pred_region
      %160 = dma.done [#allocation3], 32
    $region29: #{xvit_forward.11} parent=1 // pred_fallthru
      _
    %161 = vsyncpa [#allocation3], 1

// kernel: xvit_forward.7
$region0: #{xvit_forward.7}
  #allocation0 [shape = 'u32[]', space=smem, size = 0x4, offset = 0x4, fixed_abs, tag = 'smem constant byte address 0x4 - core index']
  #allocation1 [shape = 'u32[72,128]{1,0:T(1,128)}', space=vmem, size = 0x9000, scoped, tag = 'internal scratch']
  %s0 = inlined_call_operand.vmem [shape: f32[2,65,128], index: 0, kind: input, shape index: {}]
  %s1 = inlined_call_operand.vmem [shape: f32[1,128], index: 1, kind: input, shape index: {}]
  %s2 = inlined_call_operand.vmem [shape: f32[1,128], index: 2, kind: input, shape index: {}]
  %s3 = inlined_call_operand.vmem [shape: bf16[128,384], index: 3, kind: input, shape index: {}]
  %s4 = inlined_call_operand.vmem [shape: f32[1,384], index: 4, kind: input, shape index: {}]
  %s5 = inlined_call_operand.vmem [shape: bf16[128,128], index: 5, kind: input, shape index: {}]
  %s6 = inlined_call_operand.vmem [shape: f32[1,128], index: 6, kind: input, shape index: {}]
  %s7 = inlined_call_operand.vmem [shape: f32[2,65,128], index: 7, kind: output, shape index: {}]
  %s8 = sld [smem:[#allocation0]]
  $region61: #{xvit_forward.7} parent=0
    _
  %s10 = ssub.s32 1, %s8
  %s11 = scalar_select 0, %s10, %s8
  loop: start=0, step=1, limit=4
  $region2: #{xvit_forward.7} parent=0 // loop_pre_header
    _
  $region3: #{xvit_forward.7} parent=0 // loop_header
    %s13 = sphi 0, %s17
    %p14 = scmp.ge.s32.totalorder %s13, 4
    %s23 = sphi 0, %s25
    %s26 = sphi 0, %s23
    %s27 = sphi 0, %s26
    %s43 = sphi 0, %s27
    %s47 = sphi 0, %s47
    %s49 = sphi 0, %s47
    %s50 = sphi 0, %s49
    %s64 = sphi 0, %s50
    %s68 = sphi 0, %s68
    %s70 = sphi 0, %s68
    %s71 = sphi 0, %s70
    %s85 = sphi 0, %s71
    %s89 = sphi 0, %s89
    %s91 = sphi 0, %s89
    %s92 = sphi 0, %s91
    %s106 = sphi 0, %s92
    %s110 = sphi 0, %s110
    %s112 = sphi 0, %s110
    %s113 = sphi 0, %s112
    %s127 = sphi 0, %s113
    %s131 = sphi 0, %s131
    %s133 = sphi 0, %s131
    %s134 = sphi 0, %s133
    %s148 = sphi 0, %s134
    %s152 = sphi 0, %s152
    %s154 = sphi 0, %s152
    %s155 = sphi 0, %s154
    %s169 = sphi 0, %s155
    %s175 = sphi 0, %s177
    %s178 = sphi 0, %s175
    %s179 = sphi 0, %s178
    %s195 = sphi 0, %s179
  $region4: #{xvit_forward.7} parent=0 // loop_header_branch
    %16 = sbr.rel (%p14) target = $region8
  $region5: #{xvit_forward.7} parent=0 // loop_body
    %s18 = ssub.s32 %s13, 1
    %s19 = ssub.s32 %s13, 2
    %s20 = sadd.s32 %s13, 1
    %s21 = ssub.s32 %s13, %s20
    %p22 = scmp.eq.s32.totalorder %s21, 0
    %s24 = sadd.s32 %s23, 1
    %s25 = scalar_select %p22, %s23, %s24
    %p28 = pneg %p22
    %p29 = scmp.eq.s32.totalorder %s13, 1
    %p30 = por %p28, %p29
    %p31 = scmp.ne.s32.totalorder %s23, %s26
    %p32 = scmp.eq.s32.totalorder %s13, 0
    %p33 = por %p31, %p32
    %p34 = scmp.ne.s32.totalorder %s23, %s26
    %p35 = scmp.eq.s32.totalorder %s18, 1
    %p36 = por %p34, %p35
    %p37 = scmp.ne.s32.totalorder %s26, %s27
    %p38 = scmp.eq.s32.totalorder %s18, 0
    %p39 = por %p37, %p38
    %p40 = scmp.ne.s32.totalorder %s26, %s27
    %p41 = scmp.eq.s32.totalorder %s19, 1
    %p42 = por %p40, %p41
    %p44 = scmp.ne.s32.totalorder %s27, %s43
    %p45 = scmp.eq.s32.totalorder %s19, 0
    %p46 = por %p44, %p45
    %s48 = sadd.s32 %s47, 1
    %p51 = scmp.eq.s32.totalorder %s13, 1
    %p52 = scmp.ne.s32.totalorder %s47, %s49
    %p53 = scmp.eq.s32.totalorder %s13, 0
    %p54 = por %p52, %p53
    %p55 = scmp.ne.s32.totalorder %s47, %s49
    %p56 = scmp.eq.s32.totalorder %s18, 1
    %p57 = por %p55, %p56
    %p58 = scmp.ne.s32.totalorder %s49, %s50
    %p59 = scmp.eq.s32.totalorder %s18, 0
    %p60 = por %p58, %p59
    %p61 = scmp.ne.s32.totalorder %s49, %s50
    %p62 = scmp.eq.s32.totalorder %s19, 1
    %p63 = por %p61, %p62
    %p65 = scmp.ne.s32.totalorder %s50, %s64
    %p66 = scmp.eq.s32.totalorder %s19, 0
    %p67 = por %p65, %p66
    %s69 = sadd.s32 %s68, 1
    %p72 = scmp.eq.s32.totalorder %s13, 1
    %p73 = scmp.ne.s32.totalorder %s68, %s70
    %p74 = scmp.eq.s32.totalorder %s13, 0
    %p75 = por %p73, %p74
    %p76 = scmp.ne.s32.totalorder %s68, %s70
    %p77 = scmp.eq.s32.totalorder %s18, 1
    %p78 = por %p76, %p77
    %p79 = scmp.ne.s32.totalorder %s70, %s71
    %p80 = scmp.eq.s32.totalorder %s18, 0
    %p81 = por %p79, %p80
    %p82 = scmp.ne.s32.totalorder %s70, %s71
    %p83 = scmp.eq.s32.totalorder %s19, 1
    %p84 = por %p82, %p83
    %p86 = scmp.ne.s32.totalorder %s71, %s85
    %p87 = scmp.eq.s32.totalorder %s19, 0
    %p88 = por %p86, %p87
    %s90 = sadd.s32 %s89, 1
    %p93 = scmp.eq.s32.totalorder %s13, 1
    %p94 = scmp.ne.s32.totalorder %s89, %s91
    %p95 = scmp.eq.s32.totalorder %s13, 0
    %p96 = por %p94, %p95
    %p97 = scmp.ne.s32.totalorder %s89, %s91
    %p98 = scmp.eq.s32.totalorder %s18, 1
    %p99 = por %p97, %p98
    %p100 = scmp.ne.s32.totalorder %s91, %s92
    %p101 = scmp.eq.s32.totalorder %s18, 0
    %p102 = por %p100, %p101
    %p103 = scmp.ne.s32.totalorder %s91, %s92
    %p104 = scmp.eq.s32.totalorder %s19, 1
    %p105 = por %p103, %p104
    %p107 = scmp.ne.s32.totalorder %s92, %s106
    %p108 = scmp.eq.s32.totalorder %s19, 0
    %p109 = por %p107, %p108
    %s111 = sadd.s32 %s110, 1
    %p114 = scmp.eq.s32.totalorder %s13, 1
    %p115 = scmp.ne.s32.totalorder %s110, %s112
    %p116 = scmp.eq.s32.totalorder %s13, 0
    %p117 = por %p115, %p116
    %p118 = scmp.ne.s32.totalorder %s110, %s112
    %p119 = scmp.eq.s32.totalorder %s18, 1
    %p120 = por %p118, %p119
    %p121 = scmp.ne.s32.totalorder %s112, %s113
    %p122 = scmp.eq.s32.totalorder %s18, 0
    %p123 = por %p121, %p122
    %p124 = scmp.ne.s32.totalorder %s112, %s113
    %p125 = scmp.eq.s32.totalorder %s19, 1
    %p126 = por %p124, %p125
    %p128 = scmp.ne.s32.totalorder %s113, %s127
    %p129 = scmp.eq.s32.totalorder %s19, 0
    %p130 = por %p128, %p129
    %s132 = sadd.s32 %s131, 1
    %p135 = scmp.eq.s32.totalorder %s13, 1
    %p136 = scmp.ne.s32.totalorder %s131, %s133
    %p137 = scmp.eq.s32.totalorder %s13, 0
    %p138 = por %p136, %p137
    %p139 = scmp.ne.s32.totalorder %s131, %s133
    %p140 = scmp.eq.s32.totalorder %s18, 1
    %p141 = por %p139, %p140
    %p142 = scmp.ne.s32.totalorder %s133, %s134
    %p143 = scmp.eq.s32.totalorder %s18, 0
    %p144 = por %p142, %p143
    %p145 = scmp.ne.s32.totalorder %s133, %s134
    %p146 = scmp.eq.s32.totalorder %s19, 1
    %p147 = por %p145, %p146
    %p149 = scmp.ne.s32.totalorder %s134, %s148
    %p150 = scmp.eq.s32.totalorder %s19, 0
    %p151 = por %p149, %p150
    %s153 = sadd.s32 %s152, 1
    %p156 = scmp.eq.s32.totalorder %s13, 1
    %p157 = scmp.ne.s32.totalorder %s152, %s154
    %p158 = scmp.eq.s32.totalorder %s13, 0
    %p159 = por %p157, %p158
    %p160 = scmp.ne.s32.totalorder %s152, %s154
    %p161 = scmp.eq.s32.totalorder %s18, 1
    %p162 = por %p160, %p161
    %p163 = scmp.ne.s32.totalorder %s154, %s155
    %p164 = scmp.eq.s32.totalorder %s18, 0
    %p165 = por %p163, %p164
    %p166 = scmp.ne.s32.totalorder %s154, %s155
    %p167 = scmp.eq.s32.totalorder %s19, 1
    %p168 = por %p166, %p167
    %p170 = scmp.ne.s32.totalorder %s155, %s169
    %p171 = scmp.eq.s32.totalorder %s19, 0
    %p172 = por %p170, %p171
    %s173 = ssub.s32 %s13, %s20
    %p174 = scmp.eq.s32.totalorder %s173, 0
    %s176 = sadd.s32 %s175, 1
    %s177 = scalar_select %p174, %s175, %s176
    %p180 = pneg %p174
    %p181 = scmp.eq.s32.totalorder %s13, 1
    %p182 = por %p180, %p181
    %p183 = scmp.ne.s32.totalorder %s175, %s178
    %p184 = scmp.eq.s32.totalorder %s13, 0
    %p185 = por %p183, %p184
    %p186 = scmp.ne.s32.totalorder %s175, %s178
    %p187 = scmp.eq.s32.totalorder %s18, 1
    %p188 = por %p186, %p187
    %p189 = scmp.ne.s32.totalorder %s178, %s179
    %p190 = scmp.eq.s32.totalorder %s18, 0
    %p191 = por %p189, %p190
    %p192 = scmp.ne.s32.totalorder %s178, %s179
    %p193 = scmp.eq.s32.totalorder %s19, 1
    %p194 = por %p192, %p193
    %p196 = scmp.ne.s32.totalorder %s179, %s195
    %p197 = scmp.eq.s32.totalorder %s19, 0
    %p198 = por %p196, %p197
    %p199 = scmp.le.s32.totalorder 1, %s13
    %p200 = scmp.lt.s32.totalorder %s13, 3
    %p201 = pnand %p199, %p200
    %p202 = pneg %p201
    // Predicated region
    $region9: #{xvit_forward.7} parent=5 // pred_check
      _
    $region10: #{xvit_forward.7} parent=5 // pred_check_branch
      %204 = sbr.rel (%p201) target = $region12
    $region11: #{xvit_forward.7} parent=5 // pred_region
      %s205 = ssub.s32 %s13, 1
      // Predicated region
      $region13: #{xvit_forward.7} parent=11 // pred_check
        %p206 = pneg %p60
      $region14: #{xvit_forward.7} parent=11 // pred_check_branch
        %208 = sbr.rel (%p206) target = $region16
      $region15: #{xvit_forward.7} parent=11 // pred_region
        _
      $region16: #{xvit_forward.7} parent=11 // pred_fallthru
        _
      // Predicated region
      $region17: #{xvit_forward.7} parent=11 // pred_check
        %p209 = pneg %p81
      $region18: #{xvit_forward.7} parent=11 // pred_check_branch
        %211 = sbr.rel (%p209) target = $region20
      $region19: #{xvit_forward.7} parent=11 // pred_region
        _
      $region20: #{xvit_forward.7} parent=11 // pred_fallthru
        _
      // Predicated region
      $region21: #{xvit_forward.7} parent=11 // pred_check
        %p212 = pneg %p102
      $region22: #{xvit_forward.7} parent=11 // pred_check_branch
        %214 = sbr.rel (%p212) target = $region24
      $region23: #{xvit_forward.7} parent=11 // pred_region
        _
      $region24: #{xvit_forward.7} parent=11 // pred_fallthru
        _
      // Predicated region
      $region25: #{xvit_forward.7} parent=11 // pred_check
        %p215 = pneg %p123
      $region26: #{xvit_forward.7} parent=11 // pred_check_branch
        %217 = sbr.rel (%p215) target = $region28
      $region27: #{xvit_forward.7} parent=11 // pred_region
        _
      $region28: #{xvit_forward.7} parent=11 // pred_fallthru
        _
      // Predicated region
      $region29: #{xvit_forward.7} parent=11 // pred_check
        %p218 = pneg %p144
      $region30: #{xvit_forward.7} parent=11 // pred_check_branch
        %220 = sbr.rel (%p218) target = $region32
      $region31: #{xvit_forward.7} parent=11 // pred_region
        _
      $region32: #{xvit_forward.7} parent=11 // pred_fallthru
        _
      // Predicated region
      $region33: #{xvit_forward.7} parent=11 // pred_check
        %p221 = pneg %p165
      $region34: #{xvit_forward.7} parent=11 // pred_check_branch
        %223 = sbr.rel (%p221) target = $region36
      $region35: #{xvit_forward.7} parent=11 // pred_region
        _
      $region36: #{xvit_forward.7} parent=11 // pred_fallthru
        _
    $region12: #{xvit_forward.7} parent=5 // pred_fallthru
      _
    %p224 = scmp.lt.s32.totalorder %s13, 2
    // Predicated region
    $region37: #{xvit_forward.7} parent=5 // pred_check
      %p225 = pneg %p224
    $region38: #{xvit_forward.7} parent=5 // pred_check_branch
      %227 = sbr.rel (%p225) target = $region40
    $region39: #{xvit_forward.7} parent=5 // pred_region
      // Predicated region
      $region41: #{xvit_forward.7} parent=39 // pred_check
        %p228 = pneg %p33
      $region42: #{xvit_forward.7} parent=39 // pred_check_branch
        %230 = sbr.rel (%p228) target = $region44
      $region43: #{xvit_forward.7} parent=39 // pred_region
        %p231 = scmp.lt.s32.totalorder %s13, 1
        %s232 = scalar_select %p231, %s13, 1
        %s233 = smul.addr %s232, 9
        %s234 = smul.addr %s233, 8
        %s235 = scalar_lea.vmem %s0, %s234
      $region44: #{xvit_forward.7} parent=39 // pred_fallthru
        _
    $region40: #{xvit_forward.7} parent=5 // pred_fallthru
      _
    %p236 = scmp.le.s32.totalorder 1, %s13
    %p237 = scmp.lt.s32.totalorder %s13, 3
    %p238 = pnand %p236, %p237
    %p239 = pneg %p238
    // Predicated region
    $region45: #{xvit_forward.7} parent=5 // pred_check
      _
    $region46: #{xvit_forward.7} parent=5 // pred_check_branch
      %241 = sbr.rel (%p238) target = $region48
    $region47: #{xvit_forward.7} parent=5 // pred_region
      %s242 = ssub.s32 %s13, 1
      %p243 = scmp.lt.s32.totalorder %s18, 1
      %s244 = scalar_select %p243, %s18, 1
      %s245 = smul.addr %s244, 9
      %s246 = smul.addr %s245, 8
      %s247 = scalar_lea.vmem %s0, %s246
      %p248 = pneg %p39
      %p249 = pneg %p36
      %p250 = pneg %p60
      %p251 = pneg %p57
      %p252 = pneg %p81
      %p253 = pneg %p78
      %p254 = pneg %p102
      %p255 = pneg %p99
      %p256 = pneg %p123
      %p257 = pneg %p120
      %p258 = pneg %p144
      %p259 = pneg %p141
      %p260 = pneg %p165
      %p261 = pneg %p162
      %p262 = pneg %p191
      %p263 = pneg %p188
      %p264 = scmp.lt.s32.totalorder %s18, 1
      %s265 = scalar_select %p264, %s18, 1
      %s266 = smul.addr %s265, 9
      %s267 = smul.addr %s266, 8
      %s268 = scalar_lea.vmem %s7, %s267
      %p269 = scmp.lt.s32.totalorder %s18, 1
      %s270 = scalar_select %p269, %s18, 1
      %s271 = smul.addr %s270, 9
      %s272 = smul.addr %s271, 8
      %s273 = scalar_lea.vmem %s0, %s272
      %p274 = scmp.lt.s32.totalorder %s18, 1
      %s275 = scalar_select %p274, %s18, 1
      %s276 = smul.addr %s275, 9
      %s277 = smul.addr %s276, 8
      %s278 = scalar_lea.vmem %s7, %s277
      %v280 = vld [vmem:[%s273] sm:$0xff]
      %v281 = vld [vmem:[%s273 + $0x8] sm:$0xff]
      %v282 = vld [vmem:[%s273 + $0x10] sm:$0xff]
      %v283 = vld [vmem:[%s273 + $0x18] sm:$0xff]
      %v284 = vld [vmem:[%s273 + $0x20] sm:$0xff]
      %v285 = vld [vmem:[%s273 + $0x28] sm:$0xff]
      %v286 = vld [vmem:[%s273 + $0x30] sm:$0xff]
      %v287 = vld [vmem:[%s273 + $0x38] sm:$0xff]
      %v288 = vld [vmem:[%s273 + $0x40] sm:$0x1]
      %v289 = vld [vmem:[%s1] sm:$0x1]
      %v290 = vld [vmem:[%s2] sm:$0x1]
      %291 = vadd.xlane.f32.xlu0 %v280
      %v292 = vpop.xlane.xlu0 %291
      %293 = vadd.xlane.f32.xlu0 %v281
      %v294 = vpop.xlane.xlu0 %293
      %295 = vadd.xlane.f32.xlu0 %v282
      %v296 = vpop.xlane.xlu0 %295
      %297 = vadd.xlane.f32.xlu0 %v283
      %v298 = vpop.xlane.xlu0 %297
      %299 = vadd.xlane.f32.xlu0 %v284
      %v300 = vpop.xlane.xlu0 %299
      %301 = vadd.xlane.f32.xlu0 %v285
      %v302 = vpop.xlane.xlu0 %301
      %303 = vadd.xlane.f32.xlu0 %v286
      %v304 = vpop.xlane.xlu0 %303
      %305 = vadd.xlane.f32.xlu0 %v287
      %v306 = vpop.xlane.xlu0 %305
      %vm307 = vcmask 1040384
      %v308 = vsel %vm307, %v288, 0.0
      %309 = vadd.xlane.f32.xlu0 %v308
      %v310 = vpop.xlane.xlu0 %309
      %v311 = vrcp.pop 128.0
      %v312 = vmul.f32 128.0, %v311
      %v313 = vsub.f32 1.0, %v312
      %v314 = vmul.f32 %v311, %v313
      %v315 = vadd.f32 %v311, %v314
      %vm316 = vweird.f32 %v311
      %v317 = vsel %vm316, %v311, %v315
      %v318 = vmul.f32 %v292, %v317
      %v319 = vmul.f32 %v294, %v317
      %v320 = vmul.f32 %v296, %v317
      %v321 = vmul.f32 %v298, %v317
      %v322 = vmul.f32 %v300, %v317
      %v323 = vmul.f32 %v302, %v317
      %v324 = vmul.f32 %v304, %v317
      %v325 = vmul.f32 %v306, %v317
      %v326 = vmul.f32 %v310, %v317
      %v327 = vsub.f32 %v280, %v318
      %v328 = vsub.f32 %v281, %v319
      %v329 = vsub.f32 %v282, %v320
      %v330 = vsub.f32 %v283, %v321
      %v331 = vsub.f32 %v284, %v322
      %v332 = vsub.f32 %v285, %v323
      %v333 = vsub.f32 %v286, %v324
      %v334 = vsub.f32 %v287, %v325
      %v335 = vsub.f32 %v288, %v326
      %v336 = vmul.f32 %v327, %v327
      %v337 = vmul.f32 %v328, %v328
      %v338 = vmul.f32 %v329, %v329
      %v339 = vmul.f32 %v330, %v330
      %v340 = vmul.f32 %v331, %v331
      %v341 = vmul.f32 %v332, %v332
      %v342 = vmul.f32 %v333, %v333
      %v343 = vmul.f32 %v334, %v334
      %v344 = vmul.f32 %v335, %v335
      %345 = vadd.xlane.f32.xlu0 %v336
      %v346 = vpop.xlane.xlu0 %345
      %347 = vadd.xlane.f32.xlu0 %v337
      %v348 = vpop.xlane.xlu0 %347
      %349 = vadd.xlane.f32.xlu0 %v338
      %v350 = vpop.xlane.xlu0 %349
      %351 = vadd.xlane.f32.xlu0 %v339
      %v352 = vpop.xlane.xlu0 %351
      %353 = vadd.xlane.f32.xlu0 %v340
      %v354 = vpop.xlane.xlu0 %353
      %355 = vadd.xlane.f32.xlu0 %v341
      %v356 = vpop.xlane.xlu0 %355
      %357 = vadd.xlane.f32.xlu0 %v342
      %v358 = vpop.xlane.xlu0 %357
      %359 = vadd.xlane.f32.xlu0 %v343
      %v360 = vpop.xlane.xlu0 %359
      %v361 = vsel %vm307, %v344, 0.0
      %362 = vadd.xlane.f32.xlu0 %v361
      %v363 = vpop.xlane.xlu0 %362
      %v364 = vmul.f32 %v346, %v317
      %v365 = vmul.f32 %v348, %v317
      %v366 = vmul.f32 %v350, %v317
      %v367 = vmul.f32 %v352, %v317
      %v368 = vmul.f32 %v354, %v317
      %v369 = vmul.f32 %v356, %v317
      %v370 = vmul.f32 %v358, %v317
      %v371 = vmul.f32 %v360, %v317
      %v372 = vmul.f32 %v363, %v317
      %v373 = vadd.f32 %v364, 1e-06
      %v374 = vadd.f32 %v365, 1e-06
      %v375 = vadd.f32 %v366, 1e-06
      %v376 = vadd.f32 %v367, 1e-06
      %v377 = vadd.f32 %v368, 1e-06
      %v378 = vadd.f32 %v369, 1e-06
      %v379 = vadd.f32 %v370, 1e-06
      %v380 = vadd.f32 %v371, 1e-06
      %v381 = vadd.f32 %v372, 1e-06
      %v382 = vrsqrt.pop %v373
      %v383 = vmul.f32 %v382, %v373
      %v384 = vmul.f32 %v383, %v382
      %v385 = vmul.f32 0.5, %v384
      %v386 = vsub.f32 1.5, %v385
      %v387 = vmul.f32 %v382, %v386
      %vm388 = vweird.f32 %v373
      %vm389 = vweird.f32 %v382
      %vm390 = vmor %vm388, %vm389
      %v391 = vsel %vm390, %v382, %v387
      %v392 = vrsqrt.pop %v374
      %v393 = vmul.f32 %v392, %v374
      %v394 = vmul.f32 %v393, %v392
      %v395 = vmul.f32 0.5, %v394
      %v396 = vsub.f32 1.5, %v395
      %v397 = vmul.f32 %v392, %v396
      %vm398 = vweird.f32 %v374
      %vm399 = vweird.f32 %v392
      %vm400 = vmor %vm398, %vm399
      %v401 = vsel %vm400, %v392, %v397
      %v402 = vrsqrt.pop %v375
      %v403 = vmul.f32 %v402, %v375
      %v404 = vmul.f32 %v403, %v402
      %v405 = vmul.f32 0.5, %v404
      %v406 = vsub.f32 1.5, %v405
      %v407 = vmul.f32 %v402, %v406
      %vm408 = vweird.f32 %v375
      %vm409 = vweird.f32 %v402
      %vm410 = vmor %vm408, %vm409
      %v411 = vsel %vm410, %v402, %v407
      %v412 = vrsqrt.pop %v376
      %v413 = vmul.f32 %v412, %v376
      %v414 = vmul.f32 %v413, %v412
      %v415 = vmul.f32 0.5, %v414
      %v416 = vsub.f32 1.5, %v415
      %v417 = vmul.f32 %v412, %v416
      %vm418 = vweird.f32 %v376
      %vm419 = vweird.f32 %v412
      %vm420 = vmor %vm418, %vm419
      %v421 = vsel %vm420, %v412, %v417
      %v422 = vrsqrt.pop %v377
      %v423 = vmul.f32 %v422, %v377
      %v424 = vmul.f32 %v423, %v422
      %v425 = vmul.f32 0.5, %v424
      %v426 = vsub.f32 1.5, %v425
      %v427 = vmul.f32 %v422, %v426
      %vm428 = vweird.f32 %v377
      %vm429 = vweird.f32 %v422
      %vm430 = vmor %vm428, %vm429
      %v431 = vsel %vm430, %v422, %v427
      %v432 = vrsqrt.pop %v378
      %v433 = vmul.f32 %v432, %v378
      %v434 = vmul.f32 %v433, %v432
      %v435 = vmul.f32 0.5, %v434
      %v436 = vsub.f32 1.5, %v435
      %v437 = vmul.f32 %v432, %v436
      %vm438 = vweird.f32 %v378
      %vm439 = vweird.f32 %v432
      %vm440 = vmor %vm438, %vm439
      %v441 = vsel %vm440, %v432, %v437
      %v442 = vrsqrt.pop %v379
      %v443 = vmul.f32 %v442, %v379
      %v444 = vmul.f32 %v443, %v442
      %v445 = vmul.f32 0.5, %v444
      %v446 = vsub.f32 1.5, %v445
      %v447 = vmul.f32 %v442, %v446
      %vm448 = vweird.f32 %v379
      %vm449 = vweird.f32 %v442
      %vm450 = vmor %vm448, %vm449
      %v451 = vsel %vm450, %v442, %v447
      %v452 = vrsqrt.pop %v380
      %v453 = vmul.f32 %v452, %v380
      %v454 = vmul.f32 %v453, %v452
      %v455 = vmul.f32 0.5, %v454
      %v456 = vsub.f32 1.5, %v455
      %v457 = vmul.f32 %v452, %v456
      %vm458 = vweird.f32 %v380
      %vm459 = vweird.f32 %v452
      %vm460 = vmor %vm458, %vm459
      %v461 = vsel %vm460, %v452, %v457
      %v462 = vrsqrt.pop %v381
      %v463 = vmul.f32 %v462, %v381
      %v464 = vmul.f32 %v463, %v462
      %v465 = vmul.f32 0.5, %v464
      %v466 = vsub.f32 1.5, %v465
      %v467 = vmul.f32 %v462, %v466
      %vm468 = vweird.f32 %v381
      %vm469 = vweird.f32 %v462
      %vm470 = vmor %vm468, %vm469
      %v471 = vsel %vm470, %v462, %v467
      %v472 = vmul.f32 %v327, %v391
      %v473 = vmul.f32 %v328, %v401
      %v474 = vmul.f32 %v329, %v411
      %v475 = vmul.f32 %v330, %v421
      %v476 = vmul.f32 %v331, %v431
      %v477 = vmul.f32 %v332, %v441
      %v478 = vmul.f32 %v333, %v451
      %v479 = vmul.f32 %v334, %v461
      %v480 = vmul.f32 %v335, %v471
      %v482 = vperm.slane %v289, 0
      %v484 = vmul.f32 %v472, %v482
      %v485 = vmul.f32 %v473, %v482
      %v486 = vmul.f32 %v474, %v482
      %v487 = vmul.f32 %v475, %v482
      %v488 = vmul.f32 %v476, %v482
      %v489 = vmul.f32 %v477, %v482
      %v490 = vmul.f32 %v478, %v482
      %v491 = vmul.f32 %v479, %v482
      %v492 = vmul.f32 %v480, %v482
      %v494 = vperm.slane %v290, 0
      %v496 = vadd.f32 %v484, %v494
      %v497 = vadd.f32 %v485, %v494
      %v498 = vadd.f32 %v486, %v494
      %v499 = vadd.f32 %v487, %v494
      %v500 = vadd.f32 %v488, %v494
      %v501 = vadd.f32 %v489, %v494
      %v502 = vadd.f32 %v490, %v494
      %v503 = vadd.f32 %v491, %v494
      %v504 = vadd.f32 %v492, %v494
      %v505 = vpack.c.bf16 %v497, %v496
      %v506 = vpack.c.bf16 %v499, %v498
      %v507 = vpack.c.bf16 %v501, %v500
      %v508 = vpack.c.bf16 %v503, %v502
      %v509 = vpack.c.bf16 %v504, %v504
      %v510 = vld [vmem:[%s3] sm:$0xff]
      %v511 = vld [vmem:[%s3 + $0x8] sm:$0xf]
      %v512 = vld [vmem:[%s3 + $0xc] sm:$0xff]
      %v513 = vld [vmem:[%s3 + $0x14] sm:$0xf]
      %v514 = vld [vmem:[%s3 + $0x18] sm:$0xff]
      %v515 = vld [vmem:[%s3 + $0x20] sm:$0xf]
      %v516 = vld [vmem:[%s3 + $0x24] sm:$0xff]
      %v517 = vld [vmem:[%s3 + $0x2c] sm:$0xf]
      %v518 = vld [vmem:[%s3 + $0x30] sm:$0xff]
      %v519 = vld [vmem:[%s3 + $0x38] sm:$0xf]
      %v520 = vld [vmem:[%s3 + $0x3c] sm:$0xff]
      %v521 = vld [vmem:[%s3 + $0x44] sm:$0xf]
      %v522 = vld [vmem:[%s3 + $0x48] sm:$0xff]
      %v523 = vld [vmem:[%s3 + $0x50] sm:$0xf]
      %v524 = vld [vmem:[%s3 + $0x54] sm:$0xff]
      %v525 = vld [vmem:[%s3 + $0x5c] sm:$0xf]
      %v526 = vld [vmem:[%s3 + $0x60] sm:$0xff]
      %v527 = vld [vmem:[%s3 + $0x68] sm:$0xf]
      %v528 = vld [vmem:[%s3 + $0x6c] sm:$0xff]
      %v529 = vld [vmem:[%s3 + $0x74] sm:$0xf]
      %v530 = vld [vmem:[%s3 + $0x78] sm:$0xff]
      %v531 = vld [vmem:[%s3 + $0x80] sm:$0xf]
      %v532 = vld [vmem:[%s3 + $0x84] sm:$0xff]
      %v533 = vld [vmem:[%s3 + $0x8c] sm:$0xf]
      %v534 = vld [vmem:[%s3 + $0x90] sm:$0xff]
      %v535 = vld [vmem:[%s3 + $0x98] sm:$0xf]
      %v536 = vld [vmem:[%s3 + $0x9c] sm:$0xff]
      %v537 = vld [vmem:[%s3 + $0xa4] sm:$0xf]
      %v538 = vld [vmem:[%s3 + $0xa8] sm:$0xff]
      %v539 = vld [vmem:[%s3 + $0xb0] sm:$0xf]
      %v540 = vld [vmem:[%s3 + $0xb4] sm:$0xff]
      %v541 = vld [vmem:[%s3 + $0xbc] sm:$0xf]
      %v542 = vld [vmem:[%s4] sm:$0x7]
      %v544 = vperm.slane %v542, 0
      %v545 = vperm.slane %v542, 1
      %v546 = vperm.slane %v542, 2
      %v582 = vunpack.c.l.b16 %v510
      %v583 = vunpack.c.h.b16 %v510
      %v584 = vunpack.c.l.b16 %v511
      %v585 = vunpack.c.l.b16 %v512
      %v586 = vunpack.c.h.b16 %v512
      %v587 = vunpack.c.l.b16 %v513
      %v588 = vunpack.c.l.b16 %v514
      %v589 = vunpack.c.h.b16 %v514
      %v590 = vunpack.c.l.b16 %v515
      %v591 = vunpack.c.l.b16 %v516
      %v592 = vunpack.c.h.b16 %v516
      %v593 = vunpack.c.l.b16 %v517
      %v594 = vunpack.c.l.b16 %v518
      %v595 = vunpack.c.h.b16 %v518
      %v596 = vunpack.c.l.b16 %v519
      %v597 = vunpack.c.l.b16 %v520
      %v598 = vunpack.c.h.b16 %v520
      %v599 = vunpack.c.l.b16 %v521
      %v600 = vunpack.c.l.b16 %v522
      %v601 = vunpack.c.h.b16 %v522
      %v602 = vunpack.c.l.b16 %v523
      %v603 = vunpack.c.l.b16 %v524
      %v604 = vunpack.c.h.b16 %v524
      %v605 = vunpack.c.l.b16 %v525
      %v606 = vunpack.c.l.b16 %v526
      %v607 = vunpack.c.h.b16 %v526
      %v608 = vunpack.c.l.b16 %v527
      %v609 = vunpack.c.l.b16 %v528
      %v610 = vunpack.c.h.b16 %v528
      %v611 = vunpack.c.l.b16 %v529
      %v612 = vunpack.c.l.b16 %v530
      %v613 = vunpack.c.h.b16 %v530
      %v614 = vunpack.c.l.b16 %v531
      %v615 = vunpack.c.l.b16 %v532
      %v616 = vunpack.c.h.b16 %v532
      %v617 = vunpack.c.l.b16 %v533
      %v618 = vunpack.c.l.b16 %v534
      %v619 = vunpack.c.h.b16 %v534
      %v620 = vunpack.c.l.b16 %v535
      %v621 = vunpack.c.l.b16 %v536
      %v622 = vunpack.c.h.b16 %v536
      %v623 = vunpack.c.l.b16 %v537
      %v624 = vunpack.c.l.b16 %v538
      %v625 = vunpack.c.h.b16 %v538
      %v626 = vunpack.c.l.b16 %v539
      %v627 = vunpack.c.l.b16 %v540
      %v628 = vunpack.c.h.b16 %v540
      %v629 = vunpack.c.l.b16 %v541
      %v630 = vpack.c.b16 %v585, %v582
      %v631 = vpack.c.b16 %v586, %v583
      %v632 = vpack.c.b16 %v587, %v584
      %v633 = vpack.c.b16 %v591, %v588
      %v634 = vpack.c.b16 %v592, %v589
      %v635 = vpack.c.b16 %v593, %v590
      %v636 = vpack.c.b16 %v597, %v594
      %v637 = vpack.c.b16 %v598, %v595
      %v638 = vpack.c.b16 %v599, %v596
      %v639 = vpack.c.b16 %v603, %v600
      %v640 = vpack.c.b16 %v604, %v601
      %v641 = vpack.c.b16 %v605, %v602
      %v642 = vpack.c.b16 %v609, %v606
      %v643 = vpack.c.b16 %v610, %v607
      %v644 = vpack.c.b16 %v611, %v608
      %v645 = vpack.c.b16 %v615, %v612
      %v646 = vpack.c.b16 %v616, %v613
      %v647 = vpack.c.b16 %v617, %v614
      %v648 = vpack.c.b16 %v621, %v618
      %v649 = vpack.c.b16 %v622, %v619
      %v650 = vpack.c.b16 %v623, %v620
      %v651 = vpack.c.b16 %v627, %v624
      %v652 = vpack.c.b16 %v628, %v625
      %v653 = vpack.c.b16 %v629, %v626
      %678 = vmatpush.bf16.msra.mxu0 %v651
      %679 = vmatpush.bf16.msra.mxu0 %v648
      %680 = vmatpush.bf16.msra.mxu0 %v645
      %681 = vmatpush.bf16.msra.mxu0 %v642
      %682 = vmatpush.bf16.msra.mxu0 %v639
      %683 = vmatpush.bf16.msra.mxu0 %v636
      %684 = vmatpush.bf16.msra.mxu0 %v633
      %685 = vmatpush.bf16.msra.mxu0 %v630
      %686 = vmatmul.bf16.gmra.mxu0 %v505
      %v687 = vpop.f32.mrf.mxu0
      %v688 = vadd.f32 %v544, %v687
      %v689 = vpop.f32.mrf.mxu0
      %v690 = vadd.f32 %v544, %v689
      %691 = vmatmul.bf16.gmra.mxu0 %v506
      %v692 = vpop.f32.mrf.mxu0
      %v693 = vadd.f32 %v544, %v692
      %v694 = vpop.f32.mrf.mxu0
      %v695 = vadd.f32 %v544, %v694
      %696 = vmatmul.bf16.gmra.mxu0 %v507
      %v697 = vpop.f32.mrf.mxu0
      %v698 = vadd.f32 %v544, %v697
      %v699 = vpop.f32.mrf.mxu0
      %v700 = vadd.f32 %v544, %v699
      %701 = vmatmul.bf16.gmra.mxu0 %v508
      %v702 = vpop.f32.mrf.mxu0
      %v703 = vadd.f32 %v544, %v702
      %v704 = vpop.f32.mrf.mxu0
      %v705 = vadd.f32 %v544, %v704
      %706 = vmatmul.bf16.gmra.mxu0 %v509
      %v707 = vpop.f32.mrf.mxu0
      %v708 = vadd.f32 %v544, %v707
      %v709 = vpop.f32.mrf.mxu0
      %710 = vdwg.mxu0
      %711 = vmatpush.bf16.msra.mxu0 %v652
      %712 = vmatpush.bf16.msra.mxu0 %v649
      %713 = vmatpush.bf16.msra.mxu0 %v646
      %714 = vmatpush.bf16.msra.mxu0 %v643
      %715 = vmatpush.bf16.msra.mxu0 %v640
      %716 = vmatpush.bf16.msra.mxu0 %v637
      %717 = vmatpush.bf16.msra.mxu0 %v634
      %718 = vmatpush.bf16.msra.mxu0 %v631
      %719 = vmatmul.bf16.gmra.mxu0 %v505
      %v720 = vpop.f32.mrf.mxu0
      %v721 = vadd.f32 %v545, %v720
      %v722 = vpop.f32.mrf.mxu0
      %v723 = vadd.f32 %v545, %v722
      %724 = vmatmul.bf16.gmra.mxu0 %v506
      %v725 = vpop.f32.mrf.mxu0
      %v726 = vadd.f32 %v545, %v725
      %v727 = vpop.f32.mrf.mxu0
      %v728 = vadd.f32 %v545, %v727
      %729 = vmatmul.bf16.gmra.mxu0 %v507
      %v730 = vpop.f32.mrf.mxu0
      %v731 = vadd.f32 %v545, %v730
      %v732 = vpop.f32.mrf.mxu0
      %v733 = vadd.f32 %v545, %v732
      %734 = vmatmul.bf16.gmra.mxu0 %v508
      %v735 = vpop.f32.mrf.mxu0
      %v736 = vadd.f32 %v545, %v735
      %v737 = vpop.f32.mrf.mxu0
      %v738 = vadd.f32 %v545, %v737
      %739 = vmatmul.bf16.gmra.mxu0 %v509
      %v740 = vpop.f32.mrf.mxu0
      %v741 = vadd.f32 %v545, %v740
      %v742 = vpop.f32.mrf.mxu0
      %743 = vdwg.mxu0
      %744 = vmatpush.bf16.msra.mxu0 %v653
      %745 = vmatpush.bf16.msra.mxu0 %v650
      %746 = vmatpush.bf16.msra.mxu0 %v647
      %747 = vmatpush.bf16.msra.mxu0 %v644
      %748 = vmatpush.bf16.msra.mxu0 %v641
      %749 = vmatpush.bf16.msra.mxu0 %v638
      %750 = vmatpush.bf16.msra.mxu0 %v635
      %751 = vmatpush.bf16.msra.mxu0 %v632
      %752 = vmatmul.bf16.gmra.mxu0 %v505
      %v753 = vpop.f32.mrf.mxu0
      %v754 = vadd.f32 %v546, %v753
      %v755 = vpop.f32.mrf.mxu0
      %v756 = vadd.f32 %v546, %v755
      %757 = vmatmul.bf16.gmra.mxu0 %v506
      %v758 = vpop.f32.mrf.mxu0
      %v759 = vadd.f32 %v546, %v758
      %v760 = vpop.f32.mrf.mxu0
      %v761 = vadd.f32 %v546, %v760
      %762 = vmatmul.bf16.gmra.mxu0 %v507
      %v763 = vpop.f32.mrf.mxu0
      %v764 = vadd.f32 %v546, %v763
      %v765 = vpop.f32.mrf.mxu0
      %v766 = vadd.f32 %v546, %v765
      %767 = vmatmul.bf16.gmra.mxu0 %v508
      %v768 = vpop.f32.mrf.mxu0
      %v769 = vadd.f32 %v546, %v768
      %v770 = vpop.f32.mrf.mxu0
      %v771 = vadd.f32 %v546, %v770
      %772 = vmatmul.bf16.gmra.mxu0 %v509
      %v773 = vpop.f32.mrf.mxu0
      %v774 = vadd.f32 %v546, %v773
      %v775 = vpop.f32.mrf.mxu0
      %776 = vdwg.mxu0
      %v777 = vpack.c.bf16 %v690, %v688
      %v778 = vpack.c.bf16 %v695, %v693
      %v779 = vpack.c.bf16 %v700, %v698
      %v780 = vpack.c.bf16 %v705, %v703
      %v781 = vpack.c.bf16 %v708, %v708
      %v782 = vpack.c.bf16 %v723, %v721
      %v783 = vpack.c.bf16 %v728, %v726
      %v784 = vpack.c.bf16 %v733, %v731
      %v785 = vpack.c.bf16 %v738, %v736
      %v786 = vpack.c.bf16 %v741, %v741
      %v787 = vpack.c.bf16 %v756, %v754
      %v788 = vpack.c.bf16 %v761, %v759
      %v789 = vpack.c.bf16 %v766, %v764
      %v790 = vpack.c.bf16 %v771, %v769
      %v791 = vpack.c.bf16 %v774, %v774
      %vm792 = vcmask 261120
      %v794 = vsel %vm792, %v777, 0
      %v797 = vsel %vm792, %v778, 0
      %v800 = vsel %vm792, %v779, 0
      %v803 = vsel %vm792, %v780, 0
      %v806 = vsel %vm792, %v781, 0
      %v809 = vsel %vm792, %v782, 0
      %v812 = vsel %vm792, %v783, 0
      %v815 = vsel %vm792, %v784, 0
      %v818 = vsel %vm792, %v785, 0
      %v821 = vsel %vm792, %v786, 0
      %823 = vmatpush.bf16.xpose.msra.mxu0 0
      %824 = vmatpush.bf16.xpose.msra.mxu0 0
      %825 = vmatpush.bf16.xpose.msra.mxu0 0
      %826 = vmatpush.bf16.xpose.msra.mxu0 %v821
      %827 = vmatpush.bf16.xpose.msra.mxu0 %v818
      %828 = vmatpush.bf16.xpose.msra.mxu0 %v815
      %829 = vmatpush.bf16.xpose.msra.mxu0 %v812
      %830 = vmatpush.bf16.xpose.msra.mxu0 %v809
      %831 = vmatmul.bf16.gmra.mxu0 %v794
      %v832 = vpop.f32.mrf.mxu0
      %v833 = vadd.f32 0.0, %v832
      %v834 = vpop.f32.mrf.mxu0
      %v835 = vadd.f32 0.0, %v834
      %836 = vmatmul.bf16.gmra.mxu0 %v797
      %v837 = vpop.f32.mrf.mxu0
      %v838 = vadd.f32 0.0, %v837
      %v839 = vpop.f32.mrf.mxu0
      %v840 = vadd.f32 0.0, %v839
      %841 = vmatmul.bf16.gmra.mxu0 %v800
      %v842 = vpop.f32.mrf.mxu0
      %v843 = vadd.f32 0.0, %v842
      %v844 = vpop.f32.mrf.mxu0
      %v845 = vadd.f32 0.0, %v844
      %846 = vmatmul.bf16.gmra.mxu0 %v803
      %v847 = vpop.f32.mrf.mxu0
      %v848 = vadd.f32 0.0, %v847
      %v849 = vpop.f32.mrf.mxu0
      %v850 = vadd.f32 0.0, %v849
      %851 = vmatmul.bf16.gmra.mxu0 %v806
      %v852 = vpop.f32.mrf.mxu0
      %v853 = vadd.f32 0.0, %v852
      %v854 = vpop.f32.mrf.mxu0
      %855 = vdwg.mxu0
      %v856 = vmul.f32 %v833, 0.17677669
      %v857 = vmul.f32 %v835, 0.17677669
      %v858 = vmul.f32 %v838, 0.17677669
      %v859 = vmul.f32 %v840, 0.17677669
      %v860 = vmul.f32 %v843, 0.17677669
      %v861 = vmul.f32 %v845, 0.17677669
      %v862 = vmul.f32 %v848, 0.17677669
      %v863 = vmul.f32 %v850, 0.17677669
      %v864 = vmul.f32 %v853, 0.17677669
      %vm865 = vcmask 531456
      %v866 = vsel %vm865, %v856, -inf
      %867 = vmax.xlane.f32.xlu0 %v866
      %v868 = vpop.xlane.xlu0 %867
      %v869 = vsel %vm865, %v857, -inf
      %870 = vmax.xlane.f32.xlu0 %v869
      %v871 = vpop.xlane.xlu0 %870
      %v872 = vsel %vm865, %v858, -inf
      %873 = vmax.xlane.f32.xlu0 %v872
      %v874 = vpop.xlane.xlu0 %873
      %v875 = vsel %vm865, %v859, -inf
      %876 = vmax.xlane.f32.xlu0 %v875
      %v877 = vpop.xlane.xlu0 %876
      %v878 = vsel %vm865, %v860, -inf
      %879 = vmax.xlane.f32.xlu0 %v878
      %v880 = vpop.xlane.xlu0 %879
      %v881 = vsel %vm865, %v861, -inf
      %882 = vmax.xlane.f32.xlu0 %v881
      %v883 = vpop.xlane.xlu0 %882
      %v884 = vsel %vm865, %v862, -inf
      %885 = vmax.xlane.f32.xlu0 %v884
      %v886 = vpop.xlane.xlu0 %885
      %v887 = vsel %vm865, %v863, -inf
      %888 = vmax.xlane.f32.xlu0 %v887
      %v889 = vpop.xlane.xlu0 %888
      %vm890 = vcmask 524288
      %v891 = vsel %vm890, %v864, -inf
      %892 = vmax.xlane.f32.xlu0 %v891
      %v893 = vpop.xlane.xlu0 %892
      %v894 = vsub.f32 %v856, %v868
      %v895 = vsub.f32 %v857, %v871
      %v896 = vsub.f32 %v858, %v874
      %v897 = vsub.f32 %v859, %v877
      %v898 = vsub.f32 %v860, %v880
      %v899 = vsub.f32 %v861, %v883
      %v900 = vsub.f32 %v862, %v886
      %v901 = vsub.f32 %v863, %v889
      %v902 = vsub.f32 %v864, %v893
      %v903 = vmul.f32 %v894, 1.442695
      %v904 = vpow.pop %v903
      %v905 = vmul.f32 %v895, 1.442695
      %v906 = vpow.pop %v905
      %v907 = vmul.f32 %v896, 1.442695
      %v908 = vpow.pop %v907
      %v909 = vmul.f32 %v897, 1.442695
      %v910 = vpow.pop %v909
      %v911 = vmul.f32 %v898, 1.442695
      %v912 = vpow.pop %v911
      %v913 = vmul.f32 %v899, 1.442695
      %v914 = vpow.pop %v913
      %v915 = vmul.f32 %v900, 1.442695
      %v916 = vpow.pop %v915
      %v917 = vmul.f32 %v901, 1.442695
      %v918 = vpow.pop %v917
      %v919 = vmul.f32 %v902, 1.442695
      %v920 = vpow.pop %v919
      %v921 = vsel %vm865, %v904, 0.0
      %922 = vadd.xlane.f32.xlu0 %v921
      %v923 = vpop.xlane.xlu0 %922
      %v924 = vsel %vm865, %v906, 0.0
      %925 = vadd.xlane.f32.xlu0 %v924
      %v926 = vpop.xlane.xlu0 %925
      %v927 = vsel %vm865, %v908, 0.0
      %928 = vadd.xlane.f32.xlu0 %v927
      %v929 = vpop.xlane.xlu0 %928
      %v930 = vsel %vm865, %v910, 0.0
      %931 = vadd.xlane.f32.xlu0 %v930
      %v932 = vpop.xlane.xlu0 %931
      %v933 = vsel %vm865, %v912, 0.0
      %934 = vadd.xlane.f32.xlu0 %v933
      %v935 = vpop.xlane.xlu0 %934
      %v936 = vsel %vm865, %v914, 0.0
      %937 = vadd.xlane.f32.xlu0 %v936
      %v938 = vpop.xlane.xlu0 %937
      %v939 = vsel %vm865, %v916, 0.0
      %940 = vadd.xlane.f32.xlu0 %v939
      %v941 = vpop.xlane.xlu0 %940
      %v942 = vsel %vm865, %v918, 0.0
      %943 = vadd.xlane.f32.xlu0 %v942
      %v944 = vpop.xlane.xlu0 %943
      %v945 = vsel %vm890, %v920, 0.0
      %946 = vadd.xlane.f32.xlu0 %v945
      %v947 = vpop.xlane.xlu0 %946
      %v948 = vrcp.pop %v923
      %v949 = vrcp.pop %v926
      %v950 = vrcp.pop %v929
      %v951 = vrcp.pop %v932
      %v952 = vrcp.pop %v935
      %v953 = vrcp.pop %v938
      %v954 = vrcp.pop %v941
      %v955 = vrcp.pop %v944
      %v956 = vrcp.pop %v947
      %v957 = vmul.f32 %v904, %v948
      %v958 = vmul.f32 %v906, %v949
      %v959 = vmul.f32 %v908, %v950
      %v960 = vmul.f32 %v910, %v951
      %v961 = vmul.f32 %v912, %v952
      %v962 = vmul.f32 %v914, %v953
      %v963 = vmul.f32 %v916, %v954
      %v964 = vmul.f32 %v918, %v955
      %v965 = vmul.f32 %v920, %v956
      %v966 = vpack.c.bf16 %v958, %v957
      %v967 = vpack.c.bf16 %v960, %v959
      %v968 = vpack.c.bf16 %v962, %v961
      %v969 = vpack.c.bf16 %v964, %v963
      %v970 = vpack.c.bf16 %v965, %v965
      %v972 = vsel %vm865, %v966, 0
      %v975 = vsel %vm865, %v967, 0
      %v978 = vsel %vm865, %v968, 0
      %v981 = vsel %vm865, %v969, 0
      %v984 = vsel %vm865, %v970, 0
      %v986 = vsel 0, 4294967295, 65535
      %v987 = vsel %vm307, %v986, 0
      %v989 = vand.u32 %v791, %v987
      %991 = vmatpush.bf16.msra.mxu0 0
      %992 = vmatpush.bf16.msra.mxu0 0
      %993 = vmatpush.bf16.msra.mxu0 0
      %994 = vmatpush.bf16.msra.mxu0 %v989
      %995 = vmatpush.bf16.msra.mxu0 %v790
      %996 = vmatpush.bf16.msra.mxu0 %v789
      %997 = vmatpush.bf16.msra.mxu0 %v788
      %998 = vmatpush.bf16.msra.mxu0 %v787
      %999 = vmatmul.bf16.gmra.mxu0 %v972
      %v1000 = vpop.f32.mrf.mxu0
      %v1001 = vadd.f32 0.0, %v1000
      %v1002 = vpop.f32.mrf.mxu0
      %v1003 = vadd.f32 0.0, %v1002
      %1004 = vmatmul.bf16.gmra.mxu0 %v975
      %v1005 = vpop.f32.mrf.mxu0
      %v1006 = vadd.f32 0.0, %v1005
      %v1007 = vpop.f32.mrf.mxu0
      %v1008 = vadd.f32 0.0, %v1007
      %1009 = vmatmul.bf16.gmra.mxu0 %v978
      %v1010 = vpop.f32.mrf.mxu0
      %v1011 = vadd.f32 0.0, %v1010
      %v1012 = vpop.f32.mrf.mxu0
      %v1013 = vadd.f32 0.0, %v1012
      %1014 = vmatmul.bf16.gmra.mxu0 %v981
      %v1015 = vpop.f32.mrf.mxu0
      %v1016 = vadd.f32 0.0, %v1015
      %v1017 = vpop.f32.mrf.mxu0
      %v1018 = vadd.f32 0.0, %v1017
      %1019 = vmatmul.bf16.gmra.mxu0 %v984
      %v1020 = vpop.f32.mrf.mxu0
      %v1021 = vadd.f32 0.0, %v1020
      %v1022 = vpop.f32.mrf.mxu0
      %1023 = vdwg.mxu0
      %1029 = vrot.lane.b32.xlu0 %v777, 96
      %v1030 = vpop.permute.xlu0 %1029
      %1031 = vrot.lane.b32.xlu0 %v778, 96
      %v1032 = vpop.permute.xlu0 %1031
      %1033 = vrot.lane.b32.xlu0 %v779, 96
      %v1034 = vpop.permute.xlu0 %1033
      %1035 = vrot.lane.b32.xlu0 %v780, 96
      %v1036 = vpop.permute.xlu0 %1035
      %1037 = vrot.lane.b32.xlu0 %v781, 96
      %v1038 = vpop.permute.xlu0 %1037
      %1044 = vrot.lane.b32.xlu0 %v782, 96
      %v1045 = vpop.permute.xlu0 %1044
      %1046 = vrot.lane.b32.xlu0 %v783, 96
      %v1047 = vpop.permute.xlu0 %1046
      %1048 = vrot.lane.b32.xlu0 %v784, 96
      %v1049 = vpop.permute.xlu0 %1048
      %1050 = vrot.lane.b32.xlu0 %v785, 96
      %v1051 = vpop.permute.xlu0 %1050
      %1052 = vrot.lane.b32.xlu0 %v786, 96
      %v1053 = vpop.permute.xlu0 %1052
      %v1055 = vsel %vm792, %v1030, 0
      %v1058 = vsel %vm792, %v1032, 0
      %v1061 = vsel %vm792, %v1034, 0
      %v1064 = vsel %vm792, %v1036, 0
      %v1067 = vsel %vm792, %v1038, 0
      %v1070 = vsel %vm792, %v1045, 0
      %v1073 = vsel %vm792, %v1047, 0
      %v1076 = vsel %vm792, %v1049, 0
      %v1079 = vsel %vm792, %v1051, 0
      %v1082 = vsel %vm792, %v1053, 0
      %1084 = vmatpush.bf16.xpose.msra.mxu0 0
      %1085 = vmatpush.bf16.xpose.msra.mxu0 0
      %1086 = vmatpush.bf16.xpose.msra.mxu0 0
      %1087 = vmatpush.bf16.xpose.msra.mxu0 %v1082
      %1088 = vmatpush.bf16.xpose.msra.mxu0 %v1079
      %1089 = vmatpush.bf16.xpose.msra.mxu0 %v1076
      %1090 = vmatpush.bf16.xpose.msra.mxu0 %v1073
      %1091 = vmatpush.bf16.xpose.msra.mxu0 %v1070
      %1092 = vmatmul.bf16.gmra.mxu0 %v1055
      %v1093 = vpop.f32.mrf.mxu0
      %v1094 = vadd.f32 0.0, %v1093
      %v1095 = vpop.f32.mrf.mxu0
      %v1096 = vadd.f32 0.0, %v1095
      %1097 = vmatmul.bf16.gmra.mxu0 %v1058
      %v1098 = vpop.f32.mrf.mxu0
      %v1099 = vadd.f32 0.0, %v1098
      %v1100 = vpop.f32.mrf.mxu0
      %v1101 = vadd.f32 0.0, %v1100
      %1102 = vmatmul.bf16.gmra.mxu0 %v1061
      %v1103 = vpop.f32.mrf.mxu0
      %v1104 = vadd.f32 0.0, %v1103
      %v1105 = vpop.f32.mrf.mxu0
      %v1106 = vadd.f32 0.0, %v1105
      %1107 = vmatmul.bf16.gmra.mxu0 %v1064
      %v1108 = vpop.f32.mrf.mxu0
      %v1109 = vadd.f32 0.0, %v1108
      %v1110 = vpop.f32.mrf.mxu0
      %v1111 = vadd.f32 0.0, %v1110
      %1112 = vmatmul.bf16.gmra.mxu0 %v1067
      %v1113 = vpop.f32.mrf.mxu0
      %v1114 = vadd.f32 0.0, %v1113
      %v1115 = vpop.f32.mrf.mxu0
      %1116 = vdwg.mxu0
      %v1117 = vmul.f32 %v1094, 0.17677669
      %v1118 = vmul.f32 %v1096, 0.17677669
      %v1119 = vmul.f32 %v1099, 0.17677669
      %v1120 = vmul.f32 %v1101, 0.17677669
      %v1121 = vmul.f32 %v1104, 0.17677669
      %v1122 = vmul.f32 %v1106, 0.17677669
      %v1123 = vmul.f32 %v1109, 0.17677669
      %v1124 = vmul.f32 %v1111, 0.17677669
      %v1125 = vmul.f32 %v1114, 0.17677669
      %v1126 = vsel %vm865, %v1117, -inf
      %1127 = vmax.xlane.f32.xlu0 %v1126
      %v1128 = vpop.xlane.xlu0 %1127
      %v1129 = vsel %vm865, %v1118, -inf
      %1130 = vmax.xlane.f32.xlu0 %v1129
      %v1131 = vpop.xlane.xlu0 %1130
      %v1132 = vsel %vm865, %v1119, -inf
      %1133 = vmax.xlane.f32.xlu0 %v1132
      %v1134 = vpop.xlane.xlu0 %1133
      %v1135 = vsel %vm865, %v1120, -inf
      %1136 = vmax.xlane.f32.xlu0 %v1135
      %v1137 = vpop.xlane.xlu0 %1136
      %v1138 = vsel %vm865, %v1121, -inf
      %1139 = vmax.xlane.f32.xlu0 %v1138
      %v1140 = vpop.xlane.xlu0 %1139
      %v1141 = vsel %vm865, %v1122, -inf
      %1142 = vmax.xlane.f32.xlu0 %v1141
      %v1143 = vpop.xlane.xlu0 %1142
      %v1144 = vsel %vm865, %v1123, -inf
      %1145 = vmax.xlane.f32.xlu0 %v1144
      %v1146 = vpop.xlane.xlu0 %1145
      %v1147 = vsel %vm865, %v1124, -inf
      %1148 = vmax.xlane.f32.xlu0 %v1147
      %v1149 = vpop.xlane.xlu0 %1148
      %v1150 = vsel %vm890, %v1125, -inf
      %1151 = vmax.xlane.f32.xlu0 %v1150
      %v1152 = vpop.xlane.xlu0 %1151
      %v1153 = vsub.f32 %v1117, %v1128
      %v1154 = vsub.f32 %v1118, %v1131
      %v1155 = vsub.f32 %v1119, %v1134
      %v1156 = vsub.f32 %v1120, %v1137
      %v1157 = vsub.f32 %v1121, %v1140
      %v1158 = vsub.f32 %v1122, %v1143
      %v1159 = vsub.f32 %v1123, %v1146
      %v1160 = vsub.f32 %v1124, %v1149
      %v1161 = vsub.f32 %v1125, %v1152
      %v1162 = vmul.f32 %v1153, 1.442695
      %v1163 = vpow.pop %v1162
      %v1164 = vmul.f32 %v1154, 1.442695
      %v1165 = vpow.pop %v1164
      %v1166 = vmul.f32 %v1155, 1.442695
      %v1167 = vpow.pop %v1166
      %v1168 = vmul.f32 %v1156, 1.442695
      %v1169 = vpow.pop %v1168
      %v1170 = vmul.f32 %v1157, 1.442695
      %v1171 = vpow.pop %v1170
      %v1172 = vmul.f32 %v1158, 1.442695
      %v1173 = vpow.pop %v1172
      %v1174 = vmul.f32 %v1159, 1.442695
      %v1175 = vpow.pop %v1174
      %v1176 = vmul.f32 %v1160, 1.442695
      %v1177 = vpow.pop %v1176
      %v1178 = vmul.f32 %v1161, 1.442695
      %v1179 = vpow.pop %v1178
      %v1180 = vsel %vm865, %v1163, 0.0
      %1181 = vadd.xlane.f32.xlu0 %v1180
      %v1182 = vpop.xlane.xlu0 %1181
      %v1183 = vsel %vm865, %v1165, 0.0
      %1184 = vadd.xlane.f32.xlu0 %v1183
      %v1185 = vpop.xlane.xlu0 %1184
      %v1186 = vsel %vm865, %v1167, 0.0
      %1187 = vadd.xlane.f32.xlu0 %v1186
      %v1188 = vpop.xlane.xlu0 %1187
      %v1189 = vsel %vm865, %v1169, 0.0
      %1190 = vadd.xlane.f32.xlu0 %v1189
      %v1191 = vpop.xlane.xlu0 %1190
      %v1192 = vsel %vm865, %v1171, 0.0
      %1193 = vadd.xlane.f32.xlu0 %v1192
      %v1194 = vpop.xlane.xlu0 %1193
      %v1195 = vsel %vm865, %v1173, 0.0
      %1196 = vadd.xlane.f32.xlu0 %v1195
      %v1197 = vpop.xlane.xlu0 %1196
      %v1198 = vsel %vm865, %v1175, 0.0
      %1199 = vadd.xlane.f32.xlu0 %v1198
      %v1200 = vpop.xlane.xlu0 %1199
      %v1201 = vsel %vm865, %v1177, 0.0
      %1202 = vadd.xlane.f32.xlu0 %v1201
      %v1203 = vpop.xlane.xlu0 %1202
      %v1204 = vsel %vm890, %v1179, 0.0
      %1205 = vadd.xlane.f32.xlu0 %v1204
      %v1206 = vpop.xlane.xlu0 %1205
      %v1207 = vrcp.pop %v1182
      %v1208 = vrcp.pop %v1185
      %v1209 = vrcp.pop %v1188
      %v1210 = vrcp.pop %v1191
      %v1211 = vrcp.pop %v1194
      %v1212 = vrcp.pop %v1197
      %v1213 = vrcp.pop %v1200
      %v1214 = vrcp.pop %v1203
      %v1215 = vrcp.pop %v1206
      %v1216 = vmul.f32 %v1163, %v1207
      %v1217 = vmul.f32 %v1165, %v1208
      %v1218 = vmul.f32 %v1167, %v1209
      %v1219 = vmul.f32 %v1169, %v1210
      %v1220 = vmul.f32 %v1171, %v1211
      %v1221 = vmul.f32 %v1173, %v1212
      %v1222 = vmul.f32 %v1175, %v1213
      %v1223 = vmul.f32 %v1177, %v1214
      %v1224 = vmul.f32 %v1179, %v1215
      %v1225 = vpack.c.bf16 %v1217, %v1216
      %v1226 = vpack.c.bf16 %v1219, %v1218
      %v1227 = vpack.c.bf16 %v1221, %v1220
      %v1228 = vpack.c.bf16 %v1223, %v1222
      %v1229 = vpack.c.bf16 %v1224, %v1224
      %1235 = vrot.lane.b32.xlu0 %v787, 96
      %v1236 = vpop.permute.xlu0 %1235
      %1237 = vrot.lane.b32.xlu0 %v788, 96
      %v1238 = vpop.permute.xlu0 %1237
      %1239 = vrot.lane.b32.xlu0 %v789, 96
      %v1240 = vpop.permute.xlu0 %1239
      %1241 = vrot.lane.b32.xlu0 %v790, 96
      %v1242 = vpop.permute.xlu0 %1241
      %1243 = vrot.lane.b32.xlu0 %v791, 96
      %v1244 = vpop.permute.xlu0 %1243
      %v1250 = vsel %vm865, %v1225, 0
      %v1253 = vsel %vm865, %v1226, 0
      %v1256 = vsel %vm865, %v1227, 0
      %v1259 = vsel %vm865, %v1228, 0
      %v1262 = vsel %vm865, %v1229, 0
      %v1265 = vand.u32 %v1244, %v987
      %1267 = vmatpush.bf16.msra.mxu0 0
      %1268 = vmatpush.bf16.msra.mxu0 0
      %1269 = vmatpush.bf16.msra.mxu0 0
      %1270 = vmatpush.bf16.msra.mxu0 %v1265
      %1271 = vmatpush.bf16.msra.mxu0 %v1242
      %1272 = vmatpush.bf16.msra.mxu0 %v1240
      %1273 = vmatpush.bf16.msra.mxu0 %v1238
      %1274 = vmatpush.bf16.msra.mxu0 %v1236
      %1275 = vmatmul.bf16.gmra.mxu0 %v1250
      %v1276 = vpop.f32.mrf.mxu0
      %v1277 = vadd.f32 0.0, %v1276
      %v1278 = vpop.f32.mrf.mxu0
      %v1279 = vadd.f32 0.0, %v1278
      %1280 = vmatmul.bf16.gmra.mxu0 %v1253
      %v1281 = vpop.f32.mrf.mxu0
      %v1282 = vadd.f32 0.0, %v1281
      %v1283 = vpop.f32.mrf.mxu0
      %v1284 = vadd.f32 0.0, %v1283
      %1285 = vmatmul.bf16.gmra.mxu0 %v1256
      %v1286 = vpop.f32.mrf.mxu0
      %v1287 = vadd.f32 0.0, %v1286
      %v1288 = vpop.f32.mrf.mxu0
      %v1289 = vadd.f32 0.0, %v1288
      %1290 = vmatmul.bf16.gmra.mxu0 %v1259
      %v1291 = vpop.f32.mrf.mxu0
      %v1292 = vadd.f32 0.0, %v1291
      %v1293 = vpop.f32.mrf.mxu0
      %v1294 = vadd.f32 0.0, %v1293
      %1295 = vmatmul.bf16.gmra.mxu0 %v1262
      %v1296 = vpop.f32.mrf.mxu0
      %v1297 = vadd.f32 0.0, %v1296
      %v1298 = vpop.f32.mrf.mxu0
      %1299 = vdwg.mxu0
      %1300 = vrot.lane.b32.xlu0 %v777, 64
      %v1301 = vpop.permute.xlu0 %1300
      %1302 = vrot.lane.b32.xlu0 %v778, 64
      %v1303 = vpop.permute.xlu0 %1302
      %1304 = vrot.lane.b32.xlu0 %v779, 64
      %v1305 = vpop.permute.xlu0 %1304
      %1306 = vrot.lane.b32.xlu0 %v780, 64
      %v1307 = vpop.permute.xlu0 %1306
      %1308 = vrot.lane.b32.xlu0 %v781, 64
      %v1309 = vpop.permute.xlu0 %1308
      %1310 = vrot.lane.b32.xlu0 %v782, 64
      %v1311 = vpop.permute.xlu0 %1310
      %1312 = vrot.lane.b32.xlu0 %v783, 64
      %v1313 = vpop.permute.xlu0 %1312
      %1314 = vrot.lane.b32.xlu0 %v784, 64
      %v1315 = vpop.permute.xlu0 %1314
      %1316 = vrot.lane.b32.xlu0 %v785, 64
      %v1317 = vpop.permute.xlu0 %1316
      %1318 = vrot.lane.b32.xlu0 %v786, 64
      %v1319 = vpop.permute.xlu0 %1318
      %v1321 = vsel %vm792, %v1301, 0
      %v1324 = vsel %vm792, %v1303, 0
      %v1327 = vsel %vm792, %v1305, 0
      %v1330 = vsel %vm792, %v1307, 0
      %v1333 = vsel %vm792, %v1309, 0
      %v1336 = vsel %vm792, %v1311, 0
      %v1339 = vsel %vm792, %v1313, 0
      %v1342 = vsel %vm792, %v1315, 0
      %v1345 = vsel %vm792, %v1317, 0
      %v1348 = vsel %vm792, %v1319, 0
      %1350 = vmatpush.bf16.xpose.msra.mxu0 0
      %1351 = vmatpush.bf16.xpose.msra.mxu0 0
      %1352 = vmatpush.bf16.xpose.msra.mxu0 0
      %1353 = vmatpush.bf16.xpose.msra.mxu0 %v1348
      %1354 = vmatpush.bf16.xpose.msra.mxu0 %v1345
      %1355 = vmatpush.bf16.xpose.msra.mxu0 %v1342
      %1356 = vmatpush.bf16.xpose.msra.mxu0 %v1339
      %1357 = vmatpush.bf16.xpose.msra.mxu0 %v1336
      %1358 = vmatmul.bf16.gmra.mxu0 %v1321
      %v1359 = vpop.f32.mrf.mxu0
      %v1360 = vadd.f32 0.0, %v1359
      %v1361 = vpop.f32.mrf.mxu0
      %v1362 = vadd.f32 0.0, %v1361
      %1363 = vmatmul.bf16.gmra.mxu0 %v1324
      %v1364 = vpop.f32.mrf.mxu0
      %v1365 = vadd.f32 0.0, %v1364
      %v1366 = vpop.f32.mrf.mxu0
      %v1367 = vadd.f32 0.0, %v1366
      %1368 = vmatmul.bf16.gmra.mxu0 %v1327
      %v1369 = vpop.f32.mrf.mxu0
      %v1370 = vadd.f32 0.0, %v1369
      %v1371 = vpop.f32.mrf.mxu0
      %v1372 = vadd.f32 0.0, %v1371
      %1373 = vmatmul.bf16.gmra.mxu0 %v1330
      %v1374 = vpop.f32.mrf.mxu0
      %v1375 = vadd.f32 0.0, %v1374
      %v1376 = vpop.f32.mrf.mxu0
      %v1377 = vadd.f32 0.0, %v1376
      %1378 = vmatmul.bf16.gmra.mxu0 %v1333
      %v1379 = vpop.f32.mrf.mxu0
      %v1380 = vadd.f32 0.0, %v1379
      %v1381 = vpop.f32.mrf.mxu0
      %1382 = vdwg.mxu0
      %v1383 = vmul.f32 %v1360, 0.17677669
      %v1384 = vmul.f32 %v1362, 0.17677669
      %v1385 = vmul.f32 %v1365, 0.17677669
      %v1386 = vmul.f32 %v1367, 0.17677669
      %v1387 = vmul.f32 %v1370, 0.17677669
      %v1388 = vmul.f32 %v1372, 0.17677669
      %v1389 = vmul.f32 %v1375, 0.17677669
      %v1390 = vmul.f32 %v1377, 0.17677669
      %v1391 = vmul.f32 %v1380, 0.17677669
      %v1392 = vsel %vm865, %v1383, -inf
      %1393 = vmax.xlane.f32.xlu0 %v1392
      %v1394 = vpop.xlane.xlu0 %1393
      %v1395 = vsel %vm865, %v1384, -inf
      %1396 = vmax.xlane.f32.xlu0 %v1395
      %v1397 = vpop.xlane.xlu0 %1396
      %v1398 = vsel %vm865, %v1385, -inf
      %1399 = vmax.xlane.f32.xlu0 %v1398
      %v1400 = vpop.xlane.xlu0 %1399
      %v1401 = vsel %vm865, %v1386, -inf
      %1402 = vmax.xlane.f32.xlu0 %v1401
      %v1403 = vpop.xlane.xlu0 %1402
      %v1404 = vsel %vm865, %v1387, -inf
      %1405 = vmax.xlane.f32.xlu0 %v1404
      %v1406 = vpop.xlane.xlu0 %1405
      %v1407 = vsel %vm865, %v1388, -inf
      %1408 = vmax.xlane.f32.xlu0 %v1407
      %v1409 = vpop.xlane.xlu0 %1408
      %v1410 = vsel %vm865, %v1389, -inf
      %1411 = vmax.xlane.f32.xlu0 %v1410
      %v1412 = vpop.xlane.xlu0 %1411
      %v1413 = vsel %vm865, %v1390, -inf
      %1414 = vmax.xlane.f32.xlu0 %v1413
      %v1415 = vpop.xlane.xlu0 %1414
      %v1416 = vsel %vm890, %v1391, -inf
      %1417 = vmax.xlane.f32.xlu0 %v1416
      %v1418 = vpop.xlane.xlu0 %1417
      %v1419 = vsub.f32 %v1383, %v1394
      %v1420 = vsub.f32 %v1384, %v1397
      %v1421 = vsub.f32 %v1385, %v1400
      %v1422 = vsub.f32 %v1386, %v1403
      %v1423 = vsub.f32 %v1387, %v1406
      %v1424 = vsub.f32 %v1388, %v1409
      %v1425 = vsub.f32 %v1389, %v1412
      %v1426 = vsub.f32 %v1390, %v1415
      %v1427 = vsub.f32 %v1391, %v1418
      %v1428 = vmul.f32 %v1419, 1.442695
      %v1429 = vpow.pop %v1428
      %v1430 = vmul.f32 %v1420, 1.442695
      %v1431 = vpow.pop %v1430
      %v1432 = vmul.f32 %v1421, 1.442695
      %v1433 = vpow.pop %v1432
      %v1434 = vmul.f32 %v1422, 1.442695
      %v1435 = vpow.pop %v1434
      %v1436 = vmul.f32 %v1423, 1.442695
      %v1437 = vpow.pop %v1436
      %v1438 = vmul.f32 %v1424, 1.442695
      %v1439 = vpow.pop %v1438
      %v1440 = vmul.f32 %v1425, 1.442695
      %v1441 = vpow.pop %v1440
      %v1442 = vmul.f32 %v1426, 1.442695
      %v1443 = vpow.pop %v1442
      %v1444 = vmul.f32 %v1427, 1.442695
      %v1445 = vpow.pop %v1444
      %v1446 = vsel %vm865, %v1429, 0.0
      %1447 = vadd.xlane.f32.xlu0 %v1446
      %v1448 = vpop.xlane.xlu0 %1447
      %v1449 = vsel %vm865, %v1431, 0.0
      %1450 = vadd.xlane.f32.xlu0 %v1449
      %v1451 = vpop.xlane.xlu0 %1450
      %v1452 = vsel %vm865, %v1433, 0.0
      %1453 = vadd.xlane.f32.xlu0 %v1452
      %v1454 = vpop.xlane.xlu0 %1453
      %v1455 = vsel %vm865, %v1435, 0.0
      %1456 = vadd.xlane.f32.xlu0 %v1455
      %v1457 = vpop.xlane.xlu0 %1456
      %v1458 = vsel %vm865, %v1437, 0.0
      %1459 = vadd.xlane.f32.xlu0 %v1458
      %v1460 = vpop.xlane.xlu0 %1459
      %v1461 = vsel %vm865, %v1439, 0.0
      %1462 = vadd.xlane.f32.xlu0 %v1461
      %v1463 = vpop.xlane.xlu0 %1462
      %v1464 = vsel %vm865, %v1441, 0.0
      %1465 = vadd.xlane.f32.xlu0 %v1464
      %v1466 = vpop.xlane.xlu0 %1465
      %v1467 = vsel %vm865, %v1443, 0.0
      %1468 = vadd.xlane.f32.xlu0 %v1467
      %v1469 = vpop.xlane.xlu0 %1468
      %v1470 = vsel %vm890, %v1445, 0.0
      %1471 = vadd.xlane.f32.xlu0 %v1470
      %v1472 = vpop.xlane.xlu0 %1471
      %v1473 = vrcp.pop %v1448
      %v1474 = vrcp.pop %v1451
      %v1475 = vrcp.pop %v1454
      %v1476 = vrcp.pop %v1457
      %v1477 = vrcp.pop %v1460
      %v1478 = vrcp.pop %v1463
      %v1479 = vrcp.pop %v1466
      %v1480 = vrcp.pop %v1469
      %v1481 = vrcp.pop %v1472
      %v1482 = vmul.f32 %v1429, %v1473
      %v1483 = vmul.f32 %v1431, %v1474
      %v1484 = vmul.f32 %v1433, %v1475
      %v1485 = vmul.f32 %v1435, %v1476
      %v1486 = vmul.f32 %v1437, %v1477
      %v1487 = vmul.f32 %v1439, %v1478
      %v1488 = vmul.f32 %v1441, %v1479
      %v1489 = vmul.f32 %v1443, %v1480
      %v1490 = vmul.f32 %v1445, %v1481
      %v1491 = vpack.c.bf16 %v1483, %v1482
      %v1492 = vpack.c.bf16 %v1485, %v1484
      %v1493 = vpack.c.bf16 %v1487, %v1486
      %v1494 = vpack.c.bf16 %v1489, %v1488
      %v1495 = vpack.c.bf16 %v1490, %v1490
      %1496 = vrot.lane.b32.xlu0 %v787, 64
      %v1497 = vpop.permute.xlu0 %1496
      %1498 = vrot.lane.b32.xlu0 %v788, 64
      %v1499 = vpop.permute.xlu0 %1498
      %1500 = vrot.lane.b32.xlu0 %v789, 64
      %v1501 = vpop.permute.xlu0 %1500
      %1502 = vrot.lane.b32.xlu0 %v790, 64
      %v1503 = vpop.permute.xlu0 %1502
      %1504 = vrot.lane.b32.xlu0 %v791, 64
      %v1505 = vpop.permute.xlu0 %1504
      %v1511 = vsel %vm865, %v1491, 0
      %v1514 = vsel %vm865, %v1492, 0
      %v1517 = vsel %vm865, %v1493, 0
      %v1520 = vsel %vm865, %v1494, 0
      %v1523 = vsel %vm865, %v1495, 0
      %v1526 = vand.u32 %v1505, %v987
      %1528 = vmatpush.bf16.msra.mxu0 0
      %1529 = vmatpush.bf16.msra.mxu0 0
      %1530 = vmatpush.bf16.msra.mxu0 0
      %1531 = vmatpush.bf16.msra.mxu0 %v1526
      %1532 = vmatpush.bf16.msra.mxu0 %v1503
      %1533 = vmatpush.bf16.msra.mxu0 %v1501
      %1534 = vmatpush.bf16.msra.mxu0 %v1499
      %1535 = vmatpush.bf16.msra.mxu0 %v1497
      %1536 = vmatmul.bf16.gmra.mxu0 %v1511
      %v1537 = vpop.f32.mrf.mxu0
      %v1538 = vadd.f32 0.0, %v1537
      %v1539 = vpop.f32.mrf.mxu0
      %v1540 = vadd.f32 0.0, %v1539
      %1541 = vmatmul.bf16.gmra.mxu0 %v1514
      %v1542 = vpop.f32.mrf.mxu0
      %v1543 = vadd.f32 0.0, %v1542
      %v1544 = vpop.f32.mrf.mxu0
      %v1545 = vadd.f32 0.0, %v1544
      %1546 = vmatmul.bf16.gmra.mxu0 %v1517
      %v1547 = vpop.f32.mrf.mxu0
      %v1548 = vadd.f32 0.0, %v1547
      %v1549 = vpop.f32.mrf.mxu0
      %v1550 = vadd.f32 0.0, %v1549
      %1551 = vmatmul.bf16.gmra.mxu0 %v1520
      %v1552 = vpop.f32.mrf.mxu0
      %v1553 = vadd.f32 0.0, %v1552
      %v1554 = vpop.f32.mrf.mxu0
      %v1555 = vadd.f32 0.0, %v1554
      %1556 = vmatmul.bf16.gmra.mxu0 %v1523
      %v1557 = vpop.f32.mrf.mxu0
      %v1558 = vadd.f32 0.0, %v1557
      %v1559 = vpop.f32.mrf.mxu0
      %1560 = vdwg.mxu0
      %1561 = vrot.lane.b32.xlu0 %v777, 32
      %v1562 = vpop.permute.xlu0 %1561
      %1563 = vrot.lane.b32.xlu0 %v778, 32
      %v1564 = vpop.permute.xlu0 %1563
      %1565 = vrot.lane.b32.xlu0 %v779, 32
      %v1566 = vpop.permute.xlu0 %1565
      %1567 = vrot.lane.b32.xlu0 %v780, 32
      %v1568 = vpop.permute.xlu0 %1567
      %1569 = vrot.lane.b32.xlu0 %v781, 32
      %v1570 = vpop.permute.xlu0 %1569
      %1571 = vrot.lane.b32.xlu0 %v782, 32
      %v1572 = vpop.permute.xlu0 %1571
      %1573 = vrot.lane.b32.xlu0 %v783, 32
      %v1574 = vpop.permute.xlu0 %1573
      %1575 = vrot.lane.b32.xlu0 %v784, 32
      %v1576 = vpop.permute.xlu0 %1575
      %1577 = vrot.lane.b32.xlu0 %v785, 32
      %v1578 = vpop.permute.xlu0 %1577
      %1579 = vrot.lane.b32.xlu0 %v786, 32
      %v1580 = vpop.permute.xlu0 %1579
      %v1582 = vsel %vm792, %v1562, 0
      %v1585 = vsel %vm792, %v1564, 0
      %v1588 = vsel %vm792, %v1566, 0
      %v1591 = vsel %vm792, %v1568, 0
      %v1594 = vsel %vm792, %v1570, 0
      %v1597 = vsel %vm792, %v1572, 0
      %v1600 = vsel %vm792, %v1574, 0
      %v1603 = vsel %vm792, %v1576, 0
      %v1606 = vsel %vm792, %v1578, 0
      %v1609 = vsel %vm792, %v1580, 0
      %1611 = vmatpush.bf16.xpose.msra.mxu0 0
      %1612 = vmatpush.bf16.xpose.msra.mxu0 0
      %1613 = vmatpush.bf16.xpose.msra.mxu0 0
      %1614 = vmatpush.bf16.xpose.msra.mxu0 %v1609
      %1615 = vmatpush.bf16.xpose.msra.mxu0 %v1606
      %1616 = vmatpush.bf16.xpose.msra.mxu0 %v1603
      %1617 = vmatpush.bf16.xpose.msra.mxu0 %v1600
      %1618 = vmatpush.bf16.xpose.msra.mxu0 %v1597
      %1619 = vmatmul.bf16.gmra.mxu0 %v1582
      %v1620 = vpop.f32.mrf.mxu0
      %v1621 = vadd.f32 0.0, %v1620
      %v1622 = vpop.f32.mrf.mxu0
      %v1623 = vadd.f32 0.0, %v1622
      %1624 = vmatmul.bf16.gmra.mxu0 %v1585
      %v1625 = vpop.f32.mrf.mxu0
      %v1626 = vadd.f32 0.0, %v1625
      %v1627 = vpop.f32.mrf.mxu0
      %v1628 = vadd.f32 0.0, %v1627
      %1629 = vmatmul.bf16.gmra.mxu0 %v1588
      %v1630 = vpop.f32.mrf.mxu0
      %v1631 = vadd.f32 0.0, %v1630
      %v1632 = vpop.f32.mrf.mxu0
      %v1633 = vadd.f32 0.0, %v1632
      %1634 = vmatmul.bf16.gmra.mxu0 %v1591
      %v1635 = vpop.f32.mrf.mxu0
      %v1636 = vadd.f32 0.0, %v1635
      %v1637 = vpop.f32.mrf.mxu0
      %v1638 = vadd.f32 0.0, %v1637
      %1639 = vmatmul.bf16.gmra.mxu0 %v1594
      %v1640 = vpop.f32.mrf.mxu0
      %v1641 = vadd.f32 0.0, %v1640
      %v1642 = vpop.f32.mrf.mxu0
      %1643 = vdwg.mxu0
      %v1644 = vmul.f32 %v1621, 0.17677669
      %v1645 = vmul.f32 %v1623, 0.17677669
      %v1646 = vmul.f32 %v1626, 0.17677669
      %v1647 = vmul.f32 %v1628, 0.17677669
      %v1648 = vmul.f32 %v1631, 0.17677669
      %v1649 = vmul.f32 %v1633, 0.17677669
      %v1650 = vmul.f32 %v1636, 0.17677669
      %v1651 = vmul.f32 %v1638, 0.17677669
      %v1652 = vmul.f32 %v1641, 0.17677669
      %v1653 = vsel %vm865, %v1644, -inf
      %1654 = vmax.xlane.f32.xlu0 %v1653
      %v1655 = vpop.xlane.xlu0 %1654
      %v1656 = vsel %vm865, %v1645, -inf
      %1657 = vmax.xlane.f32.xlu0 %v1656
      %v1658 = vpop.xlane.xlu0 %1657
      %v1659 = vsel %vm865, %v1646, -inf
      %1660 = vmax.xlane.f32.xlu0 %v1659
      %v1661 = vpop.xlane.xlu0 %1660
      %v1662 = vsel %vm865, %v1647, -inf
      %1663 = vmax.xlane.f32.xlu0 %v1662
      %v1664 = vpop.xlane.xlu0 %1663
      %v1665 = vsel %vm865, %v1648, -inf
      %1666 = vmax.xlane.f32.xlu0 %v1665
      %v1667 = vpop.xlane.xlu0 %1666
      %v1668 = vsel %vm865, %v1649, -inf
      %1669 = vmax.xlane.f32.xlu0 %v1668
      %v1670 = vpop.xlane.xlu0 %1669
      %v1671 = vsel %vm865, %v1650, -inf
      %1672 = vmax.xlane.f32.xlu0 %v1671
      %v1673 = vpop.xlane.xlu0 %1672
      %v1674 = vsel %vm865, %v1651, -inf
      %1675 = vmax.xlane.f32.xlu0 %v1674
      %v1676 = vpop.xlane.xlu0 %1675
      %v1677 = vsel %vm890, %v1652, -inf
      %1678 = vmax.xlane.f32.xlu0 %v1677
      %v1679 = vpop.xlane.xlu0 %1678
      %v1680 = vsub.f32 %v1644, %v1655
      %v1681 = vsub.f32 %v1645, %v1658
      %v1682 = vsub.f32 %v1646, %v1661
      %v1683 = vsub.f32 %v1647, %v1664
      %v1684 = vsub.f32 %v1648, %v1667
      %v1685 = vsub.f32 %v1649, %v1670
      %v1686 = vsub.f32 %v1650, %v1673
      %v1687 = vsub.f32 %v1651, %v1676
      %v1688 = vsub.f32 %v1652, %v1679
      %v1689 = vmul.f32 %v1680, 1.442695
      %v1690 = vpow.pop %v1689
      %v1691 = vmul.f32 %v1681, 1.442695
      %v1692 = vpow.pop %v1691
      %v1693 = vmul.f32 %v1682, 1.442695
      %v1694 = vpow.pop %v1693
      %v1695 = vmul.f32 %v1683, 1.442695
      %v1696 = vpow.pop %v1695
      %v1697 = vmul.f32 %v1684, 1.442695
      %v1698 = vpow.pop %v1697
      %v1699 = vmul.f32 %v1685, 1.442695
      %v1700 = vpow.pop %v1699
      %v1701 = vmul.f32 %v1686, 1.442695
      %v1702 = vpow.pop %v1701
      %v1703 = vmul.f32 %v1687, 1.442695
      %v1704 = vpow.pop %v1703
      %v1705 = vmul.f32 %v1688, 1.442695
      %v1706 = vpow.pop %v1705
      %v1707 = vsel %vm865, %v1690, 0.0
      %1708 = vadd.xlane.f32.xlu0 %v1707
      %v1709 = vpop.xlane.xlu0 %1708
      %v1710 = vsel %vm865, %v1692, 0.0
      %1711 = vadd.xlane.f32.xlu0 %v1710
      %v1712 = vpop.xlane.xlu0 %1711
      %v1713 = vsel %vm865, %v1694, 0.0
      %1714 = vadd.xlane.f32.xlu0 %v1713
      %v1715 = vpop.xlane.xlu0 %1714
      %v1716 = vsel %vm865, %v1696, 0.0
      %1717 = vadd.xlane.f32.xlu0 %v1716
      %v1718 = vpop.xlane.xlu0 %1717
      %v1719 = vsel %vm865, %v1698, 0.0
      %1720 = vadd.xlane.f32.xlu0 %v1719
      %v1721 = vpop.xlane.xlu0 %1720
      %v1722 = vsel %vm865, %v1700, 0.0
      %1723 = vadd.xlane.f32.xlu0 %v1722
      %v1724 = vpop.xlane.xlu0 %1723
      %v1725 = vsel %vm865, %v1702, 0.0
      %1726 = vadd.xlane.f32.xlu0 %v1725
      %v1727 = vpop.xlane.xlu0 %1726
      %v1728 = vsel %vm865, %v1704, 0.0
      %1729 = vadd.xlane.f32.xlu0 %v1728
      %v1730 = vpop.xlane.xlu0 %1729
      %v1731 = vsel %vm890, %v1706, 0.0
      %1732 = vadd.xlane.f32.xlu0 %v1731
      %v1733 = vpop.xlane.xlu0 %1732
      %v1734 = vrcp.pop %v1709
      %v1735 = vrcp.pop %v1712
      %v1736 = vrcp.pop %v1715
      %v1737 = vrcp.pop %v1718
      %v1738 = vrcp.pop %v1721
      %v1739 = vrcp.pop %v1724
      %v1740 = vrcp.pop %v1727
      %v1741 = vrcp.pop %v1730
      %v1742 = vrcp.pop %v1733
      %v1743 = vmul.f32 %v1690, %v1734
      %v1744 = vmul.f32 %v1692, %v1735
      %v1745 = vmul.f32 %v1694, %v1736
      %v1746 = vmul.f32 %v1696, %v1737
      %v1747 = vmul.f32 %v1698, %v1738
      %v1748 = vmul.f32 %v1700, %v1739
      %v1749 = vmul.f32 %v1702, %v1740
      %v1750 = vmul.f32 %v1704, %v1741
      %v1751 = vmul.f32 %v1706, %v1742
      %v1752 = vpack.c.bf16 %v1744, %v1743
      %v1753 = vpack.c.bf16 %v1746, %v1745
      %v1754 = vpack.c.bf16 %v1748, %v1747
      %v1755 = vpack.c.bf16 %v1750, %v1749
      %v1756 = vpack.c.bf16 %v1751, %v1751
      %1757 = vrot.lane.b32.xlu0 %v787, 32
      %v1758 = vpop.permute.xlu0 %1757
      %1759 = vrot.lane.b32.xlu0 %v788, 32
      %v1760 = vpop.permute.xlu0 %1759
      %1761 = vrot.lane.b32.xlu0 %v789, 32
      %v1762 = vpop.permute.xlu0 %1761
      %1763 = vrot.lane.b32.xlu0 %v790, 32
      %v1764 = vpop.permute.xlu0 %1763
      %1765 = vrot.lane.b32.xlu0 %v791, 32
      %v1766 = vpop.permute.xlu0 %1765
      %v1772 = vsel %vm865, %v1752, 0
      %v1775 = vsel %vm865, %v1753, 0
      %v1778 = vsel %vm865, %v1754, 0
      %v1781 = vsel %vm865, %v1755, 0
      %v1784 = vsel %vm865, %v1756, 0
      %v1787 = vand.u32 %v1766, %v987
      %1789 = vmatpush.bf16.msra.mxu0 0
      %1790 = vmatpush.bf16.msra.mxu0 0
      %1791 = vmatpush.bf16.msra.mxu0 0
      %1792 = vmatpush.bf16.msra.mxu0 %v1787
      %1793 = vmatpush.bf16.msra.mxu0 %v1764
      %1794 = vmatpush.bf16.msra.mxu0 %v1762
      %1795 = vmatpush.bf16.msra.mxu0 %v1760
      %1796 = vmatpush.bf16.msra.mxu0 %v1758
      %1797 = vmatmul.bf16.gmra.mxu0 %v1772
      %v1798 = vpop.f32.mrf.mxu0
      %v1799 = vadd.f32 0.0, %v1798
      %v1800 = vpop.f32.mrf.mxu0
      %v1801 = vadd.f32 0.0, %v1800
      %1802 = vmatmul.bf16.gmra.mxu0 %v1775
      %v1803 = vpop.f32.mrf.mxu0
      %v1804 = vadd.f32 0.0, %v1803
      %v1805 = vpop.f32.mrf.mxu0
      %v1806 = vadd.f32 0.0, %v1805
      %1807 = vmatmul.bf16.gmra.mxu0 %v1778
      %v1808 = vpop.f32.mrf.mxu0
      %v1809 = vadd.f32 0.0, %v1808
      %v1810 = vpop.f32.mrf.mxu0
      %v1811 = vadd.f32 0.0, %v1810
      %1812 = vmatmul.bf16.gmra.mxu0 %v1781
      %v1813 = vpop.f32.mrf.mxu0
      %v1814 = vadd.f32 0.0, %v1813
      %v1815 = vpop.f32.mrf.mxu0
      %v1816 = vadd.f32 0.0, %v1815
      %1817 = vmatmul.bf16.gmra.mxu0 %v1784
      %v1818 = vpop.f32.mrf.mxu0
      %v1819 = vadd.f32 0.0, %v1818
      %v1820 = vpop.f32.mrf.mxu0
      %1821 = vdwg.mxu0
      %1831 = vrot.lane.b32.xlu0 %v1277, 32
      %v1832 = vpop.permute.xlu0 %1831
      %1833 = vrot.lane.b32.xlu0 %v1279, 32
      %v1834 = vpop.permute.xlu0 %1833
      %1835 = vrot.lane.b32.xlu0 %v1282, 32
      %v1836 = vpop.permute.xlu0 %1835
      %1837 = vrot.lane.b32.xlu0 %v1284, 32
      %v1838 = vpop.permute.xlu0 %1837
      %1839 = vrot.lane.b32.xlu0 %v1287, 32
      %v1840 = vpop.permute.xlu0 %1839
      %1841 = vrot.lane.b32.xlu0 %v1289, 32
      %v1842 = vpop.permute.xlu0 %1841
      %1843 = vrot.lane.b32.xlu0 %v1292, 32
      %v1844 = vpop.permute.xlu0 %1843
      %1845 = vrot.lane.b32.xlu0 %v1294, 32
      %v1846 = vpop.permute.xlu0 %1845
      %1847 = vrot.lane.b32.xlu0 %v1297, 32
      %v1848 = vpop.permute.xlu0 %1847
      %1867 = vrot.lane.b32.xlu0 %v1538, 64
      %v1868 = vpop.permute.xlu0 %1867
      %1869 = vrot.lane.b32.xlu0 %v1540, 64
      %v1870 = vpop.permute.xlu0 %1869
      %1871 = vrot.lane.b32.xlu0 %v1543, 64
      %v1872 = vpop.permute.xlu0 %1871
      %1873 = vrot.lane.b32.xlu0 %v1545, 64
      %v1874 = vpop.permute.xlu0 %1873
      %1875 = vrot.lane.b32.xlu0 %v1548, 64
      %v1876 = vpop.permute.xlu0 %1875
      %1877 = vrot.lane.b32.xlu0 %v1550, 64
      %v1878 = vpop.permute.xlu0 %1877
      %1879 = vrot.lane.b32.xlu0 %v1553, 64
      %v1880 = vpop.permute.xlu0 %1879
      %1881 = vrot.lane.b32.xlu0 %v1555, 64
      %v1882 = vpop.permute.xlu0 %1881
      %1883 = vrot.lane.b32.xlu0 %v1558, 64
      %v1884 = vpop.permute.xlu0 %1883
      %1903 = vrot.lane.b32.xlu0 %v1799, 96
      %v1904 = vpop.permute.xlu0 %1903
      %1905 = vrot.lane.b32.xlu0 %v1801, 96
      %v1906 = vpop.permute.xlu0 %1905
      %1907 = vrot.lane.b32.xlu0 %v1804, 96
      %v1908 = vpop.permute.xlu0 %1907
      %1909 = vrot.lane.b32.xlu0 %v1806, 96
      %v1910 = vpop.permute.xlu0 %1909
      %1911 = vrot.lane.b32.xlu0 %v1809, 96
      %v1912 = vpop.permute.xlu0 %1911
      %1913 = vrot.lane.b32.xlu0 %v1811, 96
      %v1914 = vpop.permute.xlu0 %1913
      %1915 = vrot.lane.b32.xlu0 %v1814, 96
      %v1916 = vpop.permute.xlu0 %1915
      %1917 = vrot.lane.b32.xlu0 %v1816, 96
      %v1918 = vpop.permute.xlu0 %1917
      %1919 = vrot.lane.b32.xlu0 %v1819, 96
      %v1920 = vpop.permute.xlu0 %1919
      %v1930 = vsel %vm792, %v1001, %v1832
      %v1931 = vsel %vm792, %v1003, %v1834
      %v1932 = vsel %vm792, %v1006, %v1836
      %v1933 = vsel %vm792, %v1008, %v1838
      %v1934 = vsel %vm792, %v1011, %v1840
      %v1935 = vsel %vm792, %v1013, %v1842
      %v1936 = vsel %vm792, %v1016, %v1844
      %v1937 = vsel %vm792, %v1018, %v1846
      %v1938 = vsel %vm792, %v1021, %v1848
      %vm1939 = vcmask 523264
      %v1940 = vsel %vm1939, %v1930, %v1868
      %v1941 = vsel %vm1939, %v1931, %v1870
      %v1942 = vsel %vm1939, %v1932, %v1872
      %v1943 = vsel %vm1939, %v1933, %v1874
      %v1944 = vsel %vm1939, %v1934, %v1876
      %v1945 = vsel %vm1939, %v1935, %v1878
      %v1946 = vsel %vm1939, %v1936, %v1880
      %v1947 = vsel %vm1939, %v1937, %v1882
      %v1948 = vsel %vm1939, %v1938, %v1884
      %vm1949 = vcmask 785408
      %v1950 = vsel %vm1949, %v1940, %v1904
      %v1951 = vsel %vm1949, %v1941, %v1906
      %v1952 = vsel %vm1949, %v1942, %v1908
      %v1953 = vsel %vm1949, %v1943, %v1910
      %v1954 = vsel %vm1949, %v1944, %v1912
      %v1955 = vsel %vm1949, %v1945, %v1914
      %v1956 = vsel %vm1949, %v1946, %v1916
      %v1957 = vsel %vm1949, %v1947, %v1918
      %v1958 = vsel %vm1949, %v1948, %v1920
      %v1959 = vpack.c.bf16 %v1951, %v1950
      %v1960 = vpack.c.bf16 %v1953, %v1952
      %v1961 = vpack.c.bf16 %v1955, %v1954
      %v1962 = vpack.c.bf16 %v1957, %v1956
      %v1963 = vpack.c.bf16 %v1958, %v1958
      %v1964 = vld [vmem:[%s5] sm:$0xf]
      %v1965 = vld [vmem:[%s5 + $0x4] sm:$0xf]
      %v1966 = vld [vmem:[%s5 + $0x8] sm:$0xf]
      %v1967 = vld [vmem:[%s5 + $0xc] sm:$0xf]
      %v1968 = vld [vmem:[%s5 + $0x10] sm:$0xf]
      %v1969 = vld [vmem:[%s5 + $0x14] sm:$0xf]
      %v1970 = vld [vmem:[%s5 + $0x18] sm:$0xf]
      %v1971 = vld [vmem:[%s5 + $0x1c] sm:$0xf]
      %v1972 = vld [vmem:[%s5 + $0x20] sm:$0xf]
      %v1973 = vld [vmem:[%s5 + $0x24] sm:$0xf]
      %v1974 = vld [vmem:[%s5 + $0x28] sm:$0xf]
      %v1975 = vld [vmem:[%s5 + $0x2c] sm:$0xf]
      %v1976 = vld [vmem:[%s5 + $0x30] sm:$0xf]
      %v1977 = vld [vmem:[%s5 + $0x34] sm:$0xf]
      %v1978 = vld [vmem:[%s5 + $0x38] sm:$0xf]
      %v1979 = vld [vmem:[%s5 + $0x3c] sm:$0xf]
      %v1980 = vld [vmem:[%s6] sm:$0x1]
      %v1982 = vperm.slane %v1980, 0
      %v2000 = vunpack.c.l.b16 %v1964
      %v2001 = vunpack.c.l.b16 %v1965
      %v2002 = vunpack.c.l.b16 %v1966
      %v2003 = vunpack.c.l.b16 %v1967
      %v2004 = vunpack.c.l.b16 %v1968
      %v2005 = vunpack.c.l.b16 %v1969
      %v2006 = vunpack.c.l.b16 %v1970
      %v2007 = vunpack.c.l.b16 %v1971
      %v2008 = vunpack.c.l.b16 %v1972
      %v2009 = vunpack.c.l.b16 %v1973
      %v2010 = vunpack.c.l.b16 %v1974
      %v2011 = vunpack.c.l.b16 %v1975
      %v2012 = vunpack.c.l.b16 %v1976
      %v2013 = vunpack.c.l.b16 %v1977
      %v2014 = vunpack.c.l.b16 %v1978
      %v2015 = vunpack.c.l.b16 %v1979
      %v2016 = vpack.c.b16 %v2001, %v2000
      %v2017 = vpack.c.b16 %v2003, %v2002
      %v2018 = vpack.c.b16 %v2005, %v2004
      %v2019 = vpack.c.b16 %v2007, %v2006
      %v2020 = vpack.c.b16 %v2009, %v2008
      %v2021 = vpack.c.b16 %v2011, %v2010
      %v2022 = vpack.c.b16 %v2013, %v2012
      %v2023 = vpack.c.b16 %v2015, %v2014
      %2032 = vmatpush.bf16.msra.mxu0 %v2023
      %2033 = vmatpush.bf16.msra.mxu0 %v2022
      %2034 = vmatpush.bf16.msra.mxu0 %v2021
      %2035 = vmatpush.bf16.msra.mxu0 %v2020
      %2036 = vmatpush.bf16.msra.mxu0 %v2019
      %2037 = vmatpush.bf16.msra.mxu0 %v2018
      %2038 = vmatpush.bf16.msra.mxu0 %v2017
      %2039 = vmatpush.bf16.msra.mxu0 %v2016
      %2040 = vmatmul.bf16.gmra.mxu0 %v1959
      %v2041 = vpop.f32.mrf.mxu0
      %v2042 = vadd.f32 %v1982, %v2041
      %v2043 = vpop.f32.mrf.mxu0
      %v2044 = vadd.f32 %v1982, %v2043
      %2045 = vmatmul.bf16.gmra.mxu0 %v1960
      %v2046 = vpop.f32.mrf.mxu0
      %v2047 = vadd.f32 %v1982, %v2046
      %v2048 = vpop.f32.mrf.mxu0
      %v2049 = vadd.f32 %v1982, %v2048
      %2050 = vmatmul.bf16.gmra.mxu0 %v1961
      %v2051 = vpop.f32.mrf.mxu0
      %v2052 = vadd.f32 %v1982, %v2051
      %v2053 = vpop.f32.mrf.mxu0
      %v2054 = vadd.f32 %v1982, %v2053
      %2055 = vmatmul.bf16.gmra.mxu0 %v1962
      %v2056 = vpop.f32.mrf.mxu0
      %v2057 = vadd.f32 %v1982, %v2056
      %v2058 = vpop.f32.mrf.mxu0
      %v2059 = vadd.f32 %v1982, %v2058
      %2060 = vmatmul.bf16.gmra.mxu0 %v1963
      %v2061 = vpop.f32.mrf.mxu0
      %v2062 = vadd.f32 %v1982, %v2061
      %v2063 = vpop.f32.mrf.mxu0
      %2064 = vdwg.mxu0
      %v2065 = vadd.f32 %v2042, %v280
      %v2066 = vadd.f32 %v2044, %v281
      %v2067 = vadd.f32 %v2047, %v282
      %v2068 = vadd.f32 %v2049, %v283
      %v2069 = vadd.f32 %v2052, %v284
      %v2070 = vadd.f32 %v2054, %v285
      %v2071 = vadd.f32 %v2057, %v286
      %v2072 = vadd.f32 %v2059, %v287
      %v2073 = vadd.f32 %v2062, %v288
      %2074 = vst [vmem:[%s278] sm:$0xff] %v2065
      %2075 = vst [vmem:[%s278 + $0x8] sm:$0xff] %v2066
      %2076 = vst [vmem:[%s278 + $0x10] sm:$0xff] %v2067
      %2077 = vst [vmem:[%s278 + $0x18] sm:$0xff] %v2068
      %2078 = vst [vmem:[%s278 + $0x20] sm:$0xff] %v2069
      %2079 = vst [vmem:[%s278 + $0x28] sm:$0xff] %v2070
      %2080 = vst [vmem:[%s278 + $0x30] sm:$0xff] %v2071
      %2081 = vst [vmem:[%s278 + $0x38] sm:$0xff] %v2072
      %2082 = vst [vmem:[%s278 + $0x40] sm:$0x1] %v2073
      %p2083 = scmp.lt.s32.totalorder %s18, 1
      %s2084 = scalar_select %p2083, %s18, 1
      %s2085 = smul.addr %s2084, 9
      %s2086 = smul.addr %s2085, 8
      %s2087 = scalar_lea.vmem %s7, %s2086
      // Predicated region
      $region49: #{xvit_forward.7} parent=47 // pred_check
        %p2088 = pneg %p188
      $region50: #{xvit_forward.7} parent=47 // pred_check_branch
        %2090 = sbr.rel (%p2088) target = $region52
      $region51: #{xvit_forward.7} parent=47 // pred_region
        _
      $region52: #{xvit_forward.7} parent=47 // pred_fallthru
        _
    $region48: #{xvit_forward.7} parent=5 // pred_fallthru
      _
    %p2091 = scmp.le.s32.totalorder 2, %s13
    // Predicated region
    $region53: #{xvit_forward.7} parent=5 // pred_check
      %p2092 = pneg %p2091
    $region54: #{xvit_forward.7} parent=5 // pred_check_branch
      %2094 = sbr.rel (%p2092) target = $region56
    $region55: #{xvit_forward.7} parent=5 // pred_region
      %s2095 = ssub.s32 %s13, 2
      // Predicated region
      $region57: #{xvit_forward.7} parent=55 // pred_check
        %p2096 = pneg %p194
      $region58: #{xvit_forward.7} parent=55 // pred_check_branch
        %2098 = sbr.rel (%p2096) target = $region60
      $region59: #{xvit_forward.7} parent=55 // pred_region
        %p2099 = scmp.lt.s32.totalorder %s19, 1
        %s2100 = scalar_select %p2099, %s19, 1
        %s2101 = smul.addr %s2100, 9
        %s2102 = smul.addr %s2101, 8
        %s2103 = scalar_lea.vmem %s7, %s2102
      $region60: #{xvit_forward.7} parent=55 // pred_fallthru
        _
    $region56: #{xvit_forward.7} parent=5 // pred_fallthru
      _
  $region6: #{xvit_forward.7} parent=0 // loop_footer
    %s17 = sadd.s32 1, %s13
  $region7: #{xvit_forward.7} parent=0 // loop_footer_branch
    %12 = sbr.rel target = $region3
  $region8: #{xvit_forward.7} parent=0 // loop_exit
    _

// kernel: xvit_forward.8
$region0: #{xvit_forward.8}
  #allocation0 [shape = 'u32[]', space=smem, size = 0x4, offset = 0x4, fixed_abs, tag = 'smem constant byte address 0x4 - core index']
  #allocation1 [shape = 'u32[72,128]{1,0:T(1,128)}', space=vmem, size = 0x9000, scoped, tag = 'internal scratch']
  %s0 = inlined_call_operand.vmem [shape: f32[2,65,128], index: 0, kind: input, shape index: {}]
  %s1 = inlined_call_operand.vmem [shape: f32[1,128], index: 1, kind: input, shape index: {}]
  %s2 = inlined_call_operand.vmem [shape: f32[1,128], index: 2, kind: input, shape index: {}]
  %s3 = inlined_call_operand.vmem [shape: bf16[128,512], index: 3, kind: input, shape index: {}]
  %s4 = inlined_call_operand.vmem [shape: f32[1,512], index: 4, kind: input, shape index: {}]
  %s5 = inlined_call_operand.vmem [shape: bf16[512,128], index: 5, kind: input, shape index: {}]
  %s6 = inlined_call_operand.vmem [shape: f32[1,128], index: 6, kind: input, shape index: {}]
  %s7 = inlined_call_operand.vmem [shape: f32[2,65,128], index: 7, kind: output, shape index: {}]
  %s8 = sld [smem:[#allocation0]]
  $region61: #{xvit_forward.8} parent=0
    _
  %s10 = ssub.s32 1, %s8
  %s11 = scalar_select 0, %s10, %s8
  loop: start=0, step=1, limit=4
  $region2: #{xvit_forward.8} parent=0 // loop_pre_header
    _
  $region3: #{xvit_forward.8} parent=0 // loop_header
    %s13 = sphi 0, %s17
    %p14 = scmp.ge.s32.totalorder %s13, 4
    %s23 = sphi 0, %s25
    %s26 = sphi 0, %s23
    %s27 = sphi 0, %s26
    %s43 = sphi 0, %s27
    %s47 = sphi 0, %s47
    %s49 = sphi 0, %s47
    %s50 = sphi 0, %s49
    %s64 = sphi 0, %s50
    %s68 = sphi 0, %s68
    %s70 = sphi 0, %s68
    %s71 = sphi 0, %s70
    %s85 = sphi 0, %s71
    %s89 = sphi 0, %s89
    %s91 = sphi 0, %s89
    %s92 = sphi 0, %s91
    %s106 = sphi 0, %s92
    %s110 = sphi 0, %s110
    %s112 = sphi 0, %s110
    %s113 = sphi 0, %s112
    %s127 = sphi 0, %s113
    %s131 = sphi 0, %s131
    %s133 = sphi 0, %s131
    %s134 = sphi 0, %s133
    %s148 = sphi 0, %s134
    %s152 = sphi 0, %s152
    %s154 = sphi 0, %s152
    %s155 = sphi 0, %s154
    %s169 = sphi 0, %s155
    %s175 = sphi 0, %s177
    %s178 = sphi 0, %s175
    %s179 = sphi 0, %s178
    %s195 = sphi 0, %s179
  $region4: #{xvit_forward.8} parent=0 // loop_header_branch
    %16 = sbr.rel (%p14) target = $region8
  $region5: #{xvit_forward.8} parent=0 // loop_body
    %s18 = ssub.s32 %s13, 1
    %s19 = ssub.s32 %s13, 2
    %s20 = sadd.s32 %s13, 1
    %s21 = ssub.s32 %s13, %s20
    %p22 = scmp.eq.s32.totalorder %s21, 0
    %s24 = sadd.s32 %s23, 1
    %s25 = scalar_select %p22, %s23, %s24
    %p28 = pneg %p22
    %p29 = scmp.eq.s32.totalorder %s13, 1
    %p30 = por %p28, %p29
    %p31 = scmp.ne.s32.totalorder %s23, %s26
    %p32 = scmp.eq.s32.totalorder %s13, 0
    %p33 = por %p31, %p32
    %p34 = scmp.ne.s32.totalorder %s23, %s26
    %p35 = scmp.eq.s32.totalorder %s18, 1
    %p36 = por %p34, %p35
    %p37 = scmp.ne.s32.totalorder %s26, %s27
    %p38 = scmp.eq.s32.totalorder %s18, 0
    %p39 = por %p37, %p38
    %p40 = scmp.ne.s32.totalorder %s26, %s27
    %p41 = scmp.eq.s32.totalorder %s19, 1
    %p42 = por %p40, %p41
    %p44 = scmp.ne.s32.totalorder %s27, %s43
    %p45 = scmp.eq.s32.totalorder %s19, 0
    %p46 = por %p44, %p45
    %s48 = sadd.s32 %s47, 1
    %p51 = scmp.eq.s32.totalorder %s13, 1
    %p52 = scmp.ne.s32.totalorder %s47, %s49
    %p53 = scmp.eq.s32.totalorder %s13, 0
    %p54 = por %p52, %p53
    %p55 = scmp.ne.s32.totalorder %s47, %s49
    %p56 = scmp.eq.s32.totalorder %s18, 1
    %p57 = por %p55, %p56
    %p58 = scmp.ne.s32.totalorder %s49, %s50
    %p59 = scmp.eq.s32.totalorder %s18, 0
    %p60 = por %p58, %p59
    %p61 = scmp.ne.s32.totalorder %s49, %s50
    %p62 = scmp.eq.s32.totalorder %s19, 1
    %p63 = por %p61, %p62
    %p65 = scmp.ne.s32.totalorder %s50, %s64
    %p66 = scmp.eq.s32.totalorder %s19, 0
    %p67 = por %p65, %p66
    %s69 = sadd.s32 %s68, 1
    %p72 = scmp.eq.s32.totalorder %s13, 1
    %p73 = scmp.ne.s32.totalorder %s68, %s70
    %p74 = scmp.eq.s32.totalorder %s13, 0
    %p75 = por %p73, %p74
    %p76 = scmp.ne.s32.totalorder %s68, %s70
    %p77 = scmp.eq.s32.totalorder %s18, 1
    %p78 = por %p76, %p77
    %p79 = scmp.ne.s32.totalorder %s70, %s71
    %p80 = scmp.eq.s32.totalorder %s18, 0
    %p81 = por %p79, %p80
    %p82 = scmp.ne.s32.totalorder %s70, %s71
    %p83 = scmp.eq.s32.totalorder %s19, 1
    %p84 = por %p82, %p83
    %p86 = scmp.ne.s32.totalorder %s71, %s85
    %p87 = scmp.eq.s32.totalorder %s19, 0
    %p88 = por %p86, %p87
    %s90 = sadd.s32 %s89, 1
    %p93 = scmp.eq.s32.totalorder %s13, 1
    %p94 = scmp.ne.s32.totalorder %s89, %s91
    %p95 = scmp.eq.s32.totalorder %s13, 0
    %p96 = por %p94, %p95
    %p97 = scmp.ne.s32.totalorder %s89, %s91
    %p98 = scmp.eq.s32.totalorder %s18, 1
    %p99 = por %p97, %p98
    %p100 = scmp.ne.s32.totalorder %s91, %s92
    %p101 = scmp.eq.s32.totalorder %s18, 0
    %p102 = por %p100, %p101
    %p103 = scmp.ne.s32.totalorder %s91, %s92
    %p104 = scmp.eq.s32.totalorder %s19, 1
    %p105 = por %p103, %p104
    %p107 = scmp.ne.s32.totalorder %s92, %s106
    %p108 = scmp.eq.s32.totalorder %s19, 0
    %p109 = por %p107, %p108
    %s111 = sadd.s32 %s110, 1
    %p114 = scmp.eq.s32.totalorder %s13, 1
    %p115 = scmp.ne.s32.totalorder %s110, %s112
    %p116 = scmp.eq.s32.totalorder %s13, 0
    %p117 = por %p115, %p116
    %p118 = scmp.ne.s32.totalorder %s110, %s112
    %p119 = scmp.eq.s32.totalorder %s18, 1
    %p120 = por %p118, %p119
    %p121 = scmp.ne.s32.totalorder %s112, %s113
    %p122 = scmp.eq.s32.totalorder %s18, 0
    %p123 = por %p121, %p122
    %p124 = scmp.ne.s32.totalorder %s112, %s113
    %p125 = scmp.eq.s32.totalorder %s19, 1
    %p126 = por %p124, %p125
    %p128 = scmp.ne.s32.totalorder %s113, %s127
    %p129 = scmp.eq.s32.totalorder %s19, 0
    %p130 = por %p128, %p129
    %s132 = sadd.s32 %s131, 1
    %p135 = scmp.eq.s32.totalorder %s13, 1
    %p136 = scmp.ne.s32.totalorder %s131, %s133
    %p137 = scmp.eq.s32.totalorder %s13, 0
    %p138 = por %p136, %p137
    %p139 = scmp.ne.s32.totalorder %s131, %s133
    %p140 = scmp.eq.s32.totalorder %s18, 1
    %p141 = por %p139, %p140
    %p142 = scmp.ne.s32.totalorder %s133, %s134
    %p143 = scmp.eq.s32.totalorder %s18, 0
    %p144 = por %p142, %p143
    %p145 = scmp.ne.s32.totalorder %s133, %s134
    %p146 = scmp.eq.s32.totalorder %s19, 1
    %p147 = por %p145, %p146
    %p149 = scmp.ne.s32.totalorder %s134, %s148
    %p150 = scmp.eq.s32.totalorder %s19, 0
    %p151 = por %p149, %p150
    %s153 = sadd.s32 %s152, 1
    %p156 = scmp.eq.s32.totalorder %s13, 1
    %p157 = scmp.ne.s32.totalorder %s152, %s154
    %p158 = scmp.eq.s32.totalorder %s13, 0
    %p159 = por %p157, %p158
    %p160 = scmp.ne.s32.totalorder %s152, %s154
    %p161 = scmp.eq.s32.totalorder %s18, 1
    %p162 = por %p160, %p161
    %p163 = scmp.ne.s32.totalorder %s154, %s155
    %p164 = scmp.eq.s32.totalorder %s18, 0
    %p165 = por %p163, %p164
    %p166 = scmp.ne.s32.totalorder %s154, %s155
    %p167 = scmp.eq.s32.totalorder %s19, 1
    %p168 = por %p166, %p167
    %p170 = scmp.ne.s32.totalorder %s155, %s169
    %p171 = scmp.eq.s32.totalorder %s19, 0
    %p172 = por %p170, %p171
    %s173 = ssub.s32 %s13, %s20
    %p174 = scmp.eq.s32.totalorder %s173, 0
    %s176 = sadd.s32 %s175, 1
    %s177 = scalar_select %p174, %s175, %s176
    %p180 = pneg %p174
    %p181 = scmp.eq.s32.totalorder %s13, 1
    %p182 = por %p180, %p181
    %p183 = scmp.ne.s32.totalorder %s175, %s178
    %p184 = scmp.eq.s32.totalorder %s13, 0
    %p185 = por %p183, %p184
    %p186 = scmp.ne.s32.totalorder %s175, %s178
    %p187 = scmp.eq.s32.totalorder %s18, 1
    %p188 = por %p186, %p187
    %p189 = scmp.ne.s32.totalorder %s178, %s179
    %p190 = scmp.eq.s32.totalorder %s18, 0
    %p191 = por %p189, %p190
    %p192 = scmp.ne.s32.totalorder %s178, %s179
    %p193 = scmp.eq.s32.totalorder %s19, 1
    %p194 = por %p192, %p193
    %p196 = scmp.ne.s32.totalorder %s179, %s195
    %p197 = scmp.eq.s32.totalorder %s19, 0
    %p198 = por %p196, %p197
    %p199 = scmp.le.s32.totalorder 1, %s13
    %p200 = scmp.lt.s32.totalorder %s13, 3
    %p201 = pnand %p199, %p200
    %p202 = pneg %p201
    // Predicated region
    $region9: #{xvit_forward.8} parent=5 // pred_check
      _
    $region10: #{xvit_forward.8} parent=5 // pred_check_branch
      %204 = sbr.rel (%p201) target = $region12
    $region11: #{xvit_forward.8} parent=5 // pred_region
      %s205 = ssub.s32 %s13, 1
      // Predicated region
      $region13: #{xvit_forward.8} parent=11 // pred_check
        %p206 = pneg %p60
      $region14: #{xvit_forward.8} parent=11 // pred_check_branch
        %208 = sbr.rel (%p206) target = $region16
      $region15: #{xvit_forward.8} parent=11 // pred_region
        _
      $region16: #{xvit_forward.8} parent=11 // pred_fallthru
        _
      // Predicated region
      $region17: #{xvit_forward.8} parent=11 // pred_check
        %p209 = pneg %p81
      $region18: #{xvit_forward.8} parent=11 // pred_check_branch
        %211 = sbr.rel (%p209) target = $region20
      $region19: #{xvit_forward.8} parent=11 // pred_region
        _
      $region20: #{xvit_forward.8} parent=11 // pred_fallthru
        _
      // Predicated region
      $region21: #{xvit_forward.8} parent=11 // pred_check
        %p212 = pneg %p102
      $region22: #{xvit_forward.8} parent=11 // pred_check_branch
        %214 = sbr.rel (%p212) target = $region24
      $region23: #{xvit_forward.8} parent=11 // pred_region
        _
      $region24: #{xvit_forward.8} parent=11 // pred_fallthru
        _
      // Predicated region
      $region25: #{xvit_forward.8} parent=11 // pred_check
        %p215 = pneg %p123
      $region26: #{xvit_forward.8} parent=11 // pred_check_branch
        %217 = sbr.rel (%p215) target = $region28
      $region27: #{xvit_forward.8} parent=11 // pred_region
        _
      $region28: #{xvit_forward.8} parent=11 // pred_fallthru
        _
      // Predicated region
      $region29: #{xvit_forward.8} parent=11 // pred_check
        %p218 = pneg %p144
      $region30: #{xvit_forward.8} parent=11 // pred_check_branch
        %220 = sbr.rel (%p218) target = $region32
      $region31: #{xvit_forward.8} parent=11 // pred_region
        _
      $region32: #{xvit_forward.8} parent=11 // pred_fallthru
        _
      // Predicated region
      $region33: #{xvit_forward.8} parent=11 // pred_check
        %p221 = pneg %p165
      $region34: #{xvit_forward.8} parent=11 // pred_check_branch
        %223 = sbr.rel (%p221) target = $region36
      $region35: #{xvit_forward.8} parent=11 // pred_region
        _
      $region36: #{xvit_forward.8} parent=11 // pred_fallthru
        _
    $region12: #{xvit_forward.8} parent=5 // pred_fallthru
      _
    %p224 = scmp.lt.s32.totalorder %s13, 2
    // Predicated region
    $region37: #{xvit_forward.8} parent=5 // pred_check
      %p225 = pneg %p224
    $region38: #{xvit_forward.8} parent=5 // pred_check_branch
      %227 = sbr.rel (%p225) target = $region40
    $region39: #{xvit_forward.8} parent=5 // pred_region
      // Predicated region
      $region41: #{xvit_forward.8} parent=39 // pred_check
        %p228 = pneg %p33
      $region42: #{xvit_forward.8} parent=39 // pred_check_branch
        %230 = sbr.rel (%p228) target = $region44
      $region43: #{xvit_forward.8} parent=39 // pred_region
        %p231 = scmp.lt.s32.totalorder %s13, 1
        %s232 = scalar_select %p231, %s13, 1
        %s233 = smul.addr %s232, 9
        %s234 = smul.addr %s233, 8
        %s235 = scalar_lea.vmem %s0, %s234
      $region44: #{xvit_forward.8} parent=39 // pred_fallthru
        _
    $region40: #{xvit_forward.8} parent=5 // pred_fallthru
      _
    %p236 = scmp.le.s32.totalorder 1, %s13
    %p237 = scmp.lt.s32.totalorder %s13, 3
    %p238 = pnand %p236, %p237
    %p239 = pneg %p238
    // Predicated region
    $region45: #{xvit_forward.8} parent=5 // pred_check
      _
    $region46: #{xvit_forward.8} parent=5 // pred_check_branch
      %241 = sbr.rel (%p238) target = $region48
    $region47: #{xvit_forward.8} parent=5 // pred_region
      %s242 = ssub.s32 %s13, 1
      %p243 = scmp.lt.s32.totalorder %s18, 1
      %s244 = scalar_select %p243, %s18, 1
      %s245 = smul.addr %s244, 9
      %s246 = smul.addr %s245, 8
      %s247 = scalar_lea.vmem %s0, %s246
      %p248 = pneg %p39
      %p249 = pneg %p36
      %p250 = pneg %p60
      %p251 = pneg %p57
      %p252 = pneg %p81
      %p253 = pneg %p78
      %p254 = pneg %p102
      %p255 = pneg %p99
      %p256 = pneg %p123
      %p257 = pneg %p120
      %p258 = pneg %p144
      %p259 = pneg %p141
      %p260 = pneg %p165
      %p261 = pneg %p162
      %p262 = pneg %p191
      %p263 = pneg %p188
      %p264 = scmp.lt.s32.totalorder %s18, 1
      %s265 = scalar_select %p264, %s18, 1
      %s266 = smul.addr %s265, 9
      %s267 = smul.addr %s266, 8
      %s268 = scalar_lea.vmem %s7, %s267
      %p269 = scmp.lt.s32.totalorder %s18, 1
      %s270 = scalar_select %p269, %s18, 1
      %s271 = smul.addr %s270, 9
      %s272 = smul.addr %s271, 8
      %s273 = scalar_lea.vmem %s0, %s272
      %p274 = scmp.lt.s32.totalorder %s18, 1
      %s275 = scalar_select %p274, %s18, 1
      %s276 = smul.addr %s275, 9
      %s277 = smul.addr %s276, 8
      %s278 = scalar_lea.vmem %s7, %s277
      %v279 = vld [vmem:[%s273] sm:$0xff]
      %v280 = vld [vmem:[%s273 + $0x8] sm:$0xff]
      %v281 = vld [vmem:[%s273 + $0x10] sm:$0xff]
      %v282 = vld [vmem:[%s273 + $0x18] sm:$0xff]
      %v283 = vld [vmem:[%s273 + $0x20] sm:$0xff]
      %v284 = vld [vmem:[%s273 + $0x28] sm:$0xff]
      %v285 = vld [vmem:[%s273 + $0x30] sm:$0xff]
      %v286 = vld [vmem:[%s273 + $0x38] sm:$0xff]
      %v287 = vld [vmem:[%s273 + $0x40] sm:$0x1]
      %v288 = vld [vmem:[%s1] sm:$0x1]
      %v289 = vld [vmem:[%s2] sm:$0x1]
      %290 = vadd.xlane.f32.xlu0 %v279
      %v291 = vpop.xlane.xlu0 %290
      %292 = vadd.xlane.f32.xlu0 %v280
      %v293 = vpop.xlane.xlu0 %292
      %294 = vadd.xlane.f32.xlu0 %v281
      %v295 = vpop.xlane.xlu0 %294
      %296 = vadd.xlane.f32.xlu0 %v282
      %v297 = vpop.xlane.xlu0 %296
      %298 = vadd.xlane.f32.xlu0 %v283
      %v299 = vpop.xlane.xlu0 %298
      %300 = vadd.xlane.f32.xlu0 %v284
      %v301 = vpop.xlane.xlu0 %300
      %302 = vadd.xlane.f32.xlu0 %v285
      %v303 = vpop.xlane.xlu0 %302
      %304 = vadd.xlane.f32.xlu0 %v286
      %v305 = vpop.xlane.xlu0 %304
      %vm306 = vcmask 1040384
      %v307 = vsel %vm306, %v287, 0.0
      %308 = vadd.xlane.f32.xlu0 %v307
      %v309 = vpop.xlane.xlu0 %308
      %v310 = vrcp.pop 128.0
      %v311 = vmul.f32 128.0, %v310
      %v312 = vsub.f32 1.0, %v311
      %v313 = vmul.f32 %v310, %v312
      %v314 = vadd.f32 %v310, %v313
      %vm315 = vweird.f32 %v310
      %v316 = vsel %vm315, %v310, %v314
      %v317 = vmul.f32 %v291, %v316
      %v318 = vmul.f32 %v293, %v316
      %v319 = vmul.f32 %v295, %v316
      %v320 = vmul.f32 %v297, %v316
      %v321 = vmul.f32 %v299, %v316
      %v322 = vmul.f32 %v301, %v316
      %v323 = vmul.f32 %v303, %v316
      %v324 = vmul.f32 %v305, %v316
      %v325 = vmul.f32 %v309, %v316
      %v326 = vsub.f32 %v279, %v317
      %v327 = vsub.f32 %v280, %v318
      %v328 = vsub.f32 %v281, %v319
      %v329 = vsub.f32 %v282, %v320
      %v330 = vsub.f32 %v283, %v321
      %v331 = vsub.f32 %v284, %v322
      %v332 = vsub.f32 %v285, %v323
      %v333 = vsub.f32 %v286, %v324
      %v334 = vsub.f32 %v287, %v325
      %v335 = vmul.f32 %v326, %v326
      %v336 = vmul.f32 %v327, %v327
      %v337 = vmul.f32 %v328, %v328
      %v338 = vmul.f32 %v329, %v329
      %v339 = vmul.f32 %v330, %v330
      %v340 = vmul.f32 %v331, %v331
      %v341 = vmul.f32 %v332, %v332
      %v342 = vmul.f32 %v333, %v333
      %v343 = vmul.f32 %v334, %v334
      %344 = vadd.xlane.f32.xlu0 %v335
      %v345 = vpop.xlane.xlu0 %344
      %346 = vadd.xlane.f32.xlu0 %v336
      %v347 = vpop.xlane.xlu0 %346
      %348 = vadd.xlane.f32.xlu0 %v337
      %v349 = vpop.xlane.xlu0 %348
      %350 = vadd.xlane.f32.xlu0 %v338
      %v351 = vpop.xlane.xlu0 %350
      %352 = vadd.xlane.f32.xlu0 %v339
      %v353 = vpop.xlane.xlu0 %352
      %354 = vadd.xlane.f32.xlu0 %v340
      %v355 = vpop.xlane.xlu0 %354
      %356 = vadd.xlane.f32.xlu0 %v341
      %v357 = vpop.xlane.xlu0 %356
      %358 = vadd.xlane.f32.xlu0 %v342
      %v359 = vpop.xlane.xlu0 %358
      %v360 = vsel %vm306, %v343, 0.0
      %361 = vadd.xlane.f32.xlu0 %v360
      %v362 = vpop.xlane.xlu0 %361
      %v363 = vmul.f32 %v345, %v316
      %v364 = vmul.f32 %v347, %v316
      %v365 = vmul.f32 %v349, %v316
      %v366 = vmul.f32 %v351, %v316
      %v367 = vmul.f32 %v353, %v316
      %v368 = vmul.f32 %v355, %v316
      %v369 = vmul.f32 %v357, %v316
      %v370 = vmul.f32 %v359, %v316
      %v371 = vmul.f32 %v362, %v316
      %v372 = vadd.f32 %v363, 1e-06
      %v373 = vadd.f32 %v364, 1e-06
      %v374 = vadd.f32 %v365, 1e-06
      %v375 = vadd.f32 %v366, 1e-06
      %v376 = vadd.f32 %v367, 1e-06
      %v377 = vadd.f32 %v368, 1e-06
      %v378 = vadd.f32 %v369, 1e-06
      %v379 = vadd.f32 %v370, 1e-06
      %v380 = vadd.f32 %v371, 1e-06
      %v381 = vrsqrt.pop %v372
      %v382 = vmul.f32 %v381, %v372
      %v383 = vmul.f32 %v382, %v381
      %v384 = vmul.f32 0.5, %v383
      %v385 = vsub.f32 1.5, %v384
      %v386 = vmul.f32 %v381, %v385
      %vm387 = vweird.f32 %v372
      %vm388 = vweird.f32 %v381
      %vm389 = vmor %vm387, %vm388
      %v390 = vsel %vm389, %v381, %v386
      %v391 = vrsqrt.pop %v373
      %v392 = vmul.f32 %v391, %v373
      %v393 = vmul.f32 %v392, %v391
      %v394 = vmul.f32 0.5, %v393
      %v395 = vsub.f32 1.5, %v394
      %v396 = vmul.f32 %v391, %v395
      %vm397 = vweird.f32 %v373
      %vm398 = vweird.f32 %v391
      %vm399 = vmor %vm397, %vm398
      %v400 = vsel %vm399, %v391, %v396
      %v401 = vrsqrt.pop %v374
      %v402 = vmul.f32 %v401, %v374
      %v403 = vmul.f32 %v402, %v401
      %v404 = vmul.f32 0.5, %v403
      %v405 = vsub.f32 1.5, %v404
      %v406 = vmul.f32 %v401, %v405
      %vm407 = vweird.f32 %v374
      %vm408 = vweird.f32 %v401
      %vm409 = vmor %vm407, %vm408
      %v410 = vsel %vm409, %v401, %v406
      %v411 = vrsqrt.pop %v375
      %v412 = vmul.f32 %v411, %v375
      %v413 = vmul.f32 %v412, %v411
      %v414 = vmul.f32 0.5, %v413
      %v415 = vsub.f32 1.5, %v414
      %v416 = vmul.f32 %v411, %v415
      %vm417 = vweird.f32 %v375
      %vm418 = vweird.f32 %v411
      %vm419 = vmor %vm417, %vm418
      %v420 = vsel %vm419, %v411, %v416
      %v421 = vrsqrt.pop %v376
      %v422 = vmul.f32 %v421, %v376
      %v423 = vmul.f32 %v422, %v421
      %v424 = vmul.f32 0.5, %v423
      %v425 = vsub.f32 1.5, %v424
      %v426 = vmul.f32 %v421, %v425
      %vm427 = vweird.f32 %v376
      %vm428 = vweird.f32 %v421
      %vm429 = vmor %vm427, %vm428
      %v430 = vsel %vm429, %v421, %v426
      %v431 = vrsqrt.pop %v377
      %v432 = vmul.f32 %v431, %v377
      %v433 = vmul.f32 %v432, %v431
      %v434 = vmul.f32 0.5, %v433
      %v435 = vsub.f32 1.5, %v434
      %v436 = vmul.f32 %v431, %v435
      %vm437 = vweird.f32 %v377
      %vm438 = vweird.f32 %v431
      %vm439 = vmor %vm437, %vm438
      %v440 = vsel %vm439, %v431, %v436
      %v441 = vrsqrt.pop %v378
      %v442 = vmul.f32 %v441, %v378
      %v443 = vmul.f32 %v442, %v441
      %v444 = vmul.f32 0.5, %v443
      %v445 = vsub.f32 1.5, %v444
      %v446 = vmul.f32 %v441, %v445
      %vm447 = vweird.f32 %v378
      %vm448 = vweird.f32 %v441
      %vm449 = vmor %vm447, %vm448
      %v450 = vsel %vm449, %v441, %v446
      %v451 = vrsqrt.pop %v379
      %v452 = vmul.f32 %v451, %v379
      %v453 = vmul.f32 %v452, %v451
      %v454 = vmul.f32 0.5, %v453
      %v455 = vsub.f32 1.5, %v454
      %v456 = vmul.f32 %v451, %v455
      %vm457 = vweird.f32 %v379
      %vm458 = vweird.f32 %v451
      %vm459 = vmor %vm457, %vm458
      %v460 = vsel %vm459, %v451, %v456
      %v461 = vrsqrt.pop %v380
      %v462 = vmul.f32 %v461, %v380
      %v463 = vmul.f32 %v462, %v461
      %v464 = vmul.f32 0.5, %v463
      %v465 = vsub.f32 1.5, %v464
      %v466 = vmul.f32 %v461, %v465
      %vm467 = vweird.f32 %v380
      %vm468 = vweird.f32 %v461
      %vm469 = vmor %vm467, %vm468
      %v470 = vsel %vm469, %v461, %v466
      %v471 = vmul.f32 %v326, %v390
      %v472 = vmul.f32 %v327, %v400
      %v473 = vmul.f32 %v328, %v410
      %v474 = vmul.f32 %v329, %v420
      %v475 = vmul.f32 %v330, %v430
      %v476 = vmul.f32 %v331, %v440
      %v477 = vmul.f32 %v332, %v450
      %v478 = vmul.f32 %v333, %v460
      %v479 = vmul.f32 %v334, %v470
      %v481 = vperm.slane %v288, 0
      %v483 = vmul.f32 %v471, %v481
      %v484 = vmul.f32 %v472, %v481
      %v485 = vmul.f32 %v473, %v481
      %v486 = vmul.f32 %v474, %v481
      %v487 = vmul.f32 %v475, %v481
      %v488 = vmul.f32 %v476, %v481
      %v489 = vmul.f32 %v477, %v481
      %v490 = vmul.f32 %v478, %v481
      %v491 = vmul.f32 %v479, %v481
      %v493 = vperm.slane %v289, 0
      %v495 = vadd.f32 %v483, %v493
      %v496 = vadd.f32 %v484, %v493
      %v497 = vadd.f32 %v485, %v493
      %v498 = vadd.f32 %v486, %v493
      %v499 = vadd.f32 %v487, %v493
      %v500 = vadd.f32 %v488, %v493
      %v501 = vadd.f32 %v489, %v493
      %v502 = vadd.f32 %v490, %v493
      %v503 = vadd.f32 %v491, %v493
      %v504 = vpack.c.bf16 %v496, %v495
      %v505 = vpack.c.bf16 %v498, %v497
      %v506 = vpack.c.bf16 %v500, %v499
      %v507 = vpack.c.bf16 %v502, %v501
      %v508 = vpack.c.bf16 %v503, %v503
      %v509 = vld [vmem:[%s3] sm:$0xff]
      %v510 = vld [vmem:[%s3 + $0x8] sm:$0xff]
      %v511 = vld [vmem:[%s3 + $0x10] sm:$0xff]
      %v512 = vld [vmem:[%s3 + $0x18] sm:$0xff]
      %v513 = vld [vmem:[%s3 + $0x20] sm:$0xff]
      %v514 = vld [vmem:[%s3 + $0x28] sm:$0xff]
      %v515 = vld [vmem:[%s3 + $0x30] sm:$0xff]
      %v516 = vld [vmem:[%s3 + $0x38] sm:$0xff]
      %v517 = vld [vmem:[%s3 + $0x40] sm:$0xff]
      %v518 = vld [vmem:[%s3 + $0x48] sm:$0xff]
      %v519 = vld [vmem:[%s3 + $0x50] sm:$0xff]
      %v520 = vld [vmem:[%s3 + $0x58] sm:$0xff]
      %v521 = vld [vmem:[%s3 + $0x60] sm:$0xff]
      %v522 = vld [vmem:[%s3 + $0x68] sm:$0xff]
      %v523 = vld [vmem:[%s3 + $0x70] sm:$0xff]
      %v524 = vld [vmem:[%s3 + $0x78] sm:$0xff]
      %v525 = vld [vmem:[%s3 + $0x80] sm:$0xff]
      %v526 = vld [vmem:[%s3 + $0x88] sm:$0xff]
      %v527 = vld [vmem:[%s3 + $0x90] sm:$0xff]
      %v528 = vld [vmem:[%s3 + $0x98] sm:$0xff]
      %v529 = vld [vmem:[%s3 + $0xa0] sm:$0xff]
      %v530 = vld [vmem:[%s3 + $0xa8] sm:$0xff]
      %v531 = vld [vmem:[%s3 + $0xb0] sm:$0xff]
      %v532 = vld [vmem:[%s3 + $0xb8] sm:$0xff]
      %v533 = vld [vmem:[%s3 + $0xc0] sm:$0xff]
      %v534 = vld [vmem:[%s3 + $0xc8] sm:$0xff]
      %v535 = vld [vmem:[%s3 + $0xd0] sm:$0xff]
      %v536 = vld [vmem:[%s3 + $0xd8] sm:$0xff]
      %v537 = vld [vmem:[%s3 + $0xe0] sm:$0xff]
      %v538 = vld [vmem:[%s3 + $0xe8] sm:$0xff]
      %v539 = vld [vmem:[%s3 + $0xf0] sm:$0xff]
      %v540 = vld [vmem:[%s3 + $0xf8] sm:$0xff]
      %v541 = vld [vmem:[%s4] sm:$0xf]
      %v543 = vperm.slane %v541, 0
      %v544 = vperm.slane %v541, 1
      %v545 = vperm.slane %v541, 2
      %v546 = vperm.slane %v541, 3
      %v583 = vunpack.c.l.b16 %v509
      %v584 = vunpack.c.h.b16 %v509
      %v585 = vunpack.c.l.b16 %v510
      %v586 = vunpack.c.h.b16 %v510
      %v587 = vunpack.c.l.b16 %v511
      %v588 = vunpack.c.h.b16 %v511
      %v589 = vunpack.c.l.b16 %v512
      %v590 = vunpack.c.h.b16 %v512
      %v591 = vunpack.c.l.b16 %v513
      %v592 = vunpack.c.h.b16 %v513
      %v593 = vunpack.c.l.b16 %v514
      %v594 = vunpack.c.h.b16 %v514
      %v595 = vunpack.c.l.b16 %v515
      %v596 = vunpack.c.h.b16 %v515
      %v597 = vunpack.c.l.b16 %v516
      %v598 = vunpack.c.h.b16 %v516
      %v599 = vunpack.c.l.b16 %v517
      %v600 = vunpack.c.h.b16 %v517
      %v601 = vunpack.c.l.b16 %v518
      %v602 = vunpack.c.h.b16 %v518
      %v603 = vunpack.c.l.b16 %v519
      %v604 = vunpack.c.h.b16 %v519
      %v605 = vunpack.c.l.b16 %v520
      %v606 = vunpack.c.h.b16 %v520
      %v607 = vunpack.c.l.b16 %v521
      %v608 = vunpack.c.h.b16 %v521
      %v609 = vunpack.c.l.b16 %v522
      %v610 = vunpack.c.h.b16 %v522
      %v611 = vunpack.c.l.b16 %v523
      %v612 = vunpack.c.h.b16 %v523
      %v613 = vunpack.c.l.b16 %v524
      %v614 = vunpack.c.h.b16 %v524
      %v615 = vunpack.c.l.b16 %v525
      %v616 = vunpack.c.h.b16 %v525
      %v617 = vunpack.c.l.b16 %v526
      %v618 = vunpack.c.h.b16 %v526
      %v619 = vunpack.c.l.b16 %v527
      %v620 = vunpack.c.h.b16 %v527
      %v621 = vunpack.c.l.b16 %v528
      %v622 = vunpack.c.h.b16 %v528
      %v623 = vunpack.c.l.b16 %v529
      %v624 = vunpack.c.h.b16 %v529
      %v625 = vunpack.c.l.b16 %v530
      %v626 = vunpack.c.h.b16 %v530
      %v627 = vunpack.c.l.b16 %v531
      %v628 = vunpack.c.h.b16 %v531
      %v629 = vunpack.c.l.b16 %v532
      %v630 = vunpack.c.h.b16 %v532
      %v631 = vunpack.c.l.b16 %v533
      %v632 = vunpack.c.h.b16 %v533
      %v633 = vunpack.c.l.b16 %v534
      %v634 = vunpack.c.h.b16 %v534
      %v635 = vunpack.c.l.b16 %v535
      %v636 = vunpack.c.h.b16 %v535
      %v637 = vunpack.c.l.b16 %v536
      %v638 = vunpack.c.h.b16 %v536
      %v639 = vunpack.c.l.b16 %v537
      %v640 = vunpack.c.h.b16 %v537
      %v641 = vunpack.c.l.b16 %v538
      %v642 = vunpack.c.h.b16 %v538
      %v643 = vunpack.c.l.b16 %v539
      %v644 = vunpack.c.h.b16 %v539
      %v645 = vunpack.c.l.b16 %v540
      %v646 = vunpack.c.h.b16 %v540
      %v647 = vpack.c.b16 %v587, %v583
      %v648 = vpack.c.b16 %v588, %v584
      %v649 = vpack.c.b16 %v589, %v585
      %v650 = vpack.c.b16 %v590, %v586
      %v651 = vpack.c.b16 %v595, %v591
      %v652 = vpack.c.b16 %v596, %v592
      %v653 = vpack.c.b16 %v597, %v593
      %v654 = vpack.c.b16 %v598, %v594
      %v655 = vpack.c.b16 %v603, %v599
      %v656 = vpack.c.b16 %v604, %v600
      %v657 = vpack.c.b16 %v605, %v601
      %v658 = vpack.c.b16 %v606, %v602
      %v659 = vpack.c.b16 %v611, %v607
      %v660 = vpack.c.b16 %v612, %v608
      %v661 = vpack.c.b16 %v613, %v609
      %v662 = vpack.c.b16 %v614, %v610
      %v663 = vpack.c.b16 %v619, %v615
      %v664 = vpack.c.b16 %v620, %v616
      %v665 = vpack.c.b16 %v621, %v617
      %v666 = vpack.c.b16 %v622, %v618
      %v667 = vpack.c.b16 %v627, %v623
      %v668 = vpack.c.b16 %v628, %v624
      %v669 = vpack.c.b16 %v629, %v625
      %v670 = vpack.c.b16 %v630, %v626
      %v671 = vpack.c.b16 %v635, %v631
      %v672 = vpack.c.b16 %v636, %v632
      %v673 = vpack.c.b16 %v637, %v633
      %v674 = vpack.c.b16 %v638, %v634
      %v675 = vpack.c.b16 %v643, %v639
      %v676 = vpack.c.b16 %v644, %v640
      %v677 = vpack.c.b16 %v645, %v641
      %v678 = vpack.c.b16 %v646, %v642
      %711 = vmatpush.bf16.msra.mxu0 %v675
      %712 = vmatpush.bf16.msra.mxu0 %v671
      %713 = vmatpush.bf16.msra.mxu0 %v667
      %714 = vmatpush.bf16.msra.mxu0 %v663
      %715 = vmatpush.bf16.msra.mxu0 %v659
      %716 = vmatpush.bf16.msra.mxu0 %v655
      %717 = vmatpush.bf16.msra.mxu0 %v651
      %718 = vmatpush.bf16.msra.mxu0 %v647
      %719 = vmatmul.bf16.gmra.mxu0 %v504
      %v720 = vpop.f32.mrf.mxu0
      %v721 = vadd.f32 %v543, %v720
      %v722 = vpop.f32.mrf.mxu0
      %v723 = vadd.f32 %v543, %v722
      %724 = vmatmul.bf16.gmra.mxu0 %v505
      %v725 = vpop.f32.mrf.mxu0
      %v726 = vadd.f32 %v543, %v725
      %v727 = vpop.f32.mrf.mxu0
      %v728 = vadd.f32 %v543, %v727
      %729 = vmatmul.bf16.gmra.mxu0 %v506
      %v730 = vpop.f32.mrf.mxu0
      %v731 = vadd.f32 %v543, %v730
      %v732 = vpop.f32.mrf.mxu0
      %v733 = vadd.f32 %v543, %v732
      %734 = vmatmul.bf16.gmra.mxu0 %v507
      %v735 = vpop.f32.mrf.mxu0
      %v736 = vadd.f32 %v543, %v735
      %v737 = vpop.f32.mrf.mxu0
      %v738 = vadd.f32 %v543, %v737
      %739 = vmatmul.bf16.gmra.mxu0 %v508
      %v740 = vpop.f32.mrf.mxu0
      %v741 = vadd.f32 %v543, %v740
      %v742 = vpop.f32.mrf.mxu0
      %743 = vdwg.mxu0
      %744 = vmatpush.bf16.msra.mxu0 %v676
      %745 = vmatpush.bf16.msra.mxu0 %v672
      %746 = vmatpush.bf16.msra.mxu0 %v668
      %747 = vmatpush.bf16.msra.mxu0 %v664
      %748 = vmatpush.bf16.msra.mxu0 %v660
      %749 = vmatpush.bf16.msra.mxu0 %v656
      %750 = vmatpush.bf16.msra.mxu0 %v652
      %751 = vmatpush.bf16.msra.mxu0 %v648
      %752 = vmatmul.bf16.gmra.mxu0 %v504
      %v753 = vpop.f32.mrf.mxu0
      %v754 = vadd.f32 %v544, %v753
      %v755 = vpop.f32.mrf.mxu0
      %v756 = vadd.f32 %v544, %v755
      %757 = vmatmul.bf16.gmra.mxu0 %v505
      %v758 = vpop.f32.mrf.mxu0
      %v759 = vadd.f32 %v544, %v758
      %v760 = vpop.f32.mrf.mxu0
      %v761 = vadd.f32 %v544, %v760
      %762 = vmatmul.bf16.gmra.mxu0 %v506
      %v763 = vpop.f32.mrf.mxu0
      %v764 = vadd.f32 %v544, %v763
      %v765 = vpop.f32.mrf.mxu0
      %v766 = vadd.f32 %v544, %v765
      %767 = vmatmul.bf16.gmra.mxu0 %v507
      %v768 = vpop.f32.mrf.mxu0
      %v769 = vadd.f32 %v544, %v768
      %v770 = vpop.f32.mrf.mxu0
      %v771 = vadd.f32 %v544, %v770
      %772 = vmatmul.bf16.gmra.mxu0 %v508
      %v773 = vpop.f32.mrf.mxu0
      %v774 = vadd.f32 %v544, %v773
      %v775 = vpop.f32.mrf.mxu0
      %776 = vdwg.mxu0
      %777 = vmatpush.bf16.msra.mxu0 %v677
      %778 = vmatpush.bf16.msra.mxu0 %v673
      %779 = vmatpush.bf16.msra.mxu0 %v669
      %780 = vmatpush.bf16.msra.mxu0 %v665
      %781 = vmatpush.bf16.msra.mxu0 %v661
      %782 = vmatpush.bf16.msra.mxu0 %v657
      %783 = vmatpush.bf16.msra.mxu0 %v653
      %784 = vmatpush.bf16.msra.mxu0 %v649
      %785 = vmatmul.bf16.gmra.mxu0 %v504
      %v786 = vpop.f32.mrf.mxu0
      %v787 = vadd.f32 %v545, %v786
      %v788 = vpop.f32.mrf.mxu0
      %v789 = vadd.f32 %v545, %v788
      %790 = vmatmul.bf16.gmra.mxu0 %v505
      %v791 = vpop.f32.mrf.mxu0
      %v792 = vadd.f32 %v545, %v791
      %v793 = vpop.f32.mrf.mxu0
      %v794 = vadd.f32 %v545, %v793
      %795 = vmatmul.bf16.gmra.mxu0 %v506
      %v796 = vpop.f32.mrf.mxu0
      %v797 = vadd.f32 %v545, %v796
      %v798 = vpop.f32.mrf.mxu0
      %v799 = vadd.f32 %v545, %v798
      %800 = vmatmul.bf16.gmra.mxu0 %v507
      %v801 = vpop.f32.mrf.mxu0
      %v802 = vadd.f32 %v545, %v801
      %v803 = vpop.f32.mrf.mxu0
      %v804 = vadd.f32 %v545, %v803
      %805 = vmatmul.bf16.gmra.mxu0 %v508
      %v806 = vpop.f32.mrf.mxu0
      %v807 = vadd.f32 %v545, %v806
      %v808 = vpop.f32.mrf.mxu0
      %809 = vdwg.mxu0
      %810 = vmatpush.bf16.msra.mxu0 %v678
      %811 = vmatpush.bf16.msra.mxu0 %v674
      %812 = vmatpush.bf16.msra.mxu0 %v670
      %813 = vmatpush.bf16.msra.mxu0 %v666
      %814 = vmatpush.bf16.msra.mxu0 %v662
      %815 = vmatpush.bf16.msra.mxu0 %v658
      %816 = vmatpush.bf16.msra.mxu0 %v654
      %817 = vmatpush.bf16.msra.mxu0 %v650
      %818 = vmatmul.bf16.gmra.mxu0 %v504
      %v819 = vpop.f32.mrf.mxu0
      %v820 = vadd.f32 %v546, %v819
      %v821 = vpop.f32.mrf.mxu0
      %v822 = vadd.f32 %v546, %v821
      %823 = vmatmul.bf16.gmra.mxu0 %v505
      %v824 = vpop.f32.mrf.mxu0
      %v825 = vadd.f32 %v546, %v824
      %v826 = vpop.f32.mrf.mxu0
      %v827 = vadd.f32 %v546, %v826
      %828 = vmatmul.bf16.gmra.mxu0 %v506
      %v829 = vpop.f32.mrf.mxu0
      %v830 = vadd.f32 %v546, %v829
      %v831 = vpop.f32.mrf.mxu0
      %v832 = vadd.f32 %v546, %v831
      %833 = vmatmul.bf16.gmra.mxu0 %v507
      %v834 = vpop.f32.mrf.mxu0
      %v835 = vadd.f32 %v546, %v834
      %v836 = vpop.f32.mrf.mxu0
      %v837 = vadd.f32 %v546, %v836
      %838 = vmatmul.bf16.gmra.mxu0 %v508
      %v839 = vpop.f32.mrf.mxu0
      %v840 = vadd.f32 %v546, %v839
      %v841 = vpop.f32.mrf.mxu0
      %842 = vdwg.mxu0
      %v843 = vmul.f32 %v721, 0.5
      %v844 = vmul.f32 %v754, 0.5
      %v845 = vmul.f32 %v787, 0.5
      %v846 = vmul.f32 %v820, 0.5
      %v847 = vmul.f32 %v723, 0.5
      %v848 = vmul.f32 %v756, 0.5
      %v849 = vmul.f32 %v789, 0.5
      %v850 = vmul.f32 %v822, 0.5
      %v851 = vmul.f32 %v726, 0.5
      %v852 = vmul.f32 %v759, 0.5
      %v853 = vmul.f32 %v792, 0.5
      %v854 = vmul.f32 %v825, 0.5
      %v855 = vmul.f32 %v728, 0.5
      %v856 = vmul.f32 %v761, 0.5
      %v857 = vmul.f32 %v794, 0.5
      %v858 = vmul.f32 %v827, 0.5
      %v859 = vmul.f32 %v731, 0.5
      %v860 = vmul.f32 %v764, 0.5
      %v861 = vmul.f32 %v797, 0.5
      %v862 = vmul.f32 %v830, 0.5
      %v863 = vmul.f32 %v733, 0.5
      %v864 = vmul.f32 %v766, 0.5
      %v865 = vmul.f32 %v799, 0.5
      %v866 = vmul.f32 %v832, 0.5
      %v867 = vmul.f32 %v736, 0.5
      %v868 = vmul.f32 %v769, 0.5
      %v869 = vmul.f32 %v802, 0.5
      %v870 = vmul.f32 %v835, 0.5
      %v871 = vmul.f32 %v738, 0.5
      %v872 = vmul.f32 %v771, 0.5
      %v873 = vmul.f32 %v804, 0.5
      %v874 = vmul.f32 %v837, 0.5
      %v875 = vmul.f32 %v741, 0.5
      %v876 = vmul.f32 %v774, 0.5
      %v877 = vmul.f32 %v807, 0.5
      %v878 = vmul.f32 %v840, 0.5
      %v879 = vmul.f32 %v721, 0.044715
      %v880 = vmul.f32 %v754, 0.044715
      %v881 = vmul.f32 %v787, 0.044715
      %v882 = vmul.f32 %v820, 0.044715
      %v883 = vmul.f32 %v723, 0.044715
      %v884 = vmul.f32 %v756, 0.044715
      %v885 = vmul.f32 %v789, 0.044715
      %v886 = vmul.f32 %v822, 0.044715
      %v887 = vmul.f32 %v726, 0.044715
      %v888 = vmul.f32 %v759, 0.044715
      %v889 = vmul.f32 %v792, 0.044715
      %v890 = vmul.f32 %v825, 0.044715
      %v891 = vmul.f32 %v728, 0.044715
      %v892 = vmul.f32 %v761, 0.044715
      %v893 = vmul.f32 %v794, 0.044715
      %v894 = vmul.f32 %v827, 0.044715
      %v895 = vmul.f32 %v731, 0.044715
      %v896 = vmul.f32 %v764, 0.044715
      %v897 = vmul.f32 %v797, 0.044715
      %v898 = vmul.f32 %v830, 0.044715
      %v899 = vmul.f32 %v733, 0.044715
      %v900 = vmul.f32 %v766, 0.044715
      %v901 = vmul.f32 %v799, 0.044715
      %v902 = vmul.f32 %v832, 0.044715
      %v903 = vmul.f32 %v736, 0.044715
      %v904 = vmul.f32 %v769, 0.044715
      %v905 = vmul.f32 %v802, 0.044715
      %v906 = vmul.f32 %v835, 0.044715
      %v907 = vmul.f32 %v738, 0.044715
      %v908 = vmul.f32 %v771, 0.044715
      %v909 = vmul.f32 %v804, 0.044715
      %v910 = vmul.f32 %v837, 0.044715
      %v911 = vmul.f32 %v741, 0.044715
      %v912 = vmul.f32 %v774, 0.044715
      %v913 = vmul.f32 %v807, 0.044715
      %v914 = vmul.f32 %v840, 0.044715
      %v915 = vmul.f32 %v879, %v721
      %v916 = vmul.f32 %v880, %v754
      %v917 = vmul.f32 %v881, %v787
      %v918 = vmul.f32 %v882, %v820
      %v919 = vmul.f32 %v883, %v723
      %v920 = vmul.f32 %v884, %v756
      %v921 = vmul.f32 %v885, %v789
      %v922 = vmul.f32 %v886, %v822
      %v923 = vmul.f32 %v887, %v726
      %v924 = vmul.f32 %v888, %v759
      %v925 = vmul.f32 %v889, %v792
      %v926 = vmul.f32 %v890, %v825
      %v927 = vmul.f32 %v891, %v728
      %v928 = vmul.f32 %v892, %v761
      %v929 = vmul.f32 %v893, %v794
      %v930 = vmul.f32 %v894, %v827
      %v931 = vmul.f32 %v895, %v731
      %v932 = vmul.f32 %v896, %v764
      %v933 = vmul.f32 %v897, %v797
      %v934 = vmul.f32 %v898, %v830
      %v935 = vmul.f32 %v899, %v733
      %v936 = vmul.f32 %v900, %v766
      %v937 = vmul.f32 %v901, %v799
      %v938 = vmul.f32 %v902, %v832
      %v939 = vmul.f32 %v903, %v736
      %v940 = vmul.f32 %v904, %v769
      %v941 = vmul.f32 %v905, %v802
      %v942 = vmul.f32 %v906, %v835
      %v943 = vmul.f32 %v907, %v738
      %v944 = vmul.f32 %v908, %v771
      %v945 = vmul.f32 %v909, %v804
      %v946 = vmul.f32 %v910, %v837
      %v947 = vmul.f32 %v911, %v741
      %v948 = vmul.f32 %v912, %v774
      %v949 = vmul.f32 %v913, %v807
      %v950 = vmul.f32 %v914, %v840
      %v951 = vmul.f32 %v915, %v721
      %v952 = vmul.f32 %v916, %v754
      %v953 = vmul.f32 %v917, %v787
      %v954 = vmul.f32 %v918, %v820
      %v955 = vmul.f32 %v919, %v723
      %v956 = vmul.f32 %v920, %v756
      %v957 = vmul.f32 %v921, %v789
      %v958 = vmul.f32 %v922, %v822
      %v959 = vmul.f32 %v923, %v726
      %v960 = vmul.f32 %v924, %v759
      %v961 = vmul.f32 %v925, %v792
      %v962 = vmul.f32 %v926, %v825
      %v963 = vmul.f32 %v927, %v728
      %v964 = vmul.f32 %v928, %v761
      %v965 = vmul.f32 %v929, %v794
      %v966 = vmul.f32 %v930, %v827
      %v967 = vmul.f32 %v931, %v731
      %v968 = vmul.f32 %v932, %v764
      %v969 = vmul.f32 %v933, %v797
      %v970 = vmul.f32 %v934, %v830
      %v971 = vmul.f32 %v935, %v733
      %v972 = vmul.f32 %v936, %v766
      %v973 = vmul.f32 %v937, %v799
      %v974 = vmul.f32 %v938, %v832
      %v975 = vmul.f32 %v939, %v736
      %v976 = vmul.f32 %v940, %v769
      %v977 = vmul.f32 %v941, %v802
      %v978 = vmul.f32 %v942, %v835
      %v979 = vmul.f32 %v943, %v738
      %v980 = vmul.f32 %v944, %v771
      %v981 = vmul.f32 %v945, %v804
      %v982 = vmul.f32 %v946, %v837
      %v983 = vmul.f32 %v947, %v741
      %v984 = vmul.f32 %v948, %v774
      %v985 = vmul.f32 %v949, %v807
      %v986 = vmul.f32 %v950, %v840
      %v987 = vadd.f32 %v721, %v951
      %v988 = vadd.f32 %v754, %v952
      %v989 = vadd.f32 %v787, %v953
      %v990 = vadd.f32 %v820, %v954
      %v991 = vadd.f32 %v723, %v955
      %v992 = vadd.f32 %v756, %v956
      %v993 = vadd.f32 %v789, %v957
      %v994 = vadd.f32 %v822, %v958
      %v995 = vadd.f32 %v726, %v959
      %v996 = vadd.f32 %v759, %v960
      %v997 = vadd.f32 %v792, %v961
      %v998 = vadd.f32 %v825, %v962
      %v999 = vadd.f32 %v728, %v963
      %v1000 = vadd.f32 %v761, %v964
      %v1001 = vadd.f32 %v794, %v965
      %v1002 = vadd.f32 %v827, %v966
      %v1003 = vadd.f32 %v731, %v967
      %v1004 = vadd.f32 %v764, %v968
      %v1005 = vadd.f32 %v797, %v969
      %v1006 = vadd.f32 %v830, %v970
      %v1007 = vadd.f32 %v733, %v971
      %v1008 = vadd.f32 %v766, %v972
      %v1009 = vadd.f32 %v799, %v973
      %v1010 = vadd.f32 %v832, %v974
      %v1011 = vadd.f32 %v736, %v975
      %v1012 = vadd.f32 %v769, %v976
      %v1013 = vadd.f32 %v802, %v977
      %v1014 = vadd.f32 %v835, %v978
      %v1015 = vadd.f32 %v738, %v979
      %v1016 = vadd.f32 %v771, %v980
      %v1017 = vadd.f32 %v804, %v981
      %v1018 = vadd.f32 %v837, %v982
      %v1019 = vadd.f32 %v741, %v983
      %v1020 = vadd.f32 %v774, %v984
      %v1021 = vadd.f32 %v807, %v985
      %v1022 = vadd.f32 %v840, %v986
      %v1023 = vmul.f32 %v987, 0.7978846
      %v1024 = vmul.f32 %v988, 0.7978846
      %v1025 = vmul.f32 %v989, 0.7978846
      %v1026 = vmul.f32 %v990, 0.7978846
      %v1027 = vmul.f32 %v991, 0.7978846
      %v1028 = vmul.f32 %v992, 0.7978846
      %v1029 = vmul.f32 %v993, 0.7978846
      %v1030 = vmul.f32 %v994, 0.7978846
      %v1031 = vmul.f32 %v995, 0.7978846
      %v1032 = vmul.f32 %v996, 0.7978846
      %v1033 = vmul.f32 %v997, 0.7978846
      %v1034 = vmul.f32 %v998, 0.7978846
      %v1035 = vmul.f32 %v999, 0.7978846
      %v1036 = vmul.f32 %v1000, 0.7978846
      %v1037 = vmul.f32 %v1001, 0.7978846
      %v1038 = vmul.f32 %v1002, 0.7978846
      %v1039 = vmul.f32 %v1003, 0.7978846
      %v1040 = vmul.f32 %v1004, 0.7978846
      %v1041 = vmul.f32 %v1005, 0.7978846
      %v1042 = vmul.f32 %v1006, 0.7978846
      %v1043 = vmul.f32 %v1007, 0.7978846
      %v1044 = vmul.f32 %v1008, 0.7978846
      %v1045 = vmul.f32 %v1009, 0.7978846
      %v1046 = vmul.f32 %v1010, 0.7978846
      %v1047 = vmul.f32 %v1011, 0.7978846
      %v1048 = vmul.f32 %v1012, 0.7978846
      %v1049 = vmul.f32 %v1013, 0.7978846
      %v1050 = vmul.f32 %v1014, 0.7978846
      %v1051 = vmul.f32 %v1015, 0.7978846
      %v1052 = vmul.f32 %v1016, 0.7978846
      %v1053 = vmul.f32 %v1017, 0.7978846
      %v1054 = vmul.f32 %v1018, 0.7978846
      %v1055 = vmul.f32 %v1019, 0.7978846
      %v1056 = vmul.f32 %v1020, 0.7978846
      %v1057 = vmul.f32 %v1021, 0.7978846
      %v1058 = vmul.f32 %v1022, 0.7978846
      %v1059 = vtanh.pop %v1023
      %v1060 = vtanh.pop %v1024
      %v1061 = vtanh.pop %v1025
      %v1062 = vtanh.pop %v1026
      %v1063 = vtanh.pop %v1027
      %v1064 = vtanh.pop %v1028
      %v1065 = vtanh.pop %v1029
      %v1066 = vtanh.pop %v1030
      %v1067 = vtanh.pop %v1031
      %v1068 = vtanh.pop %v1032
      %v1069 = vtanh.pop %v1033
      %v1070 = vtanh.pop %v1034
      %v1071 = vtanh.pop %v1035
      %v1072 = vtanh.pop %v1036
      %v1073 = vtanh.pop %v1037
      %v1074 = vtanh.pop %v1038
      %v1075 = vtanh.pop %v1039
      %v1076 = vtanh.pop %v1040
      %v1077 = vtanh.pop %v1041
      %v1078 = vtanh.pop %v1042
      %v1079 = vtanh.pop %v1043
      %v1080 = vtanh.pop %v1044
      %v1081 = vtanh.pop %v1045
      %v1082 = vtanh.pop %v1046
      %v1083 = vtanh.pop %v1047
      %v1084 = vtanh.pop %v1048
      %v1085 = vtanh.pop %v1049
      %v1086 = vtanh.pop %v1050
      %v1087 = vtanh.pop %v1051
      %v1088 = vtanh.pop %v1052
      %v1089 = vtanh.pop %v1053
      %v1090 = vtanh.pop %v1054
      %v1091 = vtanh.pop %v1055
      %v1092 = vtanh.pop %v1056
      %v1093 = vtanh.pop %v1057
      %v1094 = vtanh.pop %v1058
      %v1095 = vadd.f32 %v1059, 1.0
      %v1096 = vadd.f32 %v1060, 1.0
      %v1097 = vadd.f32 %v1061, 1.0
      %v1098 = vadd.f32 %v1062, 1.0
      %v1099 = vadd.f32 %v1063, 1.0
      %v1100 = vadd.f32 %v1064, 1.0
      %v1101 = vadd.f32 %v1065, 1.0
      %v1102 = vadd.f32 %v1066, 1.0
      %v1103 = vadd.f32 %v1067, 1.0
      %v1104 = vadd.f32 %v1068, 1.0
      %v1105 = vadd.f32 %v1069, 1.0
      %v1106 = vadd.f32 %v1070, 1.0
      %v1107 = vadd.f32 %v1071, 1.0
      %v1108 = vadd.f32 %v1072, 1.0
      %v1109 = vadd.f32 %v1073, 1.0
      %v1110 = vadd.f32 %v1074, 1.0
      %v1111 = vadd.f32 %v1075, 1.0
      %v1112 = vadd.f32 %v1076, 1.0
      %v1113 = vadd.f32 %v1077, 1.0
      %v1114 = vadd.f32 %v1078, 1.0
      %v1115 = vadd.f32 %v1079, 1.0
      %v1116 = vadd.f32 %v1080, 1.0
      %v1117 = vadd.f32 %v1081, 1.0
      %v1118 = vadd.f32 %v1082, 1.0
      %v1119 = vadd.f32 %v1083, 1.0
      %v1120 = vadd.f32 %v1084, 1.0
      %v1121 = vadd.f32 %v1085, 1.0
      %v1122 = vadd.f32 %v1086, 1.0
      %v1123 = vadd.f32 %v1087, 1.0
      %v1124 = vadd.f32 %v1088, 1.0
      %v1125 = vadd.f32 %v1089, 1.0
      %v1126 = vadd.f32 %v1090, 1.0
      %v1127 = vadd.f32 %v1091, 1.0
      %v1128 = vadd.f32 %v1092, 1.0
      %v1129 = vadd.f32 %v1093, 1.0
      %v1130 = vadd.f32 %v1094, 1.0
      %v1131 = vmul.f32 %v843, %v1095
      %v1132 = vmul.f32 %v844, %v1096
      %v1133 = vmul.f32 %v845, %v1097
      %v1134 = vmul.f32 %v846, %v1098
      %v1135 = vmul.f32 %v847, %v1099
      %v1136 = vmul.f32 %v848, %v1100
      %v1137 = vmul.f32 %v849, %v1101
      %v1138 = vmul.f32 %v850, %v1102
      %v1139 = vmul.f32 %v851, %v1103
      %v1140 = vmul.f32 %v852, %v1104
      %v1141 = vmul.f32 %v853, %v1105
      %v1142 = vmul.f32 %v854, %v1106
      %v1143 = vmul.f32 %v855, %v1107
      %v1144 = vmul.f32 %v856, %v1108
      %v1145 = vmul.f32 %v857, %v1109
      %v1146 = vmul.f32 %v858, %v1110
      %v1147 = vmul.f32 %v859, %v1111
      %v1148 = vmul.f32 %v860, %v1112
      %v1149 = vmul.f32 %v861, %v1113
      %v1150 = vmul.f32 %v862, %v1114
      %v1151 = vmul.f32 %v863, %v1115
      %v1152 = vmul.f32 %v864, %v1116
      %v1153 = vmul.f32 %v865, %v1117
      %v1154 = vmul.f32 %v866, %v1118
      %v1155 = vmul.f32 %v867, %v1119
      %v1156 = vmul.f32 %v868, %v1120
      %v1157 = vmul.f32 %v869, %v1121
      %v1158 = vmul.f32 %v870, %v1122
      %v1159 = vmul.f32 %v871, %v1123
      %v1160 = vmul.f32 %v872, %v1124
      %v1161 = vmul.f32 %v873, %v1125
      %v1162 = vmul.f32 %v874, %v1126
      %v1163 = vmul.f32 %v875, %v1127
      %v1164 = vmul.f32 %v876, %v1128
      %v1165 = vmul.f32 %v877, %v1129
      %v1166 = vmul.f32 %v878, %v1130
      %v1167 = vpack.c.bf16 %v1135, %v1131
      %v1168 = vpack.c.bf16 %v1136, %v1132
      %v1169 = vpack.c.bf16 %v1137, %v1133
      %v1170 = vpack.c.bf16 %v1138, %v1134
      %v1171 = vpack.c.bf16 %v1143, %v1139
      %v1172 = vpack.c.bf16 %v1144, %v1140
      %v1173 = vpack.c.bf16 %v1145, %v1141
      %v1174 = vpack.c.bf16 %v1146, %v1142
      %v1175 = vpack.c.bf16 %v1151, %v1147
      %v1176 = vpack.c.bf16 %v1152, %v1148
      %v1177 = vpack.c.bf16 %v1153, %v1149
      %v1178 = vpack.c.bf16 %v1154, %v1150
      %v1179 = vpack.c.bf16 %v1159, %v1155
      %v1180 = vpack.c.bf16 %v1160, %v1156
      %v1181 = vpack.c.bf16 %v1161, %v1157
      %v1182 = vpack.c.bf16 %v1162, %v1158
      %v1183 = vpack.c.bf16 %v1163, %v1163
      %v1184 = vpack.c.bf16 %v1164, %v1164
      %v1185 = vpack.c.bf16 %v1165, %v1165
      %v1186 = vpack.c.bf16 %v1166, %v1166
      %v1187 = vld [vmem:[%s5] sm:$0xf]
      %v1188 = vld [vmem:[%s5 + $0x4] sm:$0xf]
      %v1189 = vld [vmem:[%s5 + $0x8] sm:$0xf]
      %v1190 = vld [vmem:[%s5 + $0xc] sm:$0xf]
      %v1191 = vld [vmem:[%s5 + $0x10] sm:$0xf]
      %v1192 = vld [vmem:[%s5 + $0x14] sm:$0xf]
      %v1193 = vld [vmem:[%s5 + $0x18] sm:$0xf]
      %v1194 = vld [vmem:[%s5 + $0x1c] sm:$0xf]
      %v1195 = vld [vmem:[%s5 + $0x20] sm:$0xf]
      %v1196 = vld [vmem:[%s5 + $0x24] sm:$0xf]
      %v1197 = vld [vmem:[%s5 + $0x28] sm:$0xf]
      %v1198 = vld [vmem:[%s5 + $0x2c] sm:$0xf]
      %v1199 = vld [vmem:[%s5 + $0x30] sm:$0xf]
      %v1200 = vld [vmem:[%s5 + $0x34] sm:$0xf]
      %v1201 = vld [vmem:[%s5 + $0x38] sm:$0xf]
      %v1202 = vld [vmem:[%s5 + $0x3c] sm:$0xf]
      %v1203 = vld [vmem:[%s5 + $0x40] sm:$0xf]
      %v1204 = vld [vmem:[%s5 + $0x44] sm:$0xf]
      %v1205 = vld [vmem:[%s5 + $0x48] sm:$0xf]
      %v1206 = vld [vmem:[%s5 + $0x4c] sm:$0xf]
      %v1207 = vld [vmem:[%s5 + $0x50] sm:$0xf]
      %v1208 = vld [vmem:[%s5 + $0x54] sm:$0xf]
      %v1209 = vld [vmem:[%s5 + $0x58] sm:$0xf]
      %v1210 = vld [vmem:[%s5 + $0x5c] sm:$0xf]
      %v1211 = vld [vmem:[%s5 + $0x60] sm:$0xf]
      %v1212 = vld [vmem:[%s5 + $0x64] sm:$0xf]
      %v1213 = vld [vmem:[%s5 + $0x68] sm:$0xf]
      %v1214 = vld [vmem:[%s5 + $0x6c] sm:$0xf]
      %v1215 = vld [vmem:[%s5 + $0x70] sm:$0xf]
      %v1216 = vld [vmem:[%s5 + $0x74] sm:$0xf]
      %v1217 = vld [vmem:[%s5 + $0x78] sm:$0xf]
      %v1218 = vld [vmem:[%s5 + $0x7c] sm:$0xf]
      %v1219 = vld [vmem:[%s5 + $0x80] sm:$0xf]
      %v1220 = vld [vmem:[%s5 + $0x84] sm:$0xf]
      %v1221 = vld [vmem:[%s5 + $0x88] sm:$0xf]
      %v1222 = vld [vmem:[%s5 + $0x8c] sm:$0xf]
      %v1223 = vld [vmem:[%s5 + $0x90] sm:$0xf]
      %v1224 = vld [vmem:[%s5 + $0x94] sm:$0xf]
      %v1225 = vld [vmem:[%s5 + $0x98] sm:$0xf]
      %v1226 = vld [vmem:[%s5 + $0x9c] sm:$0xf]
      %v1227 = vld [vmem:[%s5 + $0xa0] sm:$0xf]
      %v1228 = vld [vmem:[%s5 + $0xa4] sm:$0xf]
      %v1229 = vld [vmem:[%s5 + $0xa8] sm:$0xf]
      %v1230 = vld [vmem:[%s5 + $0xac] sm:$0xf]
      %v1231 = vld [vmem:[%s5 + $0xb0] sm:$0xf]
      %v1232 = vld [vmem:[%s5 + $0xb4] sm:$0xf]
      %v1233 = vld [vmem:[%s5 + $0xb8] sm:$0xf]
      %v1234 = vld [vmem:[%s5 + $0xbc] sm:$0xf]
      %v1235 = vld [vmem:[%s5 + $0xc0] sm:$0xf]
      %v1236 = vld [vmem:[%s5 + $0xc4] sm:$0xf]
      %v1237 = vld [vmem:[%s5 + $0xc8] sm:$0xf]
      %v1238 = vld [vmem:[%s5 + $0xcc] sm:$0xf]
      %v1239 = vld [vmem:[%s5 + $0xd0] sm:$0xf]
      %v1240 = vld [vmem:[%s5 + $0xd4] sm:$0xf]
      %v1241 = vld [vmem:[%s5 + $0xd8] sm:$0xf]
      %v1242 = vld [vmem:[%s5 + $0xdc] sm:$0xf]
      %v1243 = vld [vmem:[%s5 + $0xe0] sm:$0xf]
      %v1244 = vld [vmem:[%s5 + $0xe4] sm:$0xf]
      %v1245 = vld [vmem:[%s5 + $0xe8] sm:$0xf]
      %v1246 = vld [vmem:[%s5 + $0xec] sm:$0xf]
      %v1247 = vld [vmem:[%s5 + $0xf0] sm:$0xf]
      %v1248 = vld [vmem:[%s5 + $0xf4] sm:$0xf]
      %v1249 = vld [vmem:[%s5 + $0xf8] sm:$0xf]
      %v1250 = vld [vmem:[%s5 + $0xfc] sm:$0xf]
      %v1251 = vld [vmem:[%s6] sm:$0x1]
      %v1253 = vperm.slane %v1251, 0
      %v1319 = vunpack.c.l.b16 %v1187
      %v1320 = vunpack.c.l.b16 %v1188
      %v1321 = vunpack.c.l.b16 %v1189
      %v1322 = vunpack.c.l.b16 %v1190
      %v1323 = vunpack.c.l.b16 %v1191
      %v1324 = vunpack.c.l.b16 %v1192
      %v1325 = vunpack.c.l.b16 %v1193
      %v1326 = vunpack.c.l.b16 %v1194
      %v1327 = vunpack.c.l.b16 %v1195
      %v1328 = vunpack.c.l.b16 %v1196
      %v1329 = vunpack.c.l.b16 %v1197
      %v1330 = vunpack.c.l.b16 %v1198
      %v1331 = vunpack.c.l.b16 %v1199
      %v1332 = vunpack.c.l.b16 %v1200
      %v1333 = vunpack.c.l.b16 %v1201
      %v1334 = vunpack.c.l.b16 %v1202
      %v1335 = vunpack.c.l.b16 %v1203
      %v1336 = vunpack.c.l.b16 %v1204
      %v1337 = vunpack.c.l.b16 %v1205
      %v1338 = vunpack.c.l.b16 %v1206
      %v1339 = vunpack.c.l.b16 %v1207
      %v1340 = vunpack.c.l.b16 %v1208
      %v1341 = vunpack.c.l.b16 %v1209
      %v1342 = vunpack.c.l.b16 %v1210
      %v1343 = vunpack.c.l.b16 %v1211
      %v1344 = vunpack.c.l.b16 %v1212
      %v1345 = vunpack.c.l.b16 %v1213
      %v1346 = vunpack.c.l.b16 %v1214
      %v1347 = vunpack.c.l.b16 %v1215
      %v1348 = vunpack.c.l.b16 %v1216
      %v1349 = vunpack.c.l.b16 %v1217
      %v1350 = vunpack.c.l.b16 %v1218
      %v1351 = vunpack.c.l.b16 %v1219
      %v1352 = vunpack.c.l.b16 %v1220
      %v1353 = vunpack.c.l.b16 %v1221
      %v1354 = vunpack.c.l.b16 %v1222
      %v1355 = vunpack.c.l.b16 %v1223
      %v1356 = vunpack.c.l.b16 %v1224
      %v1357 = vunpack.c.l.b16 %v1225
      %v1358 = vunpack.c.l.b16 %v1226
      %v1359 = vunpack.c.l.b16 %v1227
      %v1360 = vunpack.c.l.b16 %v1228
      %v1361 = vunpack.c.l.b16 %v1229
      %v1362 = vunpack.c.l.b16 %v1230
      %v1363 = vunpack.c.l.b16 %v1231
      %v1364 = vunpack.c.l.b16 %v1232
      %v1365 = vunpack.c.l.b16 %v1233
      %v1366 = vunpack.c.l.b16 %v1234
      %v1367 = vunpack.c.l.b16 %v1235
      %v1368 = vunpack.c.l.b16 %v1236
      %v1369 = vunpack.c.l.b16 %v1237
      %v1370 = vunpack.c.l.b16 %v1238
      %v1371 = vunpack.c.l.b16 %v1239
      %v1372 = vunpack.c.l.b16 %v1240
      %v1373 = vunpack.c.l.b16 %v1241
      %v1374 = vunpack.c.l.b16 %v1242
      %v1375 = vunpack.c.l.b16 %v1243
      %v1376 = vunpack.c.l.b16 %v1244
      %v1377 = vunpack.c.l.b16 %v1245
      %v1378 = vunpack.c.l.b16 %v1246
      %v1379 = vunpack.c.l.b16 %v1247
      %v1380 = vunpack.c.l.b16 %v1248
      %v1381 = vunpack.c.l.b16 %v1249
      %v1382 = vunpack.c.l.b16 %v1250
      %v1383 = vpack.c.b16 %v1320, %v1319
      %v1384 = vpack.c.b16 %v1322, %v1321
      %v1385 = vpack.c.b16 %v1324, %v1323
      %v1386 = vpack.c.b16 %v1326, %v1325
      %v1387 = vpack.c.b16 %v1328, %v1327
      %v1388 = vpack.c.b16 %v1330, %v1329
      %v1389 = vpack.c.b16 %v1332, %v1331
      %v1390 = vpack.c.b16 %v1334, %v1333
      %v1391 = vpack.c.b16 %v1336, %v1335
      %v1392 = vpack.c.b16 %v1338, %v1337
      %v1393 = vpack.c.b16 %v1340, %v1339
      %v1394 = vpack.c.b16 %v1342, %v1341
      %v1395 = vpack.c.b16 %v1344, %v1343
      %v1396 = vpack.c.b16 %v1346, %v1345
      %v1397 = vpack.c.b16 %v1348, %v1347
      %v1398 = vpack.c.b16 %v1350, %v1349
      %v1399 = vpack.c.b16 %v1352, %v1351
      %v1400 = vpack.c.b16 %v1354, %v1353
      %v1401 = vpack.c.b16 %v1356, %v1355
      %v1402 = vpack.c.b16 %v1358, %v1357
      %v1403 = vpack.c.b16 %v1360, %v1359
      %v1404 = vpack.c.b16 %v1362, %v1361
      %v1405 = vpack.c.b16 %v1364, %v1363
      %v1406 = vpack.c.b16 %v1366, %v1365
      %v1407 = vpack.c.b16 %v1368, %v1367
      %v1408 = vpack.c.b16 %v1370, %v1369
      %v1409 = vpack.c.b16 %v1372, %v1371
      %v1410 = vpack.c.b16 %v1374, %v1373
      %v1411 = vpack.c.b16 %v1376, %v1375
      %v1412 = vpack.c.b16 %v1378, %v1377
      %v1413 = vpack.c.b16 %v1380, %v1379
      %v1414 = vpack.c.b16 %v1382, %v1381
      %1447 = vmatpush.bf16.msra.mxu0 %v1390
      %1448 = vmatpush.bf16.msra.mxu0 %v1389
      %1449 = vmatpush.bf16.msra.mxu0 %v1388
      %1450 = vmatpush.bf16.msra.mxu0 %v1387
      %1451 = vmatpush.bf16.msra.mxu0 %v1386
      %1452 = vmatpush.bf16.msra.mxu0 %v1385
      %1453 = vmatpush.bf16.msra.mxu0 %v1384
      %1454 = vmatpush.bf16.msra.mxu0 %v1383
      %1455 = vmatmul.bf16.gmra.mxu0 %v1167
      %v1456 = vpop.f32.mrf.mxu0
      %v1457 = vadd.f32 %v1253, %v1456
      %v1458 = vpop.f32.mrf.mxu0
      %v1459 = vadd.f32 %v1253, %v1458
      %1460 = vmatmul.bf16.gmra.mxu0 %v1171
      %v1461 = vpop.f32.mrf.mxu0
      %v1462 = vadd.f32 %v1253, %v1461
      %v1463 = vpop.f32.mrf.mxu0
      %v1464 = vadd.f32 %v1253, %v1463
      %1465 = vmatmul.bf16.gmra.mxu0 %v1175
      %v1466 = vpop.f32.mrf.mxu0
      %v1467 = vadd.f32 %v1253, %v1466
      %v1468 = vpop.f32.mrf.mxu0
      %v1469 = vadd.f32 %v1253, %v1468
      %1470 = vmatmul.bf16.gmra.mxu0 %v1179
      %v1471 = vpop.f32.mrf.mxu0
      %v1472 = vadd.f32 %v1253, %v1471
      %v1473 = vpop.f32.mrf.mxu0
      %v1474 = vadd.f32 %v1253, %v1473
      %1475 = vmatmul.bf16.gmra.mxu0 %v1183
      %v1476 = vpop.f32.mrf.mxu0
      %v1477 = vadd.f32 %v1253, %v1476
      %v1478 = vpop.f32.mrf.mxu0
      %1479 = vdwg.mxu0
      %1480 = vmatpush.bf16.msra.mxu0 %v1398
      %1481 = vmatpush.bf16.msra.mxu0 %v1397
      %1482 = vmatpush.bf16.msra.mxu0 %v1396
      %1483 = vmatpush.bf16.msra.mxu0 %v1395
      %1484 = vmatpush.bf16.msra.mxu0 %v1394
      %1485 = vmatpush.bf16.msra.mxu0 %v1393
      %1486 = vmatpush.bf16.msra.mxu0 %v1392
      %1487 = vmatpush.bf16.msra.mxu0 %v1391
      %1488 = vmatmul.bf16.gmra.mxu0 %v1168
      %v1489 = vpop.f32.mrf.mxu0
      %v1490 = vadd.f32 %v1457, %v1489
      %v1491 = vpop.f32.mrf.mxu0
      %v1492 = vadd.f32 %v1459, %v1491
      %1493 = vmatmul.bf16.gmra.mxu0 %v1172
      %v1494 = vpop.f32.mrf.mxu0
      %v1495 = vadd.f32 %v1462, %v1494
      %v1496 = vpop.f32.mrf.mxu0
      %v1497 = vadd.f32 %v1464, %v1496
      %1498 = vmatmul.bf16.gmra.mxu0 %v1176
      %v1499 = vpop.f32.mrf.mxu0
      %v1500 = vadd.f32 %v1467, %v1499
      %v1501 = vpop.f32.mrf.mxu0
      %v1502 = vadd.f32 %v1469, %v1501
      %1503 = vmatmul.bf16.gmra.mxu0 %v1180
      %v1504 = vpop.f32.mrf.mxu0
      %v1505 = vadd.f32 %v1472, %v1504
      %v1506 = vpop.f32.mrf.mxu0
      %v1507 = vadd.f32 %v1474, %v1506
      %1508 = vmatmul.bf16.gmra.mxu0 %v1184
      %v1509 = vpop.f32.mrf.mxu0
      %v1510 = vadd.f32 %v1477, %v1509
      %v1511 = vpop.f32.mrf.mxu0
      %1512 = vdwg.mxu0
      %1513 = vmatpush.bf16.msra.mxu0 %v1406
      %1514 = vmatpush.bf16.msra.mxu0 %v1405
      %1515 = vmatpush.bf16.msra.mxu0 %v1404
      %1516 = vmatpush.bf16.msra.mxu0 %v1403
      %1517 = vmatpush.bf16.msra.mxu0 %v1402
      %1518 = vmatpush.bf16.msra.mxu0 %v1401
      %1519 = vmatpush.bf16.msra.mxu0 %v1400
      %1520 = vmatpush.bf16.msra.mxu0 %v1399
      %1521 = vmatmul.bf16.gmra.mxu0 %v1169
      %v1522 = vpop.f32.mrf.mxu0
      %v1523 = vadd.f32 %v1490, %v1522
      %v1524 = vpop.f32.mrf.mxu0
      %v1525 = vadd.f32 %v1492, %v1524
      %1526 = vmatmul.bf16.gmra.mxu0 %v1173
      %v1527 = vpop.f32.mrf.mxu0
      %v1528 = vadd.f32 %v1495, %v1527
      %v1529 = vpop.f32.mrf.mxu0
      %v1530 = vadd.f32 %v1497, %v1529
      %1531 = vmatmul.bf16.gmra.mxu0 %v1177
      %v1532 = vpop.f32.mrf.mxu0
      %v1533 = vadd.f32 %v1500, %v1532
      %v1534 = vpop.f32.mrf.mxu0
      %v1535 = vadd.f32 %v1502, %v1534
      %1536 = vmatmul.bf16.gmra.mxu0 %v1181
      %v1537 = vpop.f32.mrf.mxu0
      %v1538 = vadd.f32 %v1505, %v1537
      %v1539 = vpop.f32.mrf.mxu0
      %v1540 = vadd.f32 %v1507, %v1539
      %1541 = vmatmul.bf16.gmra.mxu0 %v1185
      %v1542 = vpop.f32.mrf.mxu0
      %v1543 = vadd.f32 %v1510, %v1542
      %v1544 = vpop.f32.mrf.mxu0
      %1545 = vdwg.mxu0
      %1546 = vmatpush.bf16.msra.mxu0 %v1414
      %1547 = vmatpush.bf16.msra.mxu0 %v1413
      %1548 = vmatpush.bf16.msra.mxu0 %v1412
      %1549 = vmatpush.bf16.msra.mxu0 %v1411
      %1550 = vmatpush.bf16.msra.mxu0 %v1410
      %1551 = vmatpush.bf16.msra.mxu0 %v1409
      %1552 = vmatpush.bf16.msra.mxu0 %v1408
      %1553 = vmatpush.bf16.msra.mxu0 %v1407
      %1554 = vmatmul.bf16.gmra.mxu0 %v1170
      %v1555 = vpop.f32.mrf.mxu0
      %v1556 = vadd.f32 %v1523, %v1555
      %v1557 = vpop.f32.mrf.mxu0
      %v1558 = vadd.f32 %v1525, %v1557
      %1559 = vmatmul.bf16.gmra.mxu0 %v1174
      %v1560 = vpop.f32.mrf.mxu0
      %v1561 = vadd.f32 %v1528, %v1560
      %v1562 = vpop.f32.mrf.mxu0
      %v1563 = vadd.f32 %v1530, %v1562
      %1564 = vmatmul.bf16.gmra.mxu0 %v1178
      %v1565 = vpop.f32.mrf.mxu0
      %v1566 = vadd.f32 %v1533, %v1565
      %v1567 = vpop.f32.mrf.mxu0
      %v1568 = vadd.f32 %v1535, %v1567
      %1569 = vmatmul.bf16.gmra.mxu0 %v1182
      %v1570 = vpop.f32.mrf.mxu0
      %v1571 = vadd.f32 %v1538, %v1570
      %v1572 = vpop.f32.mrf.mxu0
      %v1573 = vadd.f32 %v1540, %v1572
      %1574 = vmatmul.bf16.gmra.mxu0 %v1186
      %v1575 = vpop.f32.mrf.mxu0
      %v1576 = vadd.f32 %v1543, %v1575
      %v1577 = vpop.f32.mrf.mxu0
      %1578 = vdwg.mxu0
      %v1579 = vadd.f32 %v1556, %v279
      %v1580 = vadd.f32 %v1558, %v280
      %v1581 = vadd.f32 %v1561, %v281
      %v1582 = vadd.f32 %v1563, %v282
      %v1583 = vadd.f32 %v1566, %v283
      %v1584 = vadd.f32 %v1568, %v284
      %v1585 = vadd.f32 %v1571, %v285
      %v1586 = vadd.f32 %v1573, %v286
      %v1587 = vadd.f32 %v1576, %v287
      %1588 = vst [vmem:[%s278] sm:$0xff] %v1579
      %1589 = vst [vmem:[%s278 + $0x8] sm:$0xff] %v1580
      %1590 = vst [vmem:[%s278 + $0x10] sm:$0xff] %v1581
      %1591 = vst [vmem:[%s278 + $0x18] sm:$0xff] %v1582
      %1592 = vst [vmem:[%s278 + $0x20] sm:$0xff] %v1583
      %1593 = vst [vmem:[%s278 + $0x28] sm:$0xff] %v1584
      %1594 = vst [vmem:[%s278 + $0x30] sm:$0xff] %v1585
      %1595 = vst [vmem:[%s278 + $0x38] sm:$0xff] %v1586
      %1596 = vst [vmem:[%s278 + $0x40] sm:$0x1] %v1587
      %p1597 = scmp.lt.s32.totalorder %s18, 1
      %s1598 = scalar_select %p1597, %s18, 1
      %s1599 = smul.addr %s1598, 9
      %s1600 = smul.addr %s1599, 8
      %s1601 = scalar_lea.vmem %s7, %s1600
      // Predicated region
      $region49: #{xvit_forward.8} parent=47 // pred_check
        %p1602 = pneg %p188
      $region50: #{xvit_forward.8} parent=47 // pred_check_branch
        %1604 = sbr.rel (%p1602) target = $region52
      $region51: #{xvit_forward.8} parent=47 // pred_region
        _
      $region52: #{xvit_forward.8} parent=47 // pred_fallthru
        _
    $region48: #{xvit_forward.8} parent=5 // pred_fallthru
      _
    %p1605 = scmp.le.s32.totalorder 2, %s13
    // Predicated region
    $region53: #{xvit_forward.8} parent=5 // pred_check
      %p1606 = pneg %p1605
    $region54: #{xvit_forward.8} parent=5 // pred_check_branch
      %1608 = sbr.rel (%p1606) target = $region56
    $region55: #{xvit_forward.8} parent=5 // pred_region
      %s1609 = ssub.s32 %s13, 2
      // Predicated region
      $region57: #{xvit_forward.8} parent=55 // pred_check
        %p1610 = pneg %p194
      $region58: #{xvit_forward.8} parent=55 // pred_check_branch
        %1612 = sbr.rel (%p1610) target = $region60
      $region59: #{xvit_forward.8} parent=55 // pred_region
        %p1613 = scmp.lt.s32.totalorder %s19, 1
        %s1614 = scalar_select %p1613, %s19, 1
        %s1615 = smul.addr %s1614, 9
        %s1616 = smul.addr %s1615, 8
        %s1617 = scalar_lea.vmem %s7, %s1616
      $region60: #{xvit_forward.8} parent=55 // pred_fallthru
        _
    $region56: #{xvit_forward.8} parent=5 // pred_fallthru
      _
  $region6: #{xvit_forward.8} parent=0 // loop_footer
    %s17 = sadd.s32 1, %s13
  $region7: #{xvit_forward.8} parent=0 // loop_footer_branch
    %12 = sbr.rel target = $region3
  $region8: #{xvit_forward.8} parent=0 // loop_exit
    _

</llo_original>
